<compile_context>
chip_gen: v7x
topology: tpu7x:2x2x1
jax: 0.10.0
libtpu: 0.0.40
codegen_flags: <defaults>
</compile_context>

<pallas_src>
import jax
import jax.numpy as jnp
from jax.experimental import pallas as pl
from jax.experimental.pallas import tpu as pltpu

# Logical (PyTorch) dims
D_IN = 784
D_H = 400
D_Z = 50

# Hidden dim padded to a lane-dense width (weights-only padding, zero-filled)
P_H = 512

# Default batch tile: sweep 256-1024 on v5e/v6e (128 MiB VMEM), keep <=512 on v7x
# (64 MiB VMEM) and ensure >=2 grid steps there so both TensorCores get work.
TILE_B = 512


def _round_up(n, m):
    return ((n + m - 1) // m) * m


def vae_kernel(x_ref, e_ref,
               w1_ref, b1_ref, w2_ref, b2_ref,
               w3_ref, b3_ref, w4_ref, b4_ref,
               o_ref):
    # encode: h1 = relu(fc1(x))   (bf16 MXU inputs, f32 accumulate, f32 epilogue)
    x = x_ref[...].astype(jnp.bfloat16)                                  # (tb, 784)
    h1 = jnp.dot(x, w1_ref[...], preferred_element_type=jnp.float32) + b1_ref[...]
    h1 = jnp.maximum(h1, 0.0).astype(jnp.bfloat16)                       # (tb, 512)

    # u = fc2(h1); s = fc2(h1)  -> same layer twice, so s == u
    u = jnp.dot(h1, w2_ref[...], preferred_element_type=jnp.float32) + b2_ref[...]
    # z = u + s * e  ==  u * (1 + e)
    z = (u * (1.0 + e_ref[...])).astype(jnp.bfloat16)                    # (tb, 50)

    # decode: out = sigmoid(fc4(relu(fc3(z))))
    h3 = jnp.dot(z, w3_ref[...], preferred_element_type=jnp.float32) + b3_ref[...]
    h3 = jnp.maximum(h3, 0.0).astype(jnp.bfloat16)                       # (tb, 512)
    logits = jnp.dot(h3, w4_ref[...], preferred_element_type=jnp.float32) + b4_ref[...]
    o_ref[...] = jax.nn.sigmoid(logits).astype(o_ref.dtype)              # (tb, 784)


def _pad_cols(a, cols):
    return jnp.pad(a, ((0, 0), (0, cols - a.shape[1])))


def _pad_rows(a, rows):
    return jnp.pad(a, ((0, rows - a.shape[0]), (0, 0)))


def pack_params(params):
    """Zero-pad the hidden dim (400->512) and cast weights to bf16, once."""
    return dict(
        w1=_pad_cols(params["w1"], P_H).astype(jnp.bfloat16),   # (784, 512)
        b1=_pad_cols(params["b1"], P_H),                        # (1, 512) f32
        w2=_pad_rows(params["w2"], P_H).astype(jnp.bfloat16),   # (512, 50)
        b2=params["b2"],                                        # (1, 50)  f32
        w3=_pad_cols(params["w3"], P_H).astype(jnp.bfloat16),   # (50, 512)
        b3=_pad_cols(params["b3"], P_H),                        # (1, 512) f32
        w4=_pad_rows(params["w4"], P_H).astype(jnp.bfloat16),   # (512, 784)
        b4=params["b4"],                                        # (1, 784) f32
    )


def vae_forward(x_nchw, e, packed, *, tile_b=TILE_B, out_dtype=jnp.float32):
    """x_nchw: (B, 1, 28, 28) f32; e: (B, 50) f32 noise; packed: pack_params(...).

    out_dtype=jnp.bfloat16 halves the largest HBM stream (intentional numerics
    change, ~3 decimal digits on values in [0, 1]); default stays f32.
    """
    B = x_nchw.shape[0]
    x = x_nchw.reshape(-1, D_IN)                         # x.view(-1, 784); metadata-only

    # Adaptive tile: never larger than the (8-rounded) batch, always a multiple of 8.
    tb = min(tile_b, _round_up(B, 8))
    tb = max(8, (tb // 8) * 8)
    n_tiles = pl.cdiv(B, tb)
    B_pad = n_tiles * tb

    # Batch pad only when B is not a tile multiple (common training batches: no pad).
    if B_pad != B:
        x = jnp.pad(x, ((0, B_pad - B), (0, 0)))
        e = jnp.pad(e, ((0, B_pad - B), (0, 0)))

    act = lambda cols: pl.BlockSpec((tb, cols), lambda i: (i, 0))
    const = lambda shape: pl.BlockSpec(shape, lambda i: (0, 0))   # VMEM-resident

    weight_bytes = sum(int(v.size) * v.dtype.itemsize for v in packed.values())
    bytes_accessed = (int(x.size) * x.dtype.itemsize
                      + int(e.size) * e.dtype.itemsize
                      + B_pad * D_IN * jnp.dtype(out_dtype).itemsize
                      + weight_bytes)
    flops = 2 * B_pad * (D_IN * P_H + P_H * D_Z + D_Z * P_H + P_H * D_IN)

    out = pl.pallas_call(
        vae_kernel,
        out_shape=jax.ShapeDtypeStruct((B_pad, D_IN), out_dtype),
        grid=(n_tiles,),
        in_specs=[
            act(D_IN),                               # x tile  (tb, 784)
            act(D_Z),                                # e tile  (tb, 50)
            const((D_IN, P_H)), const((1, P_H)),     # fc1 (resident)
            const((P_H, D_Z)),  const((1, D_Z)),     # fc2 (resident)
            const((D_Z, P_H)),  const((1, P_H)),     # fc3 (resident)
            const((P_H, D_IN)), const((1, D_IN)),    # fc4 (resident)
        ],
        out_specs=act(D_IN),                         # full-width 784 block, no slice pass
        compiler_params=pltpu.CompilerParams(
            dimension_semantics=("parallel",),       # shard batch across TCs on v7x
            vmem_limit_bytes=32 << 20,               # plenty at tb=512; raise to ~64 MiB
        ),                                           # only if sweeping tb=1024 on v5e/v6e
        cost_estimate=pl.CostEstimate(
            flops=flops,
            transcendentals=B_pad * D_IN,            # sigmoid exp
            bytes_accessed=bytes_accessed,
        ),
    )(x, e,
      packed["w1"], packed["b1"], packed["w2"], packed["b2"],
      packed["w3"], packed["b3"], packed["w4"], packed["b4"])

    return out if B_pad == B else out[:B]


def vae_reference(x_nchw, e, params):
    """Pure-JAX f32 reference mirroring the PyTorch module (s == u quirk included)."""
    x = x_nchw.reshape(-1, D_IN)
    h1 = jax.nn.relu(x @ params["w1"] + params["b1"])
    u = h1 @ params["w2"] + params["b2"]
    s = h1 @ params["w2"] + params["b2"]
    z = u + s * e
    h3 = jax.nn.relu(z @ params["w3"] + params["b3"])
    return jax.nn.sigmoid(h3 @ params["w4"] + params["b4"])


def init_params(key):
    """Deterministic init mimicking nn.Linear's U(-1/sqrt(fan_in), 1/sqrt(fan_in))."""
    def linear(key, fan_in, fan_out):
        kw, kb = jax.random.split(key)
        bound = 1.0 / jnp.sqrt(fan_in)
        # stored as (in, out) so the kernel computes y = x @ W + b
        w = jax.random.uniform(kw, (fan_in, fan_out), jnp.float32, -bound, bound)
        b = jax.random.uniform(kb, (1, fan_out), jnp.float32, -bound, bound)
        return w, b

    k1, k2, k3, k4 = jax.random.split(key, 4)
    w1, b1 = linear(k1, D_IN, D_H)
    w2, b2 = linear(k2, D_H, D_Z)
    w3, b3 = linear(k3, D_Z, D_H)
    w4, b4 = linear(k4, D_H, D_IN)
    return dict(w1=w1, b1=b1, w2=w2, b2=b2, w3=w3, b3=b3, w4=w4, b4=b4)


if __name__ == "__main__":
    key = jax.random.PRNGKey(0)
    kp, kx, ke = jax.random.split(key, 3)

    B = 2
    params = init_params(kp)
    packed = pack_params(params)                                   # pad + bf16, once
    x = jax.random.uniform(kx, (B, 1, 28, 28), jnp.float32)        # NCHW like PyTorch
    e = jax.random.normal(ke, (B, D_Z), jnp.float32)               # torch.randn(u.size())

    y = vae_forward(x, e, packed)
    jax.block_until_ready(y)

    assert y.shape == (B, D_IN) and y.dtype == jnp.float32
    assert bool(jnp.all(jnp.isfinite(y))) and bool(jnp.all((y >= 0) & (y <= 1)))

    # Tolerance check vs. the f32 pure-JAX reference (bf16 MXU inputs, f32 accum).
    y_ref = vae_reference(x, e, params)
    max_err = float(jnp.max(jnp.abs(y - y_ref)))
    assert max_err < 5e-2, f"max abs err vs f32 reference too large: {max_err}"

    print("KERNEL_OK")
</pallas_src>

<mosaic_0001>
module attributes {stable_mosaic.version = 11 : i64} {
  func.func @vae_kernel(%arg0: i32, %arg1: memref<8x784xf32, #tpu.memory_space<vmem>>, %arg2: memref<8x50xf32, #tpu.memory_space<vmem>>, %arg3: memref<784x512xbf16, #tpu.memory_space<vmem>>, %arg4: memref<1x512xf32, #tpu.memory_space<vmem>>, %arg5: memref<512x50xbf16, #tpu.memory_space<vmem>>, %arg6: memref<1x50xf32, #tpu.memory_space<vmem>>, %arg7: memref<50x512xbf16, #tpu.memory_space<vmem>>, %arg8: memref<1x512xf32, #tpu.memory_space<vmem>>, %arg9: memref<512x784xbf16, #tpu.memory_space<vmem>>, %arg10: memref<1x784xf32, #tpu.memory_space<vmem>>, %arg11: memref<8x784xf32, #tpu.memory_space<vmem>>) attributes {dimension_semantics = [#tpu.dimension_semantics<parallel>], iteration_bounds = array<i64: 1>, scalar_prefetch = 0 : i64, scratch_operands = 0 : i64, tpu.core_type = #tpu.core_type<tc>, window_params = [{transform_indices = @transform_0, window_bounds = array<i64: 8, 784>}, {transform_indices = @transform_1, window_bounds = array<i64: 8, 50>}, {pipeline_mode = #tpu.pipeline_mode<synchronous>, transform_indices = @transform_2, window_bounds = array<i64: 784, 512>}, {pipeline_mode = #tpu.pipeline_mode<synchronous>, transform_indices = @transform_3, window_bounds = array<i64: 1, 512>}, {pipeline_mode = #tpu.pipeline_mode<synchronous>, transform_indices = @transform_4, window_bounds = array<i64: 512, 50>}, {pipeline_mode = #tpu.pipeline_mode<synchronous>, transform_indices = @transform_5, window_bounds = array<i64: 1, 50>}, {pipeline_mode = #tpu.pipeline_mode<synchronous>, transform_indices = @transform_6, window_bounds = array<i64: 50, 512>}, {pipeline_mode = #tpu.pipeline_mode<synchronous>, transform_indices = @transform_7, window_bounds = array<i64: 1, 512>}, {pipeline_mode = #tpu.pipeline_mode<synchronous>, transform_indices = @transform_8, window_bounds = array<i64: 512, 784>}, {pipeline_mode = #tpu.pipeline_mode<synchronous>, transform_indices = @transform_9, window_bounds = array<i64: 1, 784>}, {transform_indices = @transform_10, window_bounds = array<i64: 8, 784>}]} {
    %c0 = arith.constant 0 : index
    %c0_0 = arith.constant 0 : index
    %0 = vector.load %arg1[%c0, %c0_0] : memref<8x784xf32, #tpu.memory_space<vmem>>, vector<8x784xf32>
    %1 = arith.truncf %0 : vector<8x784xf32> to vector<8x784xbf16>
    %c0_1 = arith.constant 0 : index
    %c0_2 = arith.constant 0 : index
    %2 = vector.load %arg3[%c0_1, %c0_2] : memref<784x512xbf16, #tpu.memory_space<vmem>>, vector<784x512xbf16>
    %cst = arith.constant dense<0.000000e+00> : vector<8x512xf32>
    %3 = tpu.matmul %1, %2, %cst {dimension_numbers = #tpu.dot_dimension_numbers<[1], [0], [0], [1], [0, 0, 1, 1], [], []>} : vector<8x784xbf16>, vector<784x512xbf16>, vector<8x512xf32> -> vector<8x512xf32>
    %c0_3 = arith.constant 0 : index
    %c0_4 = arith.constant 0 : index
    %4 = vector.load %arg4[%c0_3, %c0_4] : memref<1x512xf32, #tpu.memory_space<vmem>>, vector<1x512xf32>
    %5 = vector.broadcast %4 : vector<1x512xf32> to vector<8x512xf32>
    %6 = arith.addf %3, %5 : vector<8x512xf32>
    %cst_5 = arith.constant 0.000000e+00 : f32
    %7 = vector.broadcast %cst_5 : f32 to vector<8x512xf32>
    %8 = arith.maximumf %6, %7 : vector<8x512xf32>
    %9 = arith.truncf %8 : vector<8x512xf32> to vector<8x512xbf16>
    %c0_6 = arith.constant 0 : index
    %c0_7 = arith.constant 0 : index
    %10 = vector.load %arg5[%c0_6, %c0_7] : memref<512x50xbf16, #tpu.memory_space<vmem>>, vector<512x50xbf16>
    %cst_8 = arith.constant dense<0.000000e+00> : vector<8x50xf32>
    %11 = tpu.matmul %9, %10, %cst_8 {dimension_numbers = #tpu.dot_dimension_numbers<[1], [0], [0], [1], [0, 0, 1, 1], [], []>} : vector<8x512xbf16>, vector<512x50xbf16>, vector<8x50xf32> -> vector<8x50xf32>
    %c0_9 = arith.constant 0 : index
    %c0_10 = arith.constant 0 : index
    %12 = vector.load %arg6[%c0_9, %c0_10] : memref<1x50xf32, #tpu.memory_space<vmem>>, vector<1x50xf32>
    %13 = vector.broadcast %12 : vector<1x50xf32> to vector<8x50xf32>
    %14 = arith.addf %11, %13 : vector<8x50xf32>
    %c0_11 = arith.constant 0 : index
    %c0_12 = arith.constant 0 : index
    %15 = vector.load %arg2[%c0_11, %c0_12] : memref<8x50xf32, #tpu.memory_space<vmem>>, vector<8x50xf32>
    %cst_13 = arith.constant 1.000000e+00 : f32
    %16 = vector.broadcast %cst_13 : f32 to vector<8x50xf32>
    %17 = arith.addf %16, %15 : vector<8x50xf32>
    %18 = arith.mulf %14, %17 : vector<8x50xf32>
    %19 = arith.truncf %18 : vector<8x50xf32> to vector<8x50xbf16>
    %c0_14 = arith.constant 0 : index
    %c0_15 = arith.constant 0 : index
    %20 = vector.load %arg7[%c0_14, %c0_15] : memref<50x512xbf16, #tpu.memory_space<vmem>>, vector<50x512xbf16>
    %cst_16 = arith.constant dense<0.000000e+00> : vector<8x512xf32>
    %21 = tpu.matmul %19, %20, %cst_16 {dimension_numbers = #tpu.dot_dimension_numbers<[1], [0], [0], [1], [0, 0, 1, 1], [], []>} : vector<8x50xbf16>, vector<50x512xbf16>, vector<8x512xf32> -> vector<8x512xf32>
    %c0_17 = arith.constant 0 : index
    %c0_18 = arith.constant 0 : index
    %22 = vector.load %arg8[%c0_17, %c0_18] : memref<1x512xf32, #tpu.memory_space<vmem>>, vector<1x512xf32>
    %23 = vector.broadcast %22 : vector<1x512xf32> to vector<8x512xf32>
    %24 = arith.addf %21, %23 : vector<8x512xf32>
    %cst_19 = arith.constant 0.000000e+00 : f32
    %25 = vector.broadcast %cst_19 : f32 to vector<8x512xf32>
    %26 = arith.maximumf %24, %25 : vector<8x512xf32>
    %27 = arith.truncf %26 : vector<8x512xf32> to vector<8x512xbf16>
    %c0_20 = arith.constant 0 : index
    %c0_21 = arith.constant 0 : index
    %28 = vector.load %arg9[%c0_20, %c0_21] : memref<512x784xbf16, #tpu.memory_space<vmem>>, vector<512x784xbf16>
    %cst_22 = arith.constant dense<0.000000e+00> : vector<8x784xf32>
    %29 = tpu.matmul %27, %28, %cst_22 {dimension_numbers = #tpu.dot_dimension_numbers<[1], [0], [0], [1], [0, 0, 1, 1], [], []>} : vector<8x512xbf16>, vector<512x784xbf16>, vector<8x784xf32> -> vector<8x784xf32>
    %c0_23 = arith.constant 0 : index
    %c0_24 = arith.constant 0 : index
    %30 = vector.load %arg10[%c0_23, %c0_24] : memref<1x784xf32, #tpu.memory_space<vmem>>, vector<1x784xf32>
    %31 = vector.broadcast %30 : vector<1x784xf32> to vector<8x784xf32>
    %32 = arith.addf %29, %31 : vector<8x784xf32>
    %33 = arith.negf %32 : vector<8x784xf32>
    %34 = math.exp %33 : vector<8x784xf32>
    %cst_25 = arith.constant 1.000000e+00 : f32
    %35 = vector.broadcast %cst_25 : f32 to vector<8x784xf32>
    %36 = arith.addf %35, %34 : vector<8x784xf32>
    %37 = arith.divf %35, %36 : vector<8x784xf32>
    %c0_26 = arith.constant 0 : index
    %c0_27 = arith.constant 0 : index
    %38 = vector.load %arg11[%c0_26, %c0_27] : memref<8x784xf32, #tpu.memory_space<vmem>>, vector<8x784xf32>
    tpu.vector_store %arg11[%c0_26, %c0_27], %37 {strides = array<i32>} : memref<8x784xf32, #tpu.memory_space<vmem>>, vector<8x784xf32>,
    return
  }
  func.func @transform_0(%arg0: i32) -> (i32, i32) {
    %c0_i32 = arith.constant 0 : i32
    %c0_i32_0 = arith.constant 0 : i32
    return %arg0, %c0_i32 : i32, i32
  }
  func.func @transform_1(%arg0: i32) -> (i32, i32) {
    %c0_i32 = arith.constant 0 : i32
    %c0_i32_0 = arith.constant 0 : i32
    return %arg0, %c0_i32 : i32, i32
  }
  func.func @transform_2(%arg0: i32) -> (i32, i32) {
    %c0_i32 = arith.constant 0 : i32
    %c0_i32_0 = arith.constant 0 : i32
    %c0_i32_1 = arith.constant 0 : i32
    return %c0_i32, %c0_i32_0 : i32, i32
  }
  func.func @transform_3(%arg0: i32) -> (i32, i32) {
    %c0_i32 = arith.constant 0 : i32
    %c0_i32_0 = arith.constant 0 : i32
    %c0_i32_1 = arith.constant 0 : i32
    return %c0_i32, %c0_i32_0 : i32, i32
  }
  func.func @transform_4(%arg0: i32) -> (i32, i32) {
    %c0_i32 = arith.constant 0 : i32
    %c0_i32_0 = arith.constant 0 : i32
    %c0_i32_1 = arith.constant 0 : i32
    return %c0_i32, %c0_i32_0 : i32, i32
  }
  func.func @transform_5(%arg0: i32) -> (i32, i32) {
    %c0_i32 = arith.constant 0 : i32
    %c0_i32_0 = arith.constant 0 : i32
    %c0_i32_1 = arith.constant 0 : i32
    return %c0_i32, %c0_i32_0 : i32, i32
  }
  func.func @transform_6(%arg0: i32) -> (i32, i32) {
    %c0_i32 = arith.constant 0 : i32
    %c0_i32_0 = arith.constant 0 : i32
    %c0_i32_1 = arith.constant 0 : i32
    return %c0_i32, %c0_i32_0 : i32, i32
  }
  func.func @transform_7(%arg0: i32) -> (i32, i32) {
    %c0_i32 = arith.constant 0 : i32
    %c0_i32_0 = arith.constant 0 : i32
    %c0_i32_1 = arith.constant 0 : i32
    return %c0_i32, %c0_i32_0 : i32, i32
  }
  func.func @transform_8(%arg0: i32) -> (i32, i32) {
    %c0_i32 = arith.constant 0 : i32
    %c0_i32_0 = arith.constant 0 : i32
    %c0_i32_1 = arith.constant 0 : i32
    return %c0_i32, %c0_i32_0 : i32, i32
  }
  func.func @transform_9(%arg0: i32) -> (i32, i32) {
    %c0_i32 = arith.constant 0 : i32
    %c0_i32_0 = arith.constant 0 : i32
    %c0_i32_1 = arith.constant 0 : i32
    return %c0_i32, %c0_i32_0 : i32, i32
  }
  func.func @transform_10(%arg0: i32) -> (i32, i32) {
    %c0_i32 = arith.constant 0 : i32
    %c0_i32_0 = arith.constant 0 : i32
    return %arg0, %c0_i32 : i32, i32
  }
}

</mosaic_0001>

<llo_original>
// kernel: tpu_custom_call.1
$region0: #{tpu_custom_call.1}
  #allocation0 [shape = 'u32[]', space=smem, size = 0x4, offset = 0x4, fixed_abs, tag = 'smem constant byte address 0x4 - core index']
  #allocation1 [shape = 'u32[144,128]{1,0:T(1,128)}', space=vmem, size = 0x12000, scoped, tag = 'internal scratch']
  %s0 = inlined_call_operand.vmem [shape: f32[8,784], index: 0, kind: input, shape index: {}]
  %s1 = inlined_call_operand.vmem [shape: f32[8,50], index: 1, kind: input, shape index: {}]
  %s2 = inlined_call_operand.vmem [shape: bf16[784,512], index: 2, kind: input, shape index: {}]
  %s3 = inlined_call_operand.vmem [shape: f32[1,512], index: 3, kind: input, shape index: {}]
  %s4 = inlined_call_operand.vmem [shape: bf16[512,50], index: 4, kind: input, shape index: {}]
  %s5 = inlined_call_operand.vmem [shape: f32[1,50], index: 5, kind: input, shape index: {}]
  %s6 = inlined_call_operand.vmem [shape: bf16[50,512], index: 6, kind: input, shape index: {}]
  %s7 = inlined_call_operand.vmem [shape: f32[1,512], index: 7, kind: input, shape index: {}]
  %s8 = inlined_call_operand.vmem [shape: bf16[512,784], index: 8, kind: input, shape index: {}]
  %s9 = inlined_call_operand.vmem [shape: f32[1,784], index: 9, kind: input, shape index: {}]
  %s10 = inlined_call_operand.hbm [shape: f32[8,784], index: 10, kind: output, shape index: {}]
  %s11 = sld [smem:[#allocation0]]
  $region50: #{tpu_custom_call.1} parent=0
    _
  %s13 = ssub.s32 1, %s11
  %s14 = scalar_select 0, %s13, %s11
  $region1: #{tpu_custom_call.1} parent=0
    #allocation2 [shape = 'u8[28672]{0}', space=vmem, size = 0x7000, scoped, tag = 'output window, operand 0, single buffered']
    #allocation3 [shape = 's32[1]{0}', space=sflag, size = 0x4, scoped, tag = 'scoped memory for tpu_custom_call.1']
    %15 = vsyncpa [#allocation3], 0
    // Predicated region
    $region2: #{tpu_custom_call.1} parent=1 // pred_check
      _
    $region3: #{tpu_custom_call.1} parent=1 // pred_check_branch
      %17 = sbr.rel (0) target = $region5
    $region4: #{tpu_custom_call.1} parent=1 // pred_region
      _
    $region5: #{tpu_custom_call.1} parent=1 // pred_fallthru
      _
    // Predicated region
    $region6: #{tpu_custom_call.1} parent=1 // pred_check
      _
    $region7: #{tpu_custom_call.1} parent=1 // pred_check_branch
      %19 = sbr.rel (0) target = $region9
    $region8: #{tpu_custom_call.1} parent=1 // pred_region
      _
    $region9: #{tpu_custom_call.1} parent=1 // pred_fallthru
      _
    // Predicated region
    $region10: #{tpu_custom_call.1} parent=1 // pred_check
      _
    $region11: #{tpu_custom_call.1} parent=1 // pred_check_branch
      %21 = sbr.rel (0) target = $region13
    $region12: #{tpu_custom_call.1} parent=1 // pred_region
      _
    $region13: #{tpu_custom_call.1} parent=1 // pred_fallthru
      _
    // Predicated region
    $region14: #{tpu_custom_call.1} parent=1 // pred_check
      _
    $region15: #{tpu_custom_call.1} parent=1 // pred_check_branch
      %23 = sbr.rel (0) target = $region17
    $region16: #{tpu_custom_call.1} parent=1 // pred_region
      _
    $region17: #{tpu_custom_call.1} parent=1 // pred_fallthru
      _
    // Predicated region
    $region18: #{tpu_custom_call.1} parent=1 // pred_check
      _
    $region19: #{tpu_custom_call.1} parent=1 // pred_check_branch
      %25 = sbr.rel (0) target = $region21
    $region20: #{tpu_custom_call.1} parent=1 // pred_region
      _
    $region21: #{tpu_custom_call.1} parent=1 // pred_fallthru
      _
    // Predicated region
    $region22: #{tpu_custom_call.1} parent=1 // pred_check
      _
    $region23: #{tpu_custom_call.1} parent=1 // pred_check_branch
      %27 = sbr.rel (0) target = $region25
    $region24: #{tpu_custom_call.1} parent=1 // pred_region
      _
    $region25: #{tpu_custom_call.1} parent=1 // pred_fallthru
      _
    // Predicated region
    $region26: #{tpu_custom_call.1} parent=1 // pred_check
      _
    $region27: #{tpu_custom_call.1} parent=1 // pred_check_branch
      %29 = sbr.rel (0) target = $region29
    $region28: #{tpu_custom_call.1} parent=1 // pred_region
      _
    $region29: #{tpu_custom_call.1} parent=1 // pred_fallthru
      _
    // Predicated region
    $region30: #{tpu_custom_call.1} parent=1 // pred_check
      _
    $region31: #{tpu_custom_call.1} parent=1 // pred_check_branch
      %31 = sbr.rel (0) target = $region33
    $region32: #{tpu_custom_call.1} parent=1 // pred_region
      _
    $region33: #{tpu_custom_call.1} parent=1 // pred_fallthru
      _
    // Predicated region
    $region34: #{tpu_custom_call.1} parent=1 // pred_check
      _
    $region35: #{tpu_custom_call.1} parent=1 // pred_check_branch
      %33 = sbr.rel (0) target = $region37
    $region36: #{tpu_custom_call.1} parent=1 // pred_region
      _
    $region37: #{tpu_custom_call.1} parent=1 // pred_fallthru
      _
    // Predicated region
    $region38: #{tpu_custom_call.1} parent=1 // pred_check
      _
    $region39: #{tpu_custom_call.1} parent=1 // pred_check_branch
      %35 = sbr.rel (0) target = $region41
    $region40: #{tpu_custom_call.1} parent=1 // pred_region
      _
    $region41: #{tpu_custom_call.1} parent=1 // pred_fallthru
      _
    %v37 = vld [vmem:[%s0] sm:$0xff]
    %v38 = vld [vmem:[%s0 + $0x8] sm:$0xff]
    %v39 = vld [vmem:[%s0 + $0x10] sm:$0xff]
    %v40 = vld [vmem:[%s0 + $0x18] sm:$0xff]
    %v41 = vld [vmem:[%s0 + $0x20] sm:$0xff]
    %v42 = vld [vmem:[%s0 + $0x28] sm:$0xff]
    %v43 = vld [vmem:[%s0 + $0x30] sm:$0xff]
    %v44 = vpack.c.bf16 %v37, %v37
    %v45 = vpack.c.bf16 %v38, %v38
    %v46 = vpack.c.bf16 %v39, %v39
    %v47 = vpack.c.bf16 %v40, %v40
    %v48 = vpack.c.bf16 %v41, %v41
    %v49 = vpack.c.bf16 %v42, %v42
    %v50 = vpack.c.bf16 %v43, %v43
    %v51 = vld [vmem:[%s2] sm:$0xff]
    %v52 = vld [vmem:[%s2 + $0x8] sm:$0xff]
    %v53 = vld [vmem:[%s2 + $0x10] sm:$0xff]
    %v54 = vld [vmem:[%s2 + $0x18] sm:$0xff]
    %v55 = vld [vmem:[%s2 + $0x20] sm:$0xff]
    %v56 = vld [vmem:[%s2 + $0x28] sm:$0xff]
    %v57 = vld [vmem:[%s2 + $0x30] sm:$0xff]
    %v58 = vld [vmem:[%s2 + $0x38] sm:$0xff]
    %v59 = vld [vmem:[%s2 + $0x40] sm:$0xff]
    %v60 = vld [vmem:[%s2 + $0x48] sm:$0xff]
    %v61 = vld [vmem:[%s2 + $0x50] sm:$0xff]
    %v62 = vld [vmem:[%s2 + $0x58] sm:$0xff]
    %v63 = vld [vmem:[%s2 + $0x60] sm:$0xff]
    %v64 = vld [vmem:[%s2 + $0x68] sm:$0xff]
    %v65 = vld [vmem:[%s2 + $0x70] sm:$0xff]
    %v66 = vld [vmem:[%s2 + $0x78] sm:$0xff]
    %v67 = vld [vmem:[%s2 + $0x80] sm:$0xff]
    %v68 = vld [vmem:[%s2 + $0x88] sm:$0xff]
    %v69 = vld [vmem:[%s2 + $0x90] sm:$0xff]
    %v70 = vld [vmem:[%s2 + $0x98] sm:$0xff]
    %v71 = vld [vmem:[%s2 + $0xa0] sm:$0xff]
    %v72 = vld [vmem:[%s2 + $0xa8] sm:$0xff]
    %v73 = vld [vmem:[%s2 + $0xb0] sm:$0xff]
    %v74 = vld [vmem:[%s2 + $0xb8] sm:$0xff]
    %v75 = vld [vmem:[%s2 + $0xc0] sm:$0xff]
    %v76 = vld [vmem:[%s2 + $0xc8] sm:$0xff]
    %v77 = vld [vmem:[%s2 + $0xd0] sm:$0xff]
    %v78 = vld [vmem:[%s2 + $0xd8] sm:$0xff]
    %v79 = vld [vmem:[%s2 + $0xe0] sm:$0xff]
    %v80 = vld [vmem:[%s2 + $0xe8] sm:$0xff]
    %v81 = vld [vmem:[%s2 + $0xf0] sm:$0xff]
    %v82 = vld [vmem:[%s2 + $0xf8] sm:$0xff]
    %v83 = vld [vmem:[%s2 + $0x100] sm:$0xff]
    %v84 = vld [vmem:[%s2 + $0x108] sm:$0xff]
    %v85 = vld [vmem:[%s2 + $0x110] sm:$0xff]
    %v86 = vld [vmem:[%s2 + $0x118] sm:$0xff]
    %v87 = vld [vmem:[%s2 + $0x120] sm:$0xff]
    %v88 = vld [vmem:[%s2 + $0x128] sm:$0xff]
    %v89 = vld [vmem:[%s2 + $0x130] sm:$0xff]
    %v90 = vld [vmem:[%s2 + $0x138] sm:$0xff]
    %v91 = vld [vmem:[%s2 + $0x140] sm:$0xff]
    %v92 = vld [vmem:[%s2 + $0x148] sm:$0xff]
    %v93 = vld [vmem:[%s2 + $0x150] sm:$0xff]
    %v94 = vld [vmem:[%s2 + $0x158] sm:$0xff]
    %v95 = vld [vmem:[%s2 + $0x160] sm:$0xff]
    %v96 = vld [vmem:[%s2 + $0x168] sm:$0xff]
    %v97 = vld [vmem:[%s2 + $0x170] sm:$0xff]
    %v98 = vld [vmem:[%s2 + $0x178] sm:$0xff]
    %v99 = vld [vmem:[%s2 + $0x180] sm:$0xff]
    %v100 = vld [vmem:[%s2 + $0x188] sm:$0xff]
    %v101 = vld [vmem:[%s2 + $0x190] sm:$0xff]
    %v102 = vld [vmem:[%s2 + $0x198] sm:$0xff]
    %v103 = vld [vmem:[%s2 + $0x1a0] sm:$0xff]
    %v104 = vld [vmem:[%s2 + $0x1a8] sm:$0xff]
    %v105 = vld [vmem:[%s2 + $0x1b0] sm:$0xff]
    %v106 = vld [vmem:[%s2 + $0x1b8] sm:$0xff]
    %v107 = vld [vmem:[%s2 + $0x1c0] sm:$0xff]
    %v108 = vld [vmem:[%s2 + $0x1c8] sm:$0xff]
    %v109 = vld [vmem:[%s2 + $0x1d0] sm:$0xff]
    %v110 = vld [vmem:[%s2 + $0x1d8] sm:$0xff]
    %v111 = vld [vmem:[%s2 + $0x1e0] sm:$0xff]
    %v112 = vld [vmem:[%s2 + $0x1e8] sm:$0xff]
    %v113 = vld [vmem:[%s2 + $0x1f0] sm:$0xff]
    %v114 = vld [vmem:[%s2 + $0x1f8] sm:$0xff]
    %v115 = vld [vmem:[%s2 + $0x200] sm:$0xff]
    %v116 = vld [vmem:[%s2 + $0x208] sm:$0xff]
    %v117 = vld [vmem:[%s2 + $0x210] sm:$0xff]
    %v118 = vld [vmem:[%s2 + $0x218] sm:$0xff]
    %v119 = vld [vmem:[%s2 + $0x220] sm:$0xff]
    %v120 = vld [vmem:[%s2 + $0x228] sm:$0xff]
    %v121 = vld [vmem:[%s2 + $0x230] sm:$0xff]
    %v122 = vld [vmem:[%s2 + $0x238] sm:$0xff]
    %v123 = vld [vmem:[%s2 + $0x240] sm:$0xff]
    %v124 = vld [vmem:[%s2 + $0x248] sm:$0xff]
    %v125 = vld [vmem:[%s2 + $0x250] sm:$0xff]
    %v126 = vld [vmem:[%s2 + $0x258] sm:$0xff]
    %v127 = vld [vmem:[%s2 + $0x260] sm:$0xff]
    %v128 = vld [vmem:[%s2 + $0x268] sm:$0xff]
    %v129 = vld [vmem:[%s2 + $0x270] sm:$0xff]
    %v130 = vld [vmem:[%s2 + $0x278] sm:$0xff]
    %v131 = vld [vmem:[%s2 + $0x280] sm:$0xff]
    %v132 = vld [vmem:[%s2 + $0x288] sm:$0xff]
    %v133 = vld [vmem:[%s2 + $0x290] sm:$0xff]
    %v134 = vld [vmem:[%s2 + $0x298] sm:$0xff]
    %v135 = vld [vmem:[%s2 + $0x2a0] sm:$0xff]
    %v136 = vld [vmem:[%s2 + $0x2a8] sm:$0xff]
    %v137 = vld [vmem:[%s2 + $0x2b0] sm:$0xff]
    %v138 = vld [vmem:[%s2 + $0x2b8] sm:$0xff]
    %v139 = vld [vmem:[%s2 + $0x2c0] sm:$0xff]
    %v140 = vld [vmem:[%s2 + $0x2c8] sm:$0xff]
    %v141 = vld [vmem:[%s2 + $0x2d0] sm:$0xff]
    %v142 = vld [vmem:[%s2 + $0x2d8] sm:$0xff]
    %v143 = vld [vmem:[%s2 + $0x2e0] sm:$0xff]
    %v144 = vld [vmem:[%s2 + $0x2e8] sm:$0xff]
    %v145 = vld [vmem:[%s2 + $0x2f0] sm:$0xff]
    %v146 = vld [vmem:[%s2 + $0x2f8] sm:$0xff]
    %v147 = vld [vmem:[%s2 + $0x300] sm:$0xff]
    %v148 = vld [vmem:[%s2 + $0x308] sm:$0xff]
    %v149 = vld [vmem:[%s2 + $0x310] sm:$0xff]
    %v150 = vld [vmem:[%s2 + $0x318] sm:$0xff]
    %v151 = vld [vmem:[%s2 + $0x320] sm:$0xff]
    %v152 = vld [vmem:[%s2 + $0x328] sm:$0xff]
    %v153 = vld [vmem:[%s2 + $0x330] sm:$0xff]
    %v154 = vld [vmem:[%s2 + $0x338] sm:$0xff]
    %v155 = vld [vmem:[%s2 + $0x340] sm:$0xff]
    %v156 = vld [vmem:[%s2 + $0x348] sm:$0xff]
    %v157 = vld [vmem:[%s2 + $0x350] sm:$0xff]
    %v158 = vld [vmem:[%s2 + $0x358] sm:$0xff]
    %v159 = vld [vmem:[%s2 + $0x360] sm:$0xff]
    %v160 = vld [vmem:[%s2 + $0x368] sm:$0xff]
    %v161 = vld [vmem:[%s2 + $0x370] sm:$0xff]
    %v162 = vld [vmem:[%s2 + $0x378] sm:$0xff]
    %v163 = vld [vmem:[%s2 + $0x380] sm:$0xff]
    %v164 = vld [vmem:[%s2 + $0x388] sm:$0xff]
    %v165 = vld [vmem:[%s2 + $0x390] sm:$0xff]
    %v166 = vld [vmem:[%s2 + $0x398] sm:$0xff]
    %v167 = vld [vmem:[%s2 + $0x3a0] sm:$0xff]
    %v168 = vld [vmem:[%s2 + $0x3a8] sm:$0xff]
    %v169 = vld [vmem:[%s2 + $0x3b0] sm:$0xff]
    %v170 = vld [vmem:[%s2 + $0x3b8] sm:$0xff]
    %v171 = vld [vmem:[%s2 + $0x3c0] sm:$0xff]
    %v172 = vld [vmem:[%s2 + $0x3c8] sm:$0xff]
    %v173 = vld [vmem:[%s2 + $0x3d0] sm:$0xff]
    %v174 = vld [vmem:[%s2 + $0x3d8] sm:$0xff]
    %v175 = vld [vmem:[%s2 + $0x3e0] sm:$0xff]
    %v176 = vld [vmem:[%s2 + $0x3e8] sm:$0xff]
    %v177 = vld [vmem:[%s2 + $0x3f0] sm:$0xff]
    %v178 = vld [vmem:[%s2 + $0x3f8] sm:$0xff]
    %v179 = vld [vmem:[%s2 + $0x400] sm:$0xff]
    %v180 = vld [vmem:[%s2 + $0x408] sm:$0xff]
    %v181 = vld [vmem:[%s2 + $0x410] sm:$0xff]
    %v182 = vld [vmem:[%s2 + $0x418] sm:$0xff]
    %v183 = vld [vmem:[%s2 + $0x420] sm:$0xff]
    %v184 = vld [vmem:[%s2 + $0x428] sm:$0xff]
    %v185 = vld [vmem:[%s2 + $0x430] sm:$0xff]
    %v186 = vld [vmem:[%s2 + $0x438] sm:$0xff]
    %v187 = vld [vmem:[%s2 + $0x440] sm:$0xff]
    %v188 = vld [vmem:[%s2 + $0x448] sm:$0xff]
    %v189 = vld [vmem:[%s2 + $0x450] sm:$0xff]
    %v190 = vld [vmem:[%s2 + $0x458] sm:$0xff]
    %v191 = vld [vmem:[%s2 + $0x460] sm:$0xff]
    %v192 = vld [vmem:[%s2 + $0x468] sm:$0xff]
    %v193 = vld [vmem:[%s2 + $0x470] sm:$0xff]
    %v194 = vld [vmem:[%s2 + $0x478] sm:$0xff]
    %v195 = vld [vmem:[%s2 + $0x480] sm:$0xff]
    %v196 = vld [vmem:[%s2 + $0x488] sm:$0xff]
    %v197 = vld [vmem:[%s2 + $0x490] sm:$0xff]
    %v198 = vld [vmem:[%s2 + $0x498] sm:$0xff]
    %v199 = vld [vmem:[%s2 + $0x4a0] sm:$0xff]
    %v200 = vld [vmem:[%s2 + $0x4a8] sm:$0xff]
    %v201 = vld [vmem:[%s2 + $0x4b0] sm:$0xff]
    %v202 = vld [vmem:[%s2 + $0x4b8] sm:$0xff]
    %v203 = vld [vmem:[%s2 + $0x4c0] sm:$0xff]
    %v204 = vld [vmem:[%s2 + $0x4c8] sm:$0xff]
    %v205 = vld [vmem:[%s2 + $0x4d0] sm:$0xff]
    %v206 = vld [vmem:[%s2 + $0x4d8] sm:$0xff]
    %v207 = vld [vmem:[%s2 + $0x4e0] sm:$0xff]
    %v208 = vld [vmem:[%s2 + $0x4e8] sm:$0xff]
    %v209 = vld [vmem:[%s2 + $0x4f0] sm:$0xff]
    %v210 = vld [vmem:[%s2 + $0x4f8] sm:$0xff]
    %v211 = vld [vmem:[%s2 + $0x500] sm:$0xff]
    %v212 = vld [vmem:[%s2 + $0x508] sm:$0xff]
    %v213 = vld [vmem:[%s2 + $0x510] sm:$0xff]
    %v214 = vld [vmem:[%s2 + $0x518] sm:$0xff]
    %v215 = vld [vmem:[%s2 + $0x520] sm:$0xff]
    %v216 = vld [vmem:[%s2 + $0x528] sm:$0xff]
    %v217 = vld [vmem:[%s2 + $0x530] sm:$0xff]
    %v218 = vld [vmem:[%s2 + $0x538] sm:$0xff]
    %v219 = vld [vmem:[%s2 + $0x540] sm:$0xff]
    %v220 = vld [vmem:[%s2 + $0x548] sm:$0xff]
    %v221 = vld [vmem:[%s2 + $0x550] sm:$0xff]
    %v222 = vld [vmem:[%s2 + $0x558] sm:$0xff]
    %v223 = vld [vmem:[%s2 + $0x560] sm:$0xff]
    %v224 = vld [vmem:[%s2 + $0x568] sm:$0xff]
    %v225 = vld [vmem:[%s2 + $0x570] sm:$0xff]
    %v226 = vld [vmem:[%s2 + $0x578] sm:$0xff]
    %v227 = vld [vmem:[%s2 + $0x580] sm:$0xff]
    %v228 = vld [vmem:[%s2 + $0x588] sm:$0xff]
    %v229 = vld [vmem:[%s2 + $0x590] sm:$0xff]
    %v230 = vld [vmem:[%s2 + $0x598] sm:$0xff]
    %v231 = vld [vmem:[%s2 + $0x5a0] sm:$0xff]
    %v232 = vld [vmem:[%s2 + $0x5a8] sm:$0xff]
    %v233 = vld [vmem:[%s2 + $0x5b0] sm:$0xff]
    %v234 = vld [vmem:[%s2 + $0x5b8] sm:$0xff]
    %v235 = vld [vmem:[%s2 + $0x5c0] sm:$0xff]
    %v236 = vld [vmem:[%s2 + $0x5c8] sm:$0xff]
    %v237 = vld [vmem:[%s2 + $0x5d0] sm:$0xff]
    %v238 = vld [vmem:[%s2 + $0x5d8] sm:$0xff]
    %v239 = vld [vmem:[%s2 + $0x5e0] sm:$0xff]
    %v240 = vld [vmem:[%s2 + $0x5e8] sm:$0xff]
    %v241 = vld [vmem:[%s2 + $0x5f0] sm:$0xff]
    %v242 = vld [vmem:[%s2 + $0x5f8] sm:$0xff]
    %v243 = vld [vmem:[%s2 + $0x600] sm:$0xff]
    %v244 = vld [vmem:[%s2 + $0x608] sm:$0xff]
    %v245 = vld [vmem:[%s2 + $0x610] sm:$0xff]
    %v246 = vld [vmem:[%s2 + $0x618] sm:$0xff]
    %v247 = vld [vmem:[%s3] sm:$0xf]
    %v249 = vlaneseq
    %v250 = vshrl.u32 %v249, 7
    %v251 = vsub.s32 0, %v250
    %v252 = vrot.slane %v247, %v251
    %v253 = vlaneseq
    %v254 = vshrl.u32 %v253, 7
    %v255 = vsub.s32 1, %v254
    %v256 = vrot.slane %v247, %v255
    %v257 = vlaneseq
    %v258 = vshrl.u32 %v257, 7
    %v259 = vsub.s32 2, %v258
    %v260 = vrot.slane %v247, %v259
    %v261 = vlaneseq
    %v262 = vshrl.u32 %v261, 7
    %v263 = vsub.s32 3, %v262
    %v264 = vrot.slane %v247, %v263
    %v465 = vunpack.c.l.b16 %v51
    %v466 = vunpack.c.h.b16 %v51
    %v467 = vunpack.c.l.b16 %v52
    %v468 = vunpack.c.h.b16 %v52
    %v469 = vunpack.c.l.b16 %v53
    %v470 = vunpack.c.h.b16 %v53
    %v471 = vunpack.c.l.b16 %v54
    %v472 = vunpack.c.h.b16 %v54
    %v473 = vunpack.c.l.b16 %v55
    %v474 = vunpack.c.h.b16 %v55
    %v475 = vunpack.c.l.b16 %v56
    %v476 = vunpack.c.h.b16 %v56
    %v477 = vunpack.c.l.b16 %v57
    %v478 = vunpack.c.h.b16 %v57
    %v479 = vunpack.c.l.b16 %v58
    %v480 = vunpack.c.h.b16 %v58
    %v481 = vunpack.c.l.b16 %v59
    %v482 = vunpack.c.h.b16 %v59
    %v483 = vunpack.c.l.b16 %v60
    %v484 = vunpack.c.h.b16 %v60
    %v485 = vunpack.c.l.b16 %v61
    %v486 = vunpack.c.h.b16 %v61
    %v487 = vunpack.c.l.b16 %v62
    %v488 = vunpack.c.h.b16 %v62
    %v489 = vunpack.c.l.b16 %v63
    %v490 = vunpack.c.h.b16 %v63
    %v491 = vunpack.c.l.b16 %v64
    %v492 = vunpack.c.h.b16 %v64
    %v493 = vunpack.c.l.b16 %v65
    %v494 = vunpack.c.h.b16 %v65
    %v495 = vunpack.c.l.b16 %v66
    %v496 = vunpack.c.h.b16 %v66
    %v497 = vunpack.c.l.b16 %v67
    %v498 = vunpack.c.h.b16 %v67
    %v499 = vunpack.c.l.b16 %v68
    %v500 = vunpack.c.h.b16 %v68
    %v501 = vunpack.c.l.b16 %v69
    %v502 = vunpack.c.h.b16 %v69
    %v503 = vunpack.c.l.b16 %v70
    %v504 = vunpack.c.h.b16 %v70
    %v505 = vunpack.c.l.b16 %v71
    %v506 = vunpack.c.h.b16 %v71
    %v507 = vunpack.c.l.b16 %v72
    %v508 = vunpack.c.h.b16 %v72
    %v509 = vunpack.c.l.b16 %v73
    %v510 = vunpack.c.h.b16 %v73
    %v511 = vunpack.c.l.b16 %v74
    %v512 = vunpack.c.h.b16 %v74
    %v513 = vunpack.c.l.b16 %v75
    %v514 = vunpack.c.h.b16 %v75
    %v515 = vunpack.c.l.b16 %v76
    %v516 = vunpack.c.h.b16 %v76
    %v517 = vunpack.c.l.b16 %v77
    %v518 = vunpack.c.h.b16 %v77
    %v519 = vunpack.c.l.b16 %v78
    %v520 = vunpack.c.h.b16 %v78
    %v521 = vunpack.c.l.b16 %v79
    %v522 = vunpack.c.h.b16 %v79
    %v523 = vunpack.c.l.b16 %v80
    %v524 = vunpack.c.h.b16 %v80
    %v525 = vunpack.c.l.b16 %v81
    %v526 = vunpack.c.h.b16 %v81
    %v527 = vunpack.c.l.b16 %v82
    %v528 = vunpack.c.h.b16 %v82
    %v529 = vunpack.c.l.b16 %v83
    %v530 = vunpack.c.h.b16 %v83
    %v531 = vunpack.c.l.b16 %v84
    %v532 = vunpack.c.h.b16 %v84
    %v533 = vunpack.c.l.b16 %v85
    %v534 = vunpack.c.h.b16 %v85
    %v535 = vunpack.c.l.b16 %v86
    %v536 = vunpack.c.h.b16 %v86
    %v537 = vunpack.c.l.b16 %v87
    %v538 = vunpack.c.h.b16 %v87
    %v539 = vunpack.c.l.b16 %v88
    %v540 = vunpack.c.h.b16 %v88
    %v541 = vunpack.c.l.b16 %v89
    %v542 = vunpack.c.h.b16 %v89
    %v543 = vunpack.c.l.b16 %v90
    %v544 = vunpack.c.h.b16 %v90
    %v545 = vunpack.c.l.b16 %v91
    %v546 = vunpack.c.h.b16 %v91
    %v547 = vunpack.c.l.b16 %v92
    %v548 = vunpack.c.h.b16 %v92
    %v549 = vunpack.c.l.b16 %v93
    %v550 = vunpack.c.h.b16 %v93
    %v551 = vunpack.c.l.b16 %v94
    %v552 = vunpack.c.h.b16 %v94
    %v553 = vunpack.c.l.b16 %v95
    %v554 = vunpack.c.h.b16 %v95
    %v555 = vunpack.c.l.b16 %v96
    %v556 = vunpack.c.h.b16 %v96
    %v557 = vunpack.c.l.b16 %v97
    %v558 = vunpack.c.h.b16 %v97
    %v559 = vunpack.c.l.b16 %v98
    %v560 = vunpack.c.h.b16 %v98
    %v561 = vunpack.c.l.b16 %v99
    %v562 = vunpack.c.h.b16 %v99
    %v563 = vunpack.c.l.b16 %v100
    %v564 = vunpack.c.h.b16 %v100
    %v565 = vunpack.c.l.b16 %v101
    %v566 = vunpack.c.h.b16 %v101
    %v567 = vunpack.c.l.b16 %v102
    %v568 = vunpack.c.h.b16 %v102
    %v569 = vunpack.c.l.b16 %v103
    %v570 = vunpack.c.h.b16 %v103
    %v571 = vunpack.c.l.b16 %v104
    %v572 = vunpack.c.h.b16 %v104
    %v573 = vunpack.c.l.b16 %v105
    %v574 = vunpack.c.h.b16 %v105
    %v575 = vunpack.c.l.b16 %v106
    %v576 = vunpack.c.h.b16 %v106
    %v577 = vunpack.c.l.b16 %v107
    %v578 = vunpack.c.h.b16 %v107
    %v579 = vunpack.c.l.b16 %v108
    %v580 = vunpack.c.h.b16 %v108
    %v581 = vunpack.c.l.b16 %v109
    %v582 = vunpack.c.h.b16 %v109
    %v583 = vunpack.c.l.b16 %v110
    %v584 = vunpack.c.h.b16 %v110
    %v585 = vunpack.c.l.b16 %v111
    %v586 = vunpack.c.h.b16 %v111
    %v587 = vunpack.c.l.b16 %v112
    %v588 = vunpack.c.h.b16 %v112
    %v589 = vunpack.c.l.b16 %v113
    %v590 = vunpack.c.h.b16 %v113
    %v591 = vunpack.c.l.b16 %v114
    %v592 = vunpack.c.h.b16 %v114
    %v593 = vunpack.c.l.b16 %v115
    %v594 = vunpack.c.h.b16 %v115
    %v595 = vunpack.c.l.b16 %v116
    %v596 = vunpack.c.h.b16 %v116
    %v597 = vunpack.c.l.b16 %v117
    %v598 = vunpack.c.h.b16 %v117
    %v599 = vunpack.c.l.b16 %v118
    %v600 = vunpack.c.h.b16 %v118
    %v601 = vunpack.c.l.b16 %v119
    %v602 = vunpack.c.h.b16 %v119
    %v603 = vunpack.c.l.b16 %v120
    %v604 = vunpack.c.h.b16 %v120
    %v605 = vunpack.c.l.b16 %v121
    %v606 = vunpack.c.h.b16 %v121
    %v607 = vunpack.c.l.b16 %v122
    %v608 = vunpack.c.h.b16 %v122
    %v609 = vunpack.c.l.b16 %v123
    %v610 = vunpack.c.h.b16 %v123
    %v611 = vunpack.c.l.b16 %v124
    %v612 = vunpack.c.h.b16 %v124
    %v613 = vunpack.c.l.b16 %v125
    %v614 = vunpack.c.h.b16 %v125
    %v615 = vunpack.c.l.b16 %v126
    %v616 = vunpack.c.h.b16 %v126
    %v617 = vunpack.c.l.b16 %v127
    %v618 = vunpack.c.h.b16 %v127
    %v619 = vunpack.c.l.b16 %v128
    %v620 = vunpack.c.h.b16 %v128
    %v621 = vunpack.c.l.b16 %v129
    %v622 = vunpack.c.h.b16 %v129
    %v623 = vunpack.c.l.b16 %v130
    %v624 = vunpack.c.h.b16 %v130
    %v625 = vunpack.c.l.b16 %v131
    %v626 = vunpack.c.h.b16 %v131
    %v627 = vunpack.c.l.b16 %v132
    %v628 = vunpack.c.h.b16 %v132
    %v629 = vunpack.c.l.b16 %v133
    %v630 = vunpack.c.h.b16 %v133
    %v631 = vunpack.c.l.b16 %v134
    %v632 = vunpack.c.h.b16 %v134
    %v633 = vunpack.c.l.b16 %v135
    %v634 = vunpack.c.h.b16 %v135
    %v635 = vunpack.c.l.b16 %v136
    %v636 = vunpack.c.h.b16 %v136
    %v637 = vunpack.c.l.b16 %v137
    %v638 = vunpack.c.h.b16 %v137
    %v639 = vunpack.c.l.b16 %v138
    %v640 = vunpack.c.h.b16 %v138
    %v641 = vunpack.c.l.b16 %v139
    %v642 = vunpack.c.h.b16 %v139
    %v643 = vunpack.c.l.b16 %v140
    %v644 = vunpack.c.h.b16 %v140
    %v645 = vunpack.c.l.b16 %v141
    %v646 = vunpack.c.h.b16 %v141
    %v647 = vunpack.c.l.b16 %v142
    %v648 = vunpack.c.h.b16 %v142
    %v649 = vunpack.c.l.b16 %v143
    %v650 = vunpack.c.h.b16 %v143
    %v651 = vunpack.c.l.b16 %v144
    %v652 = vunpack.c.h.b16 %v144
    %v653 = vunpack.c.l.b16 %v145
    %v654 = vunpack.c.h.b16 %v145
    %v655 = vunpack.c.l.b16 %v146
    %v656 = vunpack.c.h.b16 %v146
    %v657 = vunpack.c.l.b16 %v147
    %v658 = vunpack.c.h.b16 %v147
    %v659 = vunpack.c.l.b16 %v148
    %v660 = vunpack.c.h.b16 %v148
    %v661 = vunpack.c.l.b16 %v149
    %v662 = vunpack.c.h.b16 %v149
    %v663 = vunpack.c.l.b16 %v150
    %v664 = vunpack.c.h.b16 %v150
    %v665 = vunpack.c.l.b16 %v151
    %v666 = vunpack.c.h.b16 %v151
    %v667 = vunpack.c.l.b16 %v152
    %v668 = vunpack.c.h.b16 %v152
    %v669 = vunpack.c.l.b16 %v153
    %v670 = vunpack.c.h.b16 %v153
    %v671 = vunpack.c.l.b16 %v154
    %v672 = vunpack.c.h.b16 %v154
    %v673 = vunpack.c.l.b16 %v155
    %v674 = vunpack.c.h.b16 %v155
    %v675 = vunpack.c.l.b16 %v156
    %v676 = vunpack.c.h.b16 %v156
    %v677 = vunpack.c.l.b16 %v157
    %v678 = vunpack.c.h.b16 %v157
    %v679 = vunpack.c.l.b16 %v158
    %v680 = vunpack.c.h.b16 %v158
    %v681 = vunpack.c.l.b16 %v159
    %v682 = vunpack.c.h.b16 %v159
    %v683 = vunpack.c.l.b16 %v160
    %v684 = vunpack.c.h.b16 %v160
    %v685 = vunpack.c.l.b16 %v161
    %v686 = vunpack.c.h.b16 %v161
    %v687 = vunpack.c.l.b16 %v162
    %v688 = vunpack.c.h.b16 %v162
    %v689 = vunpack.c.l.b16 %v163
    %v690 = vunpack.c.h.b16 %v163
    %v691 = vunpack.c.l.b16 %v164
    %v692 = vunpack.c.h.b16 %v164
    %v693 = vunpack.c.l.b16 %v165
    %v694 = vunpack.c.h.b16 %v165
    %v695 = vunpack.c.l.b16 %v166
    %v696 = vunpack.c.h.b16 %v166
    %v697 = vunpack.c.l.b16 %v167
    %v698 = vunpack.c.h.b16 %v167
    %v699 = vunpack.c.l.b16 %v168
    %v700 = vunpack.c.h.b16 %v168
    %v701 = vunpack.c.l.b16 %v169
    %v702 = vunpack.c.h.b16 %v169
    %v703 = vunpack.c.l.b16 %v170
    %v704 = vunpack.c.h.b16 %v170
    %v705 = vunpack.c.l.b16 %v171
    %v706 = vunpack.c.h.b16 %v171
    %v707 = vunpack.c.l.b16 %v172
    %v708 = vunpack.c.h.b16 %v172
    %v709 = vunpack.c.l.b16 %v173
    %v710 = vunpack.c.h.b16 %v173
    %v711 = vunpack.c.l.b16 %v174
    %v712 = vunpack.c.h.b16 %v174
    %v713 = vunpack.c.l.b16 %v175
    %v714 = vunpack.c.h.b16 %v175
    %v715 = vunpack.c.l.b16 %v176
    %v716 = vunpack.c.h.b16 %v176
    %v717 = vunpack.c.l.b16 %v177
    %v718 = vunpack.c.h.b16 %v177
    %v719 = vunpack.c.l.b16 %v178
    %v720 = vunpack.c.h.b16 %v178
    %v721 = vunpack.c.l.b16 %v179
    %v722 = vunpack.c.h.b16 %v179
    %v723 = vunpack.c.l.b16 %v180
    %v724 = vunpack.c.h.b16 %v180
    %v725 = vunpack.c.l.b16 %v181
    %v726 = vunpack.c.h.b16 %v181
    %v727 = vunpack.c.l.b16 %v182
    %v728 = vunpack.c.h.b16 %v182
    %v729 = vunpack.c.l.b16 %v183
    %v730 = vunpack.c.h.b16 %v183
    %v731 = vunpack.c.l.b16 %v184
    %v732 = vunpack.c.h.b16 %v184
    %v733 = vunpack.c.l.b16 %v185
    %v734 = vunpack.c.h.b16 %v185
    %v735 = vunpack.c.l.b16 %v186
    %v736 = vunpack.c.h.b16 %v186
    %v737 = vunpack.c.l.b16 %v187
    %v738 = vunpack.c.h.b16 %v187
    %v739 = vunpack.c.l.b16 %v188
    %v740 = vunpack.c.h.b16 %v188
    %v741 = vunpack.c.l.b16 %v189
    %v742 = vunpack.c.h.b16 %v189
    %v743 = vunpack.c.l.b16 %v190
    %v744 = vunpack.c.h.b16 %v190
    %v745 = vunpack.c.l.b16 %v191
    %v746 = vunpack.c.h.b16 %v191
    %v747 = vunpack.c.l.b16 %v192
    %v748 = vunpack.c.h.b16 %v192
    %v749 = vunpack.c.l.b16 %v193
    %v750 = vunpack.c.h.b16 %v193
    %v751 = vunpack.c.l.b16 %v194
    %v752 = vunpack.c.h.b16 %v194
    %v753 = vunpack.c.l.b16 %v195
    %v754 = vunpack.c.h.b16 %v195
    %v755 = vunpack.c.l.b16 %v196
    %v756 = vunpack.c.h.b16 %v196
    %v757 = vunpack.c.l.b16 %v197
    %v758 = vunpack.c.h.b16 %v197
    %v759 = vunpack.c.l.b16 %v198
    %v760 = vunpack.c.h.b16 %v198
    %v761 = vunpack.c.l.b16 %v199
    %v762 = vunpack.c.h.b16 %v199
    %v763 = vunpack.c.l.b16 %v200
    %v764 = vunpack.c.h.b16 %v200
    %v765 = vunpack.c.l.b16 %v201
    %v766 = vunpack.c.h.b16 %v201
    %v767 = vunpack.c.l.b16 %v202
    %v768 = vunpack.c.h.b16 %v202
    %v769 = vunpack.c.l.b16 %v203
    %v770 = vunpack.c.h.b16 %v203
    %v771 = vunpack.c.l.b16 %v204
    %v772 = vunpack.c.h.b16 %v204
    %v773 = vunpack.c.l.b16 %v205
    %v774 = vunpack.c.h.b16 %v205
    %v775 = vunpack.c.l.b16 %v206
    %v776 = vunpack.c.h.b16 %v206
    %v777 = vunpack.c.l.b16 %v207
    %v778 = vunpack.c.h.b16 %v207
    %v779 = vunpack.c.l.b16 %v208
    %v780 = vunpack.c.h.b16 %v208
    %v781 = vunpack.c.l.b16 %v209
    %v782 = vunpack.c.h.b16 %v209
    %v783 = vunpack.c.l.b16 %v210
    %v784 = vunpack.c.h.b16 %v210
    %v785 = vunpack.c.l.b16 %v211
    %v786 = vunpack.c.h.b16 %v211
    %v787 = vunpack.c.l.b16 %v212
    %v788 = vunpack.c.h.b16 %v212
    %v789 = vunpack.c.l.b16 %v213
    %v790 = vunpack.c.h.b16 %v213
    %v791 = vunpack.c.l.b16 %v214
    %v792 = vunpack.c.h.b16 %v214
    %v793 = vunpack.c.l.b16 %v215
    %v794 = vunpack.c.h.b16 %v215
    %v795 = vunpack.c.l.b16 %v216
    %v796 = vunpack.c.h.b16 %v216
    %v797 = vunpack.c.l.b16 %v217
    %v798 = vunpack.c.h.b16 %v217
    %v799 = vunpack.c.l.b16 %v218
    %v800 = vunpack.c.h.b16 %v218
    %v801 = vunpack.c.l.b16 %v219
    %v802 = vunpack.c.h.b16 %v219
    %v803 = vunpack.c.l.b16 %v220
    %v804 = vunpack.c.h.b16 %v220
    %v805 = vunpack.c.l.b16 %v221
    %v806 = vunpack.c.h.b16 %v221
    %v807 = vunpack.c.l.b16 %v222
    %v808 = vunpack.c.h.b16 %v222
    %v809 = vunpack.c.l.b16 %v223
    %v810 = vunpack.c.h.b16 %v223
    %v811 = vunpack.c.l.b16 %v224
    %v812 = vunpack.c.h.b16 %v224
    %v813 = vunpack.c.l.b16 %v225
    %v814 = vunpack.c.h.b16 %v225
    %v815 = vunpack.c.l.b16 %v226
    %v816 = vunpack.c.h.b16 %v226
    %v817 = vunpack.c.l.b16 %v227
    %v818 = vunpack.c.h.b16 %v227
    %v819 = vunpack.c.l.b16 %v228
    %v820 = vunpack.c.h.b16 %v228
    %v821 = vunpack.c.l.b16 %v229
    %v822 = vunpack.c.h.b16 %v229
    %v823 = vunpack.c.l.b16 %v230
    %v824 = vunpack.c.h.b16 %v230
    %v825 = vunpack.c.l.b16 %v231
    %v826 = vunpack.c.h.b16 %v231
    %v827 = vunpack.c.l.b16 %v232
    %v828 = vunpack.c.h.b16 %v232
    %v829 = vunpack.c.l.b16 %v233
    %v830 = vunpack.c.h.b16 %v233
    %v831 = vunpack.c.l.b16 %v234
    %v832 = vunpack.c.h.b16 %v234
    %v833 = vunpack.c.l.b16 %v235
    %v834 = vunpack.c.h.b16 %v235
    %v835 = vunpack.c.l.b16 %v236
    %v836 = vunpack.c.h.b16 %v236
    %v837 = vunpack.c.l.b16 %v237
    %v838 = vunpack.c.h.b16 %v237
    %v839 = vunpack.c.l.b16 %v238
    %v840 = vunpack.c.h.b16 %v238
    %v841 = vunpack.c.l.b16 %v239
    %v842 = vunpack.c.h.b16 %v239
    %v843 = vunpack.c.l.b16 %v240
    %v844 = vunpack.c.h.b16 %v240
    %v845 = vunpack.c.l.b16 %v241
    %v846 = vunpack.c.h.b16 %v241
    %v847 = vunpack.c.l.b16 %v242
    %v848 = vunpack.c.h.b16 %v242
    %v849 = vunpack.c.l.b16 %v243
    %v850 = vunpack.c.h.b16 %v243
    %v851 = vunpack.c.l.b16 %v244
    %v852 = vunpack.c.h.b16 %v244
    %v853 = vunpack.c.l.b16 %v245
    %v854 = vunpack.c.h.b16 %v245
    %v855 = vunpack.c.l.b16 %v246
    %v856 = vunpack.c.h.b16 %v246
    %v857 = vpack.c.b16 %v469, %v465
    %v858 = vpack.c.b16 %v470, %v466
    %v859 = vpack.c.b16 %v471, %v467
    %v860 = vpack.c.b16 %v472, %v468
    %v861 = vpack.c.b16 %v477, %v473
    %v862 = vpack.c.b16 %v478, %v474
    %v863 = vpack.c.b16 %v479, %v475
    %v864 = vpack.c.b16 %v480, %v476
    %v865 = vpack.c.b16 %v485, %v481
    %v866 = vpack.c.b16 %v486, %v482
    %v867 = vpack.c.b16 %v487, %v483
    %v868 = vpack.c.b16 %v488, %v484
    %v869 = vpack.c.b16 %v493, %v489
    %v870 = vpack.c.b16 %v494, %v490
    %v871 = vpack.c.b16 %v495, %v491
    %v872 = vpack.c.b16 %v496, %v492
    %v873 = vpack.c.b16 %v501, %v497
    %v874 = vpack.c.b16 %v502, %v498
    %v875 = vpack.c.b16 %v503, %v499
    %v876 = vpack.c.b16 %v504, %v500
    %v877 = vpack.c.b16 %v509, %v505
    %v878 = vpack.c.b16 %v510, %v506
    %v879 = vpack.c.b16 %v511, %v507
    %v880 = vpack.c.b16 %v512, %v508
    %v881 = vpack.c.b16 %v517, %v513
    %v882 = vpack.c.b16 %v518, %v514
    %v883 = vpack.c.b16 %v519, %v515
    %v884 = vpack.c.b16 %v520, %v516
    %v885 = vpack.c.b16 %v525, %v521
    %v886 = vpack.c.b16 %v526, %v522
    %v887 = vpack.c.b16 %v527, %v523
    %v888 = vpack.c.b16 %v528, %v524
    %v889 = vpack.c.b16 %v533, %v529
    %v890 = vpack.c.b16 %v534, %v530
    %v891 = vpack.c.b16 %v535, %v531
    %v892 = vpack.c.b16 %v536, %v532
    %v893 = vpack.c.b16 %v541, %v537
    %v894 = vpack.c.b16 %v542, %v538
    %v895 = vpack.c.b16 %v543, %v539
    %v896 = vpack.c.b16 %v544, %v540
    %v897 = vpack.c.b16 %v549, %v545
    %v898 = vpack.c.b16 %v550, %v546
    %v899 = vpack.c.b16 %v551, %v547
    %v900 = vpack.c.b16 %v552, %v548
    %v901 = vpack.c.b16 %v557, %v553
    %v902 = vpack.c.b16 %v558, %v554
    %v903 = vpack.c.b16 %v559, %v555
    %v904 = vpack.c.b16 %v560, %v556
    %v905 = vpack.c.b16 %v565, %v561
    %v906 = vpack.c.b16 %v566, %v562
    %v907 = vpack.c.b16 %v567, %v563
    %v908 = vpack.c.b16 %v568, %v564
    %v909 = vpack.c.b16 %v573, %v569
    %v910 = vpack.c.b16 %v574, %v570
    %v911 = vpack.c.b16 %v575, %v571
    %v912 = vpack.c.b16 %v576, %v572
    %v913 = vpack.c.b16 %v581, %v577
    %v914 = vpack.c.b16 %v582, %v578
    %v915 = vpack.c.b16 %v583, %v579
    %v916 = vpack.c.b16 %v584, %v580
    %v917 = vpack.c.b16 %v589, %v585
    %v918 = vpack.c.b16 %v590, %v586
    %v919 = vpack.c.b16 %v591, %v587
    %v920 = vpack.c.b16 %v592, %v588
    %v921 = vpack.c.b16 %v597, %v593
    %v922 = vpack.c.b16 %v598, %v594
    %v923 = vpack.c.b16 %v599, %v595
    %v924 = vpack.c.b16 %v600, %v596
    %v925 = vpack.c.b16 %v605, %v601
    %v926 = vpack.c.b16 %v606, %v602
    %v927 = vpack.c.b16 %v607, %v603
    %v928 = vpack.c.b16 %v608, %v604
    %v929 = vpack.c.b16 %v613, %v609
    %v930 = vpack.c.b16 %v614, %v610
    %v931 = vpack.c.b16 %v615, %v611
    %v932 = vpack.c.b16 %v616, %v612
    %v933 = vpack.c.b16 %v621, %v617
    %v934 = vpack.c.b16 %v622, %v618
    %v935 = vpack.c.b16 %v623, %v619
    %v936 = vpack.c.b16 %v624, %v620
    %v937 = vpack.c.b16 %v629, %v625
    %v938 = vpack.c.b16 %v630, %v626
    %v939 = vpack.c.b16 %v631, %v627
    %v940 = vpack.c.b16 %v632, %v628
    %v941 = vpack.c.b16 %v637, %v633
    %v942 = vpack.c.b16 %v638, %v634
    %v943 = vpack.c.b16 %v639, %v635
    %v944 = vpack.c.b16 %v640, %v636
    %v945 = vpack.c.b16 %v645, %v641
    %v946 = vpack.c.b16 %v646, %v642
    %v947 = vpack.c.b16 %v647, %v643
    %v948 = vpack.c.b16 %v648, %v644
    %v949 = vpack.c.b16 %v653, %v649
    %v950 = vpack.c.b16 %v654, %v650
    %v951 = vpack.c.b16 %v655, %v651
    %v952 = vpack.c.b16 %v656, %v652
    %v953 = vpack.c.b16 %v661, %v657
    %v954 = vpack.c.b16 %v662, %v658
    %v955 = vpack.c.b16 %v663, %v659
    %v956 = vpack.c.b16 %v664, %v660
    %v957 = vpack.c.b16 %v669, %v665
    %v958 = vpack.c.b16 %v670, %v666
    %v959 = vpack.c.b16 %v671, %v667
    %v960 = vpack.c.b16 %v672, %v668
    %v961 = vpack.c.b16 %v677, %v673
    %v962 = vpack.c.b16 %v678, %v674
    %v963 = vpack.c.b16 %v679, %v675
    %v964 = vpack.c.b16 %v680, %v676
    %v965 = vpack.c.b16 %v685, %v681
    %v966 = vpack.c.b16 %v686, %v682
    %v967 = vpack.c.b16 %v687, %v683
    %v968 = vpack.c.b16 %v688, %v684
    %v969 = vpack.c.b16 %v693, %v689
    %v970 = vpack.c.b16 %v694, %v690
    %v971 = vpack.c.b16 %v695, %v691
    %v972 = vpack.c.b16 %v696, %v692
    %v973 = vpack.c.b16 %v701, %v697
    %v974 = vpack.c.b16 %v702, %v698
    %v975 = vpack.c.b16 %v703, %v699
    %v976 = vpack.c.b16 %v704, %v700
    %v977 = vpack.c.b16 %v709, %v705
    %v978 = vpack.c.b16 %v710, %v706
    %v979 = vpack.c.b16 %v711, %v707
    %v980 = vpack.c.b16 %v712, %v708
    %v981 = vpack.c.b16 %v717, %v713
    %v982 = vpack.c.b16 %v718, %v714
    %v983 = vpack.c.b16 %v719, %v715
    %v984 = vpack.c.b16 %v720, %v716
    %v985 = vpack.c.b16 %v725, %v721
    %v986 = vpack.c.b16 %v726, %v722
    %v987 = vpack.c.b16 %v727, %v723
    %v988 = vpack.c.b16 %v728, %v724
    %v989 = vpack.c.b16 %v733, %v729
    %v990 = vpack.c.b16 %v734, %v730
    %v991 = vpack.c.b16 %v735, %v731
    %v992 = vpack.c.b16 %v736, %v732
    %v993 = vpack.c.b16 %v741, %v737
    %v994 = vpack.c.b16 %v742, %v738
    %v995 = vpack.c.b16 %v743, %v739
    %v996 = vpack.c.b16 %v744, %v740
    %v997 = vpack.c.b16 %v749, %v745
    %v998 = vpack.c.b16 %v750, %v746
    %v999 = vpack.c.b16 %v751, %v747
    %v1000 = vpack.c.b16 %v752, %v748
    %v1001 = vpack.c.b16 %v757, %v753
    %v1002 = vpack.c.b16 %v758, %v754
    %v1003 = vpack.c.b16 %v759, %v755
    %v1004 = vpack.c.b16 %v760, %v756
    %v1005 = vpack.c.b16 %v765, %v761
    %v1006 = vpack.c.b16 %v766, %v762
    %v1007 = vpack.c.b16 %v767, %v763
    %v1008 = vpack.c.b16 %v768, %v764
    %v1009 = vpack.c.b16 %v773, %v769
    %v1010 = vpack.c.b16 %v774, %v770
    %v1011 = vpack.c.b16 %v775, %v771
    %v1012 = vpack.c.b16 %v776, %v772
    %v1013 = vpack.c.b16 %v781, %v777
    %v1014 = vpack.c.b16 %v782, %v778
    %v1015 = vpack.c.b16 %v783, %v779
    %v1016 = vpack.c.b16 %v784, %v780
    %v1017 = vpack.c.b16 %v789, %v785
    %v1018 = vpack.c.b16 %v790, %v786
    %v1019 = vpack.c.b16 %v791, %v787
    %v1020 = vpack.c.b16 %v792, %v788
    %v1021 = vpack.c.b16 %v797, %v793
    %v1022 = vpack.c.b16 %v798, %v794
    %v1023 = vpack.c.b16 %v799, %v795
    %v1024 = vpack.c.b16 %v800, %v796
    %v1025 = vpack.c.b16 %v805, %v801
    %v1026 = vpack.c.b16 %v806, %v802
    %v1027 = vpack.c.b16 %v807, %v803
    %v1028 = vpack.c.b16 %v808, %v804
    %v1029 = vpack.c.b16 %v813, %v809
    %v1030 = vpack.c.b16 %v814, %v810
    %v1031 = vpack.c.b16 %v815, %v811
    %v1032 = vpack.c.b16 %v816, %v812
    %v1033 = vpack.c.b16 %v821, %v817
    %v1034 = vpack.c.b16 %v822, %v818
    %v1035 = vpack.c.b16 %v823, %v819
    %v1036 = vpack.c.b16 %v824, %v820
    %v1037 = vpack.c.b16 %v829, %v825
    %v1038 = vpack.c.b16 %v830, %v826
    %v1039 = vpack.c.b16 %v831, %v827
    %v1040 = vpack.c.b16 %v832, %v828
    %v1041 = vpack.c.b16 %v837, %v833
    %v1042 = vpack.c.b16 %v838, %v834
    %v1043 = vpack.c.b16 %v839, %v835
    %v1044 = vpack.c.b16 %v840, %v836
    %v1045 = vpack.c.b16 %v845, %v841
    %v1046 = vpack.c.b16 %v846, %v842
    %v1047 = vpack.c.b16 %v847, %v843
    %v1048 = vpack.c.b16 %v848, %v844
    %v1049 = vpack.c.b16 %v853, %v849
    %v1050 = vpack.c.b16 %v854, %v850
    %v1051 = vpack.c.b16 %v855, %v851
    %v1052 = vpack.c.b16 %v856, %v852
    %vm1249 = vcmask 130048
    %v1251 = vsel %vm1249, %v50, 0
    %1253 = vmatprep.subr.bf16.mxu0 %v858
    %1254 = vmatpush1.bf16.msra.mxu0 %v857
    %1255 = vmatprep.subr.bf16.mxu0 %v862
    %1256 = vmatpush1.bf16.msra.mxu0 %v861
    %1257 = vmatprep.subr.bf16.mxu0 %v866
    %1258 = vmatpush1.bf16.msra.mxu0 %v865
    %1259 = vmatprep.subr.bf16.mxu0 %v870
    %1260 = vmatpush1.bf16.msra.mxu0 %v869
    %1261 = vmatprep.subr.bf16.mxu0 %v874
    %1262 = vmatpush1.bf16.msra.mxu0 %v873
    %1263 = vmatprep.subr.bf16.mxu0 %v878
    %1264 = vmatpush1.bf16.msra.mxu0 %v877
    %1265 = vmatprep.subr.bf16.mxu0 %v882
    %1266 = vmatpush1.bf16.msra.mxu0 %v881
    %1267 = vmatprep.subr.bf16.mxu0 %v886
    %1268 = vmatpush1.bf16.msra.mxu0 %v885
    %1269 = vmatprep.subr.bf16.mxu0 %v890
    %1270 = vmatpush1.bf16.msra.mxu0 %v889
    %1271 = vmatprep.subr.bf16.mxu0 %v894
    %1272 = vmatpush1.bf16.msra.mxu0 %v893
    %1273 = vmatprep.subr.bf16.mxu0 %v898
    %1274 = vmatpush1.bf16.msra.mxu0 %v897
    %1275 = vmatprep.subr.bf16.mxu0 %v902
    %1276 = vmatpush1.bf16.msra.mxu0 %v901
    %1277 = vmatprep.subr.bf16.mxu0 %v906
    %1278 = vmatpush1.bf16.msra.mxu0 %v905
    %1279 = vmatprep.subr.bf16.mxu0 %v910
    %1280 = vmatpush1.bf16.msra.mxu0 %v909
    %1281 = vmatprep.subr.bf16.mxu0 %v914
    %1282 = vmatpush1.bf16.msra.mxu0 %v913
    %1283 = vmatprep.subr.bf16.mxu0 %v918
    %1284 = vmatpush1.bf16.msra.mxu0 %v917
    %1285 = vmatprep.mubr.bf16.mxu0 %v45
    %1286 = vmatmul.mubr.bf16.gmra.mrb[0].mxu0 %v44
    %v1287 = vpop.f32.mrb[0].mxu0
    %v1288 = vadd.f32 %v252, %v1287
    %v1289 = vpop.f32.mrb[0].mxu0
    %v1290 = vadd.f32 %v256, %v1289
    %v1291 = vpop.f32.mrb[0].mxu0
    %v1292 = vpop.f32.mrb[0].mxu0
    %1293 = vdwg.mxu0
    %1294 = vmatprep.subr.bf16.mxu0 %v922
    %1295 = vmatpush1.bf16.msra.mxu0 %v921
    %1296 = vmatprep.subr.bf16.mxu0 %v926
    %1297 = vmatpush1.bf16.msra.mxu0 %v925
    %1298 = vmatprep.subr.bf16.mxu0 %v930
    %1299 = vmatpush1.bf16.msra.mxu0 %v929
    %1300 = vmatprep.subr.bf16.mxu0 %v934
    %1301 = vmatpush1.bf16.msra.mxu0 %v933
    %1302 = vmatprep.subr.bf16.mxu0 %v938
    %1303 = vmatpush1.bf16.msra.mxu0 %v937
    %1304 = vmatprep.subr.bf16.mxu0 %v942
    %1305 = vmatpush1.bf16.msra.mxu0 %v941
    %1306 = vmatprep.subr.bf16.mxu0 %v946
    %1307 = vmatpush1.bf16.msra.mxu0 %v945
    %1308 = vmatprep.subr.bf16.mxu0 %v950
    %1309 = vmatpush1.bf16.msra.mxu0 %v949
    %1310 = vmatprep.subr.bf16.mxu0 %v954
    %1311 = vmatpush1.bf16.msra.mxu0 %v953
    %1312 = vmatprep.subr.bf16.mxu0 %v958
    %1313 = vmatpush1.bf16.msra.mxu0 %v957
    %1314 = vmatprep.subr.bf16.mxu0 %v962
    %1315 = vmatpush1.bf16.msra.mxu0 %v961
    %1316 = vmatprep.subr.bf16.mxu0 %v966
    %1317 = vmatpush1.bf16.msra.mxu0 %v965
    %1318 = vmatprep.subr.bf16.mxu0 %v970
    %1319 = vmatpush1.bf16.msra.mxu0 %v969
    %1320 = vmatprep.subr.bf16.mxu0 %v974
    %1321 = vmatpush1.bf16.msra.mxu0 %v973
    %1322 = vmatprep.subr.bf16.mxu0 %v978
    %1323 = vmatpush1.bf16.msra.mxu0 %v977
    %1324 = vmatprep.subr.bf16.mxu0 %v982
    %1325 = vmatpush1.bf16.msra.mxu0 %v981
    %1326 = vmatprep.mubr.bf16.mxu0 %v47
    %1327 = vmatmul.mubr.bf16.gmra.mrb[0].mxu0 %v46
    %v1328 = vpop.f32.mrb[0].mxu0
    %v1329 = vadd.f32 %v1288, %v1328
    %v1330 = vpop.f32.mrb[0].mxu0
    %v1331 = vadd.f32 %v1290, %v1330
    %v1332 = vpop.f32.mrb[0].mxu0
    %v1333 = vpop.f32.mrb[0].mxu0
    %1334 = vdwg.mxu0
    %1335 = vmatprep.subr.bf16.mxu0 %v986
    %1336 = vmatpush1.bf16.msra.mxu0 %v985
    %1337 = vmatprep.subr.bf16.mxu0 %v990
    %1338 = vmatpush1.bf16.msra.mxu0 %v989
    %1339 = vmatprep.subr.bf16.mxu0 %v994
    %1340 = vmatpush1.bf16.msra.mxu0 %v993
    %1341 = vmatprep.subr.bf16.mxu0 %v998
    %1342 = vmatpush1.bf16.msra.mxu0 %v997
    %1343 = vmatprep.subr.bf16.mxu0 %v1002
    %1344 = vmatpush1.bf16.msra.mxu0 %v1001
    %1345 = vmatprep.subr.bf16.mxu0 %v1006
    %1346 = vmatpush1.bf16.msra.mxu0 %v1005
    %1347 = vmatprep.subr.bf16.mxu0 %v1010
    %1348 = vmatpush1.bf16.msra.mxu0 %v1009
    %1349 = vmatprep.subr.bf16.mxu0 %v1014
    %1350 = vmatpush1.bf16.msra.mxu0 %v1013
    %1351 = vmatprep.subr.bf16.mxu0 %v1018
    %1352 = vmatpush1.bf16.msra.mxu0 %v1017
    %1353 = vmatprep.subr.bf16.mxu0 %v1022
    %1354 = vmatpush1.bf16.msra.mxu0 %v1021
    %1355 = vmatprep.subr.bf16.mxu0 %v1026
    %1356 = vmatpush1.bf16.msra.mxu0 %v1025
    %1357 = vmatprep.subr.bf16.mxu0 %v1030
    %1358 = vmatpush1.bf16.msra.mxu0 %v1029
    %1359 = vmatprep.subr.bf16.mxu0 %v1034
    %1360 = vmatpush1.bf16.msra.mxu0 %v1033
    %1361 = vmatprep.subr.bf16.mxu0 %v1038
    %1362 = vmatpush1.bf16.msra.mxu0 %v1037
    %1363 = vmatprep.subr.bf16.mxu0 %v1042
    %1364 = vmatpush1.bf16.msra.mxu0 %v1041
    %1365 = vmatprep.subr.bf16.mxu0 %v1046
    %1366 = vmatpush1.bf16.msra.mxu0 %v1045
    %1367 = vmatprep.mubr.bf16.mxu0 %v49
    %1368 = vmatmul.mubr.bf16.gmra.mrb[0].mxu0 %v48
    %v1369 = vpop.f32.mrb[0].mxu0
    %v1370 = vadd.f32 %v1329, %v1369
    %v1371 = vpop.f32.mrb[0].mxu0
    %v1372 = vadd.f32 %v1331, %v1371
    %v1373 = vpop.f32.mrb[0].mxu0
    %v1374 = vpop.f32.mrb[0].mxu0
    %1375 = vdwg.mxu0
    %1376 = vmatprep.subr.bf16.mxu0 %v1050
    %1377 = vmatpush1.bf16.msra.mxu0 %v1049
    %1378 = vmatprep.subr.bf16.mxu0 0
    %1379 = vmatpush1.bf16.msra.mxu0 0
    %1380 = vmatprep.subr.bf16.mxu0 0
    %1381 = vmatpush1.bf16.msra.mxu0 0
    %1382 = vmatprep.subr.bf16.mxu0 0
    %1383 = vmatpush1.bf16.msra.mxu0 0
    %1384 = vmatprep.subr.bf16.mxu0 0
    %1385 = vmatpush1.bf16.msra.mxu0 0
    %1386 = vmatprep.subr.bf16.mxu0 0
    %1387 = vmatpush1.bf16.msra.mxu0 0
    %1388 = vmatprep.subr.bf16.mxu0 0
    %1389 = vmatpush1.bf16.msra.mxu0 0
    %1390 = vmatprep.subr.bf16.mxu0 0
    %1391 = vmatpush1.bf16.msra.mxu0 0
    %1392 = vmatprep.subr.bf16.mxu0 0
    %1393 = vmatpush1.bf16.msra.mxu0 0
    %1394 = vmatprep.subr.bf16.mxu0 0
    %1395 = vmatpush1.bf16.msra.mxu0 0
    %1396 = vmatprep.subr.bf16.mxu0 0
    %1397 = vmatpush1.bf16.msra.mxu0 0
    %1398 = vmatprep.subr.bf16.mxu0 0
    %1399 = vmatpush1.bf16.msra.mxu0 0
    %1400 = vmatprep.subr.bf16.mxu0 0
    %1401 = vmatpush1.bf16.msra.mxu0 0
    %1402 = vmatprep.subr.bf16.mxu0 0
    %1403 = vmatpush1.bf16.msra.mxu0 0
    %1404 = vmatprep.subr.bf16.mxu0 0
    %1405 = vmatpush1.bf16.msra.mxu0 0
    %1406 = vmatprep.subr.bf16.mxu0 0
    %1407 = vmatpush1.bf16.msra.mxu0 0
    %1408 = vmatprep.mubr.bf16.mxu0 0
    %1409 = vmatmul.mubr.bf16.gmra.mrb[0].mxu0 %v1251
    %v1410 = vpop.f32.mrb[0].mxu0
    %v1411 = vadd.f32 %v1370, %v1410
    %v1412 = vpop.f32.mrb[0].mxu0
    %v1413 = vadd.f32 %v1372, %v1412
    %v1414 = vpop.f32.mrb[0].mxu0
    %v1415 = vpop.f32.mrb[0].mxu0
    %1416 = vdwg.mxu0
    %1417 = vmatprep.subr.bf16.mxu0 %v860
    %1418 = vmatpush1.bf16.msra.mxu0 %v859
    %1419 = vmatprep.subr.bf16.mxu0 %v864
    %1420 = vmatpush1.bf16.msra.mxu0 %v863
    %1421 = vmatprep.subr.bf16.mxu0 %v868
    %1422 = vmatpush1.bf16.msra.mxu0 %v867
    %1423 = vmatprep.subr.bf16.mxu0 %v872
    %1424 = vmatpush1.bf16.msra.mxu0 %v871
    %1425 = vmatprep.subr.bf16.mxu0 %v876
    %1426 = vmatpush1.bf16.msra.mxu0 %v875
    %1427 = vmatprep.subr.bf16.mxu0 %v880
    %1428 = vmatpush1.bf16.msra.mxu0 %v879
    %1429 = vmatprep.subr.bf16.mxu0 %v884
    %1430 = vmatpush1.bf16.msra.mxu0 %v883
    %1431 = vmatprep.subr.bf16.mxu0 %v888
    %1432 = vmatpush1.bf16.msra.mxu0 %v887
    %1433 = vmatprep.subr.bf16.mxu0 %v892
    %1434 = vmatpush1.bf16.msra.mxu0 %v891
    %1435 = vmatprep.subr.bf16.mxu0 %v896
    %1436 = vmatpush1.bf16.msra.mxu0 %v895
    %1437 = vmatprep.subr.bf16.mxu0 %v900
    %1438 = vmatpush1.bf16.msra.mxu0 %v899
    %1439 = vmatprep.subr.bf16.mxu0 %v904
    %1440 = vmatpush1.bf16.msra.mxu0 %v903
    %1441 = vmatprep.subr.bf16.mxu0 %v908
    %1442 = vmatpush1.bf16.msra.mxu0 %v907
    %1443 = vmatprep.subr.bf16.mxu0 %v912
    %1444 = vmatpush1.bf16.msra.mxu0 %v911
    %1445 = vmatprep.subr.bf16.mxu0 %v916
    %1446 = vmatpush1.bf16.msra.mxu0 %v915
    %1447 = vmatprep.subr.bf16.mxu0 %v920
    %1448 = vmatpush1.bf16.msra.mxu0 %v919
    %1449 = vmatprep.mubr.bf16.mxu0 %v45
    %1450 = vmatmul.mubr.bf16.gmra.mrb[0].mxu0 %v44
    %v1451 = vpop.f32.mrb[0].mxu0
    %v1452 = vadd.f32 %v260, %v1451
    %v1453 = vpop.f32.mrb[0].mxu0
    %v1454 = vadd.f32 %v264, %v1453
    %v1455 = vpop.f32.mrb[0].mxu0
    %v1456 = vpop.f32.mrb[0].mxu0
    %1457 = vdwg.mxu0
    %1458 = vmatprep.subr.bf16.mxu0 %v924
    %1459 = vmatpush1.bf16.msra.mxu0 %v923
    %1460 = vmatprep.subr.bf16.mxu0 %v928
    %1461 = vmatpush1.bf16.msra.mxu0 %v927
    %1462 = vmatprep.subr.bf16.mxu0 %v932
    %1463 = vmatpush1.bf16.msra.mxu0 %v931
    %1464 = vmatprep.subr.bf16.mxu0 %v936
    %1465 = vmatpush1.bf16.msra.mxu0 %v935
    %1466 = vmatprep.subr.bf16.mxu0 %v940
    %1467 = vmatpush1.bf16.msra.mxu0 %v939
    %1468 = vmatprep.subr.bf16.mxu0 %v944
    %1469 = vmatpush1.bf16.msra.mxu0 %v943
    %1470 = vmatprep.subr.bf16.mxu0 %v948
    %1471 = vmatpush1.bf16.msra.mxu0 %v947
    %1472 = vmatprep.subr.bf16.mxu0 %v952
    %1473 = vmatpush1.bf16.msra.mxu0 %v951
    %1474 = vmatprep.subr.bf16.mxu0 %v956
    %1475 = vmatpush1.bf16.msra.mxu0 %v955
    %1476 = vmatprep.subr.bf16.mxu0 %v960
    %1477 = vmatpush1.bf16.msra.mxu0 %v959
    %1478 = vmatprep.subr.bf16.mxu0 %v964
    %1479 = vmatpush1.bf16.msra.mxu0 %v963
    %1480 = vmatprep.subr.bf16.mxu0 %v968
    %1481 = vmatpush1.bf16.msra.mxu0 %v967
    %1482 = vmatprep.subr.bf16.mxu0 %v972
    %1483 = vmatpush1.bf16.msra.mxu0 %v971
    %1484 = vmatprep.subr.bf16.mxu0 %v976
    %1485 = vmatpush1.bf16.msra.mxu0 %v975
    %1486 = vmatprep.subr.bf16.mxu0 %v980
    %1487 = vmatpush1.bf16.msra.mxu0 %v979
    %1488 = vmatprep.subr.bf16.mxu0 %v984
    %1489 = vmatpush1.bf16.msra.mxu0 %v983
    %1490 = vmatprep.mubr.bf16.mxu0 %v47
    %1491 = vmatmul.mubr.bf16.gmra.mrb[0].mxu0 %v46
    %v1492 = vpop.f32.mrb[0].mxu0
    %v1493 = vadd.f32 %v1452, %v1492
    %v1494 = vpop.f32.mrb[0].mxu0
    %v1495 = vadd.f32 %v1454, %v1494
    %v1496 = vpop.f32.mrb[0].mxu0
    %v1497 = vpop.f32.mrb[0].mxu0
    %1498 = vdwg.mxu0
    %1499 = vmatprep.subr.bf16.mxu0 %v988
    %1500 = vmatpush1.bf16.msra.mxu0 %v987
    %1501 = vmatprep.subr.bf16.mxu0 %v992
    %1502 = vmatpush1.bf16.msra.mxu0 %v991
    %1503 = vmatprep.subr.bf16.mxu0 %v996
    %1504 = vmatpush1.bf16.msra.mxu0 %v995
    %1505 = vmatprep.subr.bf16.mxu0 %v1000
    %1506 = vmatpush1.bf16.msra.mxu0 %v999
    %1507 = vmatprep.subr.bf16.mxu0 %v1004
    %1508 = vmatpush1.bf16.msra.mxu0 %v1003
    %1509 = vmatprep.subr.bf16.mxu0 %v1008
    %1510 = vmatpush1.bf16.msra.mxu0 %v1007
    %1511 = vmatprep.subr.bf16.mxu0 %v1012
    %1512 = vmatpush1.bf16.msra.mxu0 %v1011
    %1513 = vmatprep.subr.bf16.mxu0 %v1016
    %1514 = vmatpush1.bf16.msra.mxu0 %v1015
    %1515 = vmatprep.subr.bf16.mxu0 %v1020
    %1516 = vmatpush1.bf16.msra.mxu0 %v1019
    %1517 = vmatprep.subr.bf16.mxu0 %v1024
    %1518 = vmatpush1.bf16.msra.mxu0 %v1023
    %1519 = vmatprep.subr.bf16.mxu0 %v1028
    %1520 = vmatpush1.bf16.msra.mxu0 %v1027
    %1521 = vmatprep.subr.bf16.mxu0 %v1032
    %1522 = vmatpush1.bf16.msra.mxu0 %v1031
    %1523 = vmatprep.subr.bf16.mxu0 %v1036
    %1524 = vmatpush1.bf16.msra.mxu0 %v1035
    %1525 = vmatprep.subr.bf16.mxu0 %v1040
    %1526 = vmatpush1.bf16.msra.mxu0 %v1039
    %1527 = vmatprep.subr.bf16.mxu0 %v1044
    %1528 = vmatpush1.bf16.msra.mxu0 %v1043
    %1529 = vmatprep.subr.bf16.mxu0 %v1048
    %1530 = vmatpush1.bf16.msra.mxu0 %v1047
    %1531 = vmatprep.mubr.bf16.mxu0 %v49
    %1532 = vmatmul.mubr.bf16.gmra.mrb[0].mxu0 %v48
    %v1533 = vpop.f32.mrb[0].mxu0
    %v1534 = vadd.f32 %v1493, %v1533
    %v1535 = vpop.f32.mrb[0].mxu0
    %v1536 = vadd.f32 %v1495, %v1535
    %v1537 = vpop.f32.mrb[0].mxu0
    %v1538 = vpop.f32.mrb[0].mxu0
    %1539 = vdwg.mxu0
    %1540 = vmatprep.subr.bf16.mxu0 %v1052
    %1541 = vmatpush1.bf16.msra.mxu0 %v1051
    %1542 = vmatprep.subr.bf16.mxu0 0
    %1543 = vmatpush1.bf16.msra.mxu0 0
    %1544 = vmatprep.subr.bf16.mxu0 0
    %1545 = vmatpush1.bf16.msra.mxu0 0
    %1546 = vmatprep.subr.bf16.mxu0 0
    %1547 = vmatpush1.bf16.msra.mxu0 0
    %1548 = vmatprep.subr.bf16.mxu0 0
    %1549 = vmatpush1.bf16.msra.mxu0 0
    %1550 = vmatprep.subr.bf16.mxu0 0
    %1551 = vmatpush1.bf16.msra.mxu0 0
    %1552 = vmatprep.subr.bf16.mxu0 0
    %1553 = vmatpush1.bf16.msra.mxu0 0
    %1554 = vmatprep.subr.bf16.mxu0 0
    %1555 = vmatpush1.bf16.msra.mxu0 0
    %1556 = vmatprep.subr.bf16.mxu0 0
    %1557 = vmatpush1.bf16.msra.mxu0 0
    %1558 = vmatprep.subr.bf16.mxu0 0
    %1559 = vmatpush1.bf16.msra.mxu0 0
    %1560 = vmatprep.subr.bf16.mxu0 0
    %1561 = vmatpush1.bf16.msra.mxu0 0
    %1562 = vmatprep.subr.bf16.mxu0 0
    %1563 = vmatpush1.bf16.msra.mxu0 0
    %1564 = vmatprep.subr.bf16.mxu0 0
    %1565 = vmatpush1.bf16.msra.mxu0 0
    %1566 = vmatprep.subr.bf16.mxu0 0
    %1567 = vmatpush1.bf16.msra.mxu0 0
    %1568 = vmatprep.subr.bf16.mxu0 0
    %1569 = vmatpush1.bf16.msra.mxu0 0
    %1570 = vmatprep.subr.bf16.mxu0 0
    %1571 = vmatpush1.bf16.msra.mxu0 0
    %1572 = vmatprep.mubr.bf16.mxu0 0
    %1573 = vmatmul.mubr.bf16.gmra.mrb[0].mxu0 %v1251
    %v1574 = vpop.f32.mrb[0].mxu0
    %v1575 = vadd.f32 %v1534, %v1574
    %v1576 = vpop.f32.mrb[0].mxu0
    %v1577 = vadd.f32 %v1536, %v1576
    %v1578 = vpop.f32.mrb[0].mxu0
    %v1579 = vpop.f32.mrb[0].mxu0
    %1580 = vdwg.mxu0
    %v1581 = vmax.f32 %v1411, 0.0
    %v1582 = vmax.f32 %v1413, 0.0
    %v1583 = vmax.f32 %v1575, 0.0
    %v1584 = vmax.f32 %v1577, 0.0
    %v1585 = vpack.c.bf16 %v1581, %v1581
    %v1586 = vpack.c.bf16 %v1582, %v1582
    %v1587 = vpack.c.bf16 %v1583, %v1583
    %v1588 = vpack.c.bf16 %v1584, %v1584
    %v1589 = vld [vmem:[%s4] sm:$0xf]
    %v1590 = vld [vmem:[%s4 + $0x4] sm:$0xf]
    %v1591 = vld [vmem:[%s4 + $0x8] sm:$0xf]
    %v1592 = vld [vmem:[%s4 + $0xc] sm:$0xf]
    %v1593 = vld [vmem:[%s4 + $0x10] sm:$0xf]
    %v1594 = vld [vmem:[%s4 + $0x14] sm:$0xf]
    %v1595 = vld [vmem:[%s4 + $0x18] sm:$0xf]
    %v1596 = vld [vmem:[%s4 + $0x1c] sm:$0xf]
    %v1597 = vld [vmem:[%s4 + $0x20] sm:$0xf]
    %v1598 = vld [vmem:[%s4 + $0x24] sm:$0xf]
    %v1599 = vld [vmem:[%s4 + $0x28] sm:$0xf]
    %v1600 = vld [vmem:[%s4 + $0x2c] sm:$0xf]
    %v1601 = vld [vmem:[%s4 + $0x30] sm:$0xf]
    %v1602 = vld [vmem:[%s4 + $0x34] sm:$0xf]
    %v1603 = vld [vmem:[%s4 + $0x38] sm:$0xf]
    %v1604 = vld [vmem:[%s4 + $0x3c] sm:$0xf]
    %v1605 = vld [vmem:[%s4 + $0x40] sm:$0xf]
    %v1606 = vld [vmem:[%s4 + $0x44] sm:$0xf]
    %v1607 = vld [vmem:[%s4 + $0x48] sm:$0xf]
    %v1608 = vld [vmem:[%s4 + $0x4c] sm:$0xf]
    %v1609 = vld [vmem:[%s4 + $0x50] sm:$0xf]
    %v1610 = vld [vmem:[%s4 + $0x54] sm:$0xf]
    %v1611 = vld [vmem:[%s4 + $0x58] sm:$0xf]
    %v1612 = vld [vmem:[%s4 + $0x5c] sm:$0xf]
    %v1613 = vld [vmem:[%s4 + $0x60] sm:$0xf]
    %v1614 = vld [vmem:[%s4 + $0x64] sm:$0xf]
    %v1615 = vld [vmem:[%s4 + $0x68] sm:$0xf]
    %v1616 = vld [vmem:[%s4 + $0x6c] sm:$0xf]
    %v1617 = vld [vmem:[%s4 + $0x70] sm:$0xf]
    %v1618 = vld [vmem:[%s4 + $0x74] sm:$0xf]
    %v1619 = vld [vmem:[%s4 + $0x78] sm:$0xf]
    %v1620 = vld [vmem:[%s4 + $0x7c] sm:$0xf]
    %v1621 = vld [vmem:[%s4 + $0x80] sm:$0xf]
    %v1622 = vld [vmem:[%s4 + $0x84] sm:$0xf]
    %v1623 = vld [vmem:[%s4 + $0x88] sm:$0xf]
    %v1624 = vld [vmem:[%s4 + $0x8c] sm:$0xf]
    %v1625 = vld [vmem:[%s4 + $0x90] sm:$0xf]
    %v1626 = vld [vmem:[%s4 + $0x94] sm:$0xf]
    %v1627 = vld [vmem:[%s4 + $0x98] sm:$0xf]
    %v1628 = vld [vmem:[%s4 + $0x9c] sm:$0xf]
    %v1629 = vld [vmem:[%s4 + $0xa0] sm:$0xf]
    %v1630 = vld [vmem:[%s4 + $0xa4] sm:$0xf]
    %v1631 = vld [vmem:[%s4 + $0xa8] sm:$0xf]
    %v1632 = vld [vmem:[%s4 + $0xac] sm:$0xf]
    %v1633 = vld [vmem:[%s4 + $0xb0] sm:$0xf]
    %v1634 = vld [vmem:[%s4 + $0xb4] sm:$0xf]
    %v1635 = vld [vmem:[%s4 + $0xb8] sm:$0xf]
    %v1636 = vld [vmem:[%s4 + $0xbc] sm:$0xf]
    %v1637 = vld [vmem:[%s4 + $0xc0] sm:$0xf]
    %v1638 = vld [vmem:[%s4 + $0xc4] sm:$0xf]
    %v1639 = vld [vmem:[%s4 + $0xc8] sm:$0xf]
    %v1640 = vld [vmem:[%s4 + $0xcc] sm:$0xf]
    %v1641 = vld [vmem:[%s4 + $0xd0] sm:$0xf]
    %v1642 = vld [vmem:[%s4 + $0xd4] sm:$0xf]
    %v1643 = vld [vmem:[%s4 + $0xd8] sm:$0xf]
    %v1644 = vld [vmem:[%s4 + $0xdc] sm:$0xf]
    %v1645 = vld [vmem:[%s4 + $0xe0] sm:$0xf]
    %v1646 = vld [vmem:[%s4 + $0xe4] sm:$0xf]
    %v1647 = vld [vmem:[%s4 + $0xe8] sm:$0xf]
    %v1648 = vld [vmem:[%s4 + $0xec] sm:$0xf]
    %v1649 = vld [vmem:[%s4 + $0xf0] sm:$0xf]
    %v1650 = vld [vmem:[%s4 + $0xf4] sm:$0xf]
    %v1651 = vld [vmem:[%s4 + $0xf8] sm:$0xf]
    %v1652 = vld [vmem:[%s4 + $0xfc] sm:$0xf]
    %v1653 = vld [vmem:[%s5] sm:$0x1]
    %v1655 = vlaneseq
    %v1656 = vshrl.u32 %v1655, 7
    %v1657 = vsub.s32 0, %v1656
    %v1658 = vrot.slane %v1653, %v1657
    %v1724 = vunpack.c.l.b16 %v1589
    %v1725 = vunpack.c.l.b16 %v1590
    %v1726 = vunpack.c.l.b16 %v1591
    %v1727 = vunpack.c.l.b16 %v1592
    %v1728 = vunpack.c.l.b16 %v1593
    %v1729 = vunpack.c.l.b16 %v1594
    %v1730 = vunpack.c.l.b16 %v1595
    %v1731 = vunpack.c.l.b16 %v1596
    %v1732 = vunpack.c.l.b16 %v1597
    %v1733 = vunpack.c.l.b16 %v1598
    %v1734 = vunpack.c.l.b16 %v1599
    %v1735 = vunpack.c.l.b16 %v1600
    %v1736 = vunpack.c.l.b16 %v1601
    %v1737 = vunpack.c.l.b16 %v1602
    %v1738 = vunpack.c.l.b16 %v1603
    %v1739 = vunpack.c.l.b16 %v1604
    %v1740 = vunpack.c.l.b16 %v1605
    %v1741 = vunpack.c.l.b16 %v1606
    %v1742 = vunpack.c.l.b16 %v1607
    %v1743 = vunpack.c.l.b16 %v1608
    %v1744 = vunpack.c.l.b16 %v1609
    %v1745 = vunpack.c.l.b16 %v1610
    %v1746 = vunpack.c.l.b16 %v1611
    %v1747 = vunpack.c.l.b16 %v1612
    %v1748 = vunpack.c.l.b16 %v1613
    %v1749 = vunpack.c.l.b16 %v1614
    %v1750 = vunpack.c.l.b16 %v1615
    %v1751 = vunpack.c.l.b16 %v1616
    %v1752 = vunpack.c.l.b16 %v1617
    %v1753 = vunpack.c.l.b16 %v1618
    %v1754 = vunpack.c.l.b16 %v1619
    %v1755 = vunpack.c.l.b16 %v1620
    %v1756 = vunpack.c.l.b16 %v1621
    %v1757 = vunpack.c.l.b16 %v1622
    %v1758 = vunpack.c.l.b16 %v1623
    %v1759 = vunpack.c.l.b16 %v1624
    %v1760 = vunpack.c.l.b16 %v1625
    %v1761 = vunpack.c.l.b16 %v1626
    %v1762 = vunpack.c.l.b16 %v1627
    %v1763 = vunpack.c.l.b16 %v1628
    %v1764 = vunpack.c.l.b16 %v1629
    %v1765 = vunpack.c.l.b16 %v1630
    %v1766 = vunpack.c.l.b16 %v1631
    %v1767 = vunpack.c.l.b16 %v1632
    %v1768 = vunpack.c.l.b16 %v1633
    %v1769 = vunpack.c.l.b16 %v1634
    %v1770 = vunpack.c.l.b16 %v1635
    %v1771 = vunpack.c.l.b16 %v1636
    %v1772 = vunpack.c.l.b16 %v1637
    %v1773 = vunpack.c.l.b16 %v1638
    %v1774 = vunpack.c.l.b16 %v1639
    %v1775 = vunpack.c.l.b16 %v1640
    %v1776 = vunpack.c.l.b16 %v1641
    %v1777 = vunpack.c.l.b16 %v1642
    %v1778 = vunpack.c.l.b16 %v1643
    %v1779 = vunpack.c.l.b16 %v1644
    %v1780 = vunpack.c.l.b16 %v1645
    %v1781 = vunpack.c.l.b16 %v1646
    %v1782 = vunpack.c.l.b16 %v1647
    %v1783 = vunpack.c.l.b16 %v1648
    %v1784 = vunpack.c.l.b16 %v1649
    %v1785 = vunpack.c.l.b16 %v1650
    %v1786 = vunpack.c.l.b16 %v1651
    %v1787 = vunpack.c.l.b16 %v1652
    %v1788 = vpack.c.b16 %v1725, %v1724
    %v1789 = vpack.c.b16 %v1727, %v1726
    %v1790 = vpack.c.b16 %v1729, %v1728
    %v1791 = vpack.c.b16 %v1731, %v1730
    %v1792 = vpack.c.b16 %v1733, %v1732
    %v1793 = vpack.c.b16 %v1735, %v1734
    %v1794 = vpack.c.b16 %v1737, %v1736
    %v1795 = vpack.c.b16 %v1739, %v1738
    %v1796 = vpack.c.b16 %v1741, %v1740
    %v1797 = vpack.c.b16 %v1743, %v1742
    %v1798 = vpack.c.b16 %v1745, %v1744
    %v1799 = vpack.c.b16 %v1747, %v1746
    %v1800 = vpack.c.b16 %v1749, %v1748
    %v1801 = vpack.c.b16 %v1751, %v1750
    %v1802 = vpack.c.b16 %v1753, %v1752
    %v1803 = vpack.c.b16 %v1755, %v1754
    %v1804 = vpack.c.b16 %v1757, %v1756
    %v1805 = vpack.c.b16 %v1759, %v1758
    %v1806 = vpack.c.b16 %v1761, %v1760
    %v1807 = vpack.c.b16 %v1763, %v1762
    %v1808 = vpack.c.b16 %v1765, %v1764
    %v1809 = vpack.c.b16 %v1767, %v1766
    %v1810 = vpack.c.b16 %v1769, %v1768
    %v1811 = vpack.c.b16 %v1771, %v1770
    %v1812 = vpack.c.b16 %v1773, %v1772
    %v1813 = vpack.c.b16 %v1775, %v1774
    %v1814 = vpack.c.b16 %v1777, %v1776
    %v1815 = vpack.c.b16 %v1779, %v1778
    %v1816 = vpack.c.b16 %v1781, %v1780
    %v1817 = vpack.c.b16 %v1783, %v1782
    %v1818 = vpack.c.b16 %v1785, %v1784
    %v1819 = vpack.c.b16 %v1787, %v1786
    %1852 = vmatprep.subr.bf16.mxu0 0
    %1853 = vmatpush1.bf16.msra.mxu0 %v1788
    %1854 = vmatprep.subr.bf16.mxu0 0
    %1855 = vmatpush1.bf16.msra.mxu0 %v1789
    %1856 = vmatprep.subr.bf16.mxu0 0
    %1857 = vmatpush1.bf16.msra.mxu0 %v1790
    %1858 = vmatprep.subr.bf16.mxu0 0
    %1859 = vmatpush1.bf16.msra.mxu0 %v1791
    %1860 = vmatprep.subr.bf16.mxu0 0
    %1861 = vmatpush1.bf16.msra.mxu0 %v1792
    %1862 = vmatprep.subr.bf16.mxu0 0
    %1863 = vmatpush1.bf16.msra.mxu0 %v1793
    %1864 = vmatprep.subr.bf16.mxu0 0
    %1865 = vmatpush1.bf16.msra.mxu0 %v1794
    %1866 = vmatprep.subr.bf16.mxu0 0
    %1867 = vmatpush1.bf16.msra.mxu0 %v1795
    %1868 = vmatprep.subr.bf16.mxu0 0
    %1869 = vmatpush1.bf16.msra.mxu0 %v1796
    %1870 = vmatprep.subr.bf16.mxu0 0
    %1871 = vmatpush1.bf16.msra.mxu0 %v1797
    %1872 = vmatprep.subr.bf16.mxu0 0
    %1873 = vmatpush1.bf16.msra.mxu0 %v1798
    %1874 = vmatprep.subr.bf16.mxu0 0
    %1875 = vmatpush1.bf16.msra.mxu0 %v1799
    %1876 = vmatprep.subr.bf16.mxu0 0
    %1877 = vmatpush1.bf16.msra.mxu0 %v1800
    %1878 = vmatprep.subr.bf16.mxu0 0
    %1879 = vmatpush1.bf16.msra.mxu0 %v1801
    %1880 = vmatprep.subr.bf16.mxu0 0
    %1881 = vmatpush1.bf16.msra.mxu0 %v1802
    %1882 = vmatprep.subr.bf16.mxu0 0
    %1883 = vmatpush1.bf16.msra.mxu0 %v1803
    %1884 = vmatprep.mubr.bf16.mxu0 %v1586
    %1885 = vmatmul.mubr.bf16.gmra.mrb[0].mxu0 %v1585
    %v1886 = vpop.f32.mrb[0].mxu0
    %v1887 = vadd.f32 %v1658, %v1886
    %v1888 = vpop.f32.mrb[0].mxu0
    %v1889 = vpop.f32.mrb[0].mxu0
    %v1890 = vpop.f32.mrb[0].mxu0
    %1891 = vdwg.mxu0
    %1892 = vmatprep.subr.bf16.mxu0 0
    %1893 = vmatpush1.bf16.msra.mxu0 %v1804
    %1894 = vmatprep.subr.bf16.mxu0 0
    %1895 = vmatpush1.bf16.msra.mxu0 %v1805
    %1896 = vmatprep.subr.bf16.mxu0 0
    %1897 = vmatpush1.bf16.msra.mxu0 %v1806
    %1898 = vmatprep.subr.bf16.mxu0 0
    %1899 = vmatpush1.bf16.msra.mxu0 %v1807
    %1900 = vmatprep.subr.bf16.mxu0 0
    %1901 = vmatpush1.bf16.msra.mxu0 %v1808
    %1902 = vmatprep.subr.bf16.mxu0 0
    %1903 = vmatpush1.bf16.msra.mxu0 %v1809
    %1904 = vmatprep.subr.bf16.mxu0 0
    %1905 = vmatpush1.bf16.msra.mxu0 %v1810
    %1906 = vmatprep.subr.bf16.mxu0 0
    %1907 = vmatpush1.bf16.msra.mxu0 %v1811
    %1908 = vmatprep.subr.bf16.mxu0 0
    %1909 = vmatpush1.bf16.msra.mxu0 %v1812
    %1910 = vmatprep.subr.bf16.mxu0 0
    %1911 = vmatpush1.bf16.msra.mxu0 %v1813
    %1912 = vmatprep.subr.bf16.mxu0 0
    %1913 = vmatpush1.bf16.msra.mxu0 %v1814
    %1914 = vmatprep.subr.bf16.mxu0 0
    %1915 = vmatpush1.bf16.msra.mxu0 %v1815
    %1916 = vmatprep.subr.bf16.mxu0 0
    %1917 = vmatpush1.bf16.msra.mxu0 %v1816
    %1918 = vmatprep.subr.bf16.mxu0 0
    %1919 = vmatpush1.bf16.msra.mxu0 %v1817
    %1920 = vmatprep.subr.bf16.mxu0 0
    %1921 = vmatpush1.bf16.msra.mxu0 %v1818
    %1922 = vmatprep.subr.bf16.mxu0 0
    %1923 = vmatpush1.bf16.msra.mxu0 %v1819
    %1924 = vmatprep.mubr.bf16.mxu0 %v1588
    %1925 = vmatmul.mubr.bf16.gmra.mrb[0].mxu0 %v1587
    %v1926 = vpop.f32.mrb[0].mxu0
    %v1927 = vadd.f32 %v1887, %v1926
    %v1928 = vpop.f32.mrb[0].mxu0
    %v1929 = vpop.f32.mrb[0].mxu0
    %v1930 = vpop.f32.mrb[0].mxu0
    %1931 = vdwg.mxu0
    %v1932 = vld [vmem:[%s1] sm:$0xff]
    %v1933 = vadd.f32 %v1932, 1.0
    %v1934 = vmul.f32 %v1927, %v1933
    %v1935 = vpack.c.bf16 %v1934, %v1934
    %v1936 = vld [vmem:[%s6] sm:$0xff]
    %v1937 = vld [vmem:[%s6 + $0x8] sm:$0xff]
    %v1938 = vld [vmem:[%s6 + $0x10] sm:$0xff]
    %v1939 = vld [vmem:[%s6 + $0x18] sm:$0xff]
    %v1940 = vld [vmem:[%s6 + $0x20] sm:$0xff]
    %v1941 = vld [vmem:[%s6 + $0x28] sm:$0xff]
    %v1942 = vld [vmem:[%s6 + $0x30] sm:$0xff]
    %v1943 = vld [vmem:[%s6 + $0x38] sm:$0xff]
    %v1944 = vld [vmem:[%s6 + $0x40] sm:$0xff]
    %v1945 = vld [vmem:[%s6 + $0x48] sm:$0xff]
    %v1946 = vld [vmem:[%s6 + $0x50] sm:$0xff]
    %v1947 = vld [vmem:[%s6 + $0x58] sm:$0xff]
    %v1948 = vld [vmem:[%s6 + $0x60] sm:$0x11]
    %v1949 = vld [vmem:[%s6 + $0x68] sm:$0x11]
    %v1950 = vld [vmem:[%s7] sm:$0xf]
    %v1952 = vlaneseq
    %v1953 = vshrl.u32 %v1952, 7
    %v1954 = vsub.s32 0, %v1953
    %v1955 = vrot.slane %v1950, %v1954
    %v1956 = vlaneseq
    %v1957 = vshrl.u32 %v1956, 7
    %v1958 = vsub.s32 1, %v1957
    %v1959 = vrot.slane %v1950, %v1958
    %v1960 = vlaneseq
    %v1961 = vshrl.u32 %v1960, 7
    %v1962 = vsub.s32 2, %v1961
    %v1963 = vrot.slane %v1950, %v1962
    %v1964 = vlaneseq
    %v1965 = vshrl.u32 %v1964, 7
    %v1966 = vsub.s32 3, %v1965
    %v1967 = vrot.slane %v1950, %v1966
    %v1986 = vunpack.c.l.b16 %v1936
    %v1987 = vunpack.c.h.b16 %v1936
    %v1988 = vunpack.c.l.b16 %v1937
    %v1989 = vunpack.c.h.b16 %v1937
    %v1990 = vunpack.c.l.b16 %v1938
    %v1991 = vunpack.c.h.b16 %v1938
    %v1992 = vunpack.c.l.b16 %v1939
    %v1993 = vunpack.c.h.b16 %v1939
    %v1994 = vunpack.c.l.b16 %v1940
    %v1995 = vunpack.c.h.b16 %v1940
    %v1996 = vunpack.c.l.b16 %v1941
    %v1997 = vunpack.c.h.b16 %v1941
    %v1998 = vunpack.c.l.b16 %v1942
    %v1999 = vunpack.c.h.b16 %v1942
    %v2000 = vunpack.c.l.b16 %v1943
    %v2001 = vunpack.c.h.b16 %v1943
    %v2002 = vunpack.c.l.b16 %v1944
    %v2003 = vunpack.c.h.b16 %v1944
    %v2004 = vunpack.c.l.b16 %v1945
    %v2005 = vunpack.c.h.b16 %v1945
    %v2006 = vunpack.c.l.b16 %v1946
    %v2007 = vunpack.c.h.b16 %v1946
    %v2008 = vunpack.c.l.b16 %v1947
    %v2009 = vunpack.c.h.b16 %v1947
    %v2010 = vunpack.c.l.b16 %v1948
    %v2011 = vunpack.c.h.b16 %v1948
    %v2012 = vunpack.c.l.b16 %v1949
    %v2013 = vunpack.c.h.b16 %v1949
    %v2014 = vpack.c.b16 %v1990, %v1986
    %v2015 = vpack.c.b16 %v1991, %v1987
    %v2016 = vpack.c.b16 %v1992, %v1988
    %v2017 = vpack.c.b16 %v1993, %v1989
    %v2018 = vpack.c.b16 %v1998, %v1994
    %v2019 = vpack.c.b16 %v1999, %v1995
    %v2020 = vpack.c.b16 %v2000, %v1996
    %v2021 = vpack.c.b16 %v2001, %v1997
    %v2022 = vpack.c.b16 %v2006, %v2002
    %v2023 = vpack.c.b16 %v2007, %v2003
    %v2024 = vpack.c.b16 %v2008, %v2004
    %v2025 = vpack.c.b16 %v2009, %v2005
    %v2026 = vpack.c.b16 %v2010, %v2010
    %v2027 = vpack.c.b16 %v2011, %v2011
    %v2028 = vpack.c.b16 %v2012, %v2012
    %v2029 = vpack.c.b16 %v2013, %v2013
    %vm2042 = vcmask 408576
    %v2044 = vsel %vm2042, %v1935, 0
    %vm2046 = vcmask 1040384
    %v2048 = vsel %vm2046, %v2026, 0
    %v2051 = vsel %vm2046, %v2027, 0
    %v2054 = vsel %vm2046, %v2028, 0
    %v2057 = vsel %vm2046, %v2029, 0
    %2059 = vmatprep.subr.bf16.mxu0 %v2015
    %2060 = vmatpush1.bf16.msra.mxu0 %v2014
    %2061 = vmatprep.subr.bf16.mxu0 %v2019
    %2062 = vmatpush1.bf16.msra.mxu0 %v2018
    %2063 = vmatprep.subr.bf16.mxu0 %v2023
    %2064 = vmatpush1.bf16.msra.mxu0 %v2022
    %2065 = vmatprep.subr.bf16.mxu0 %v2051
    %2066 = vmatpush1.bf16.msra.mxu0 %v2048
    %2067 = vmatprep.subr.bf16.mxu0 0
    %2068 = vmatpush1.bf16.msra.mxu0 0
    %2069 = vmatprep.subr.bf16.mxu0 0
    %2070 = vmatpush1.bf16.msra.mxu0 0
    %2071 = vmatprep.subr.bf16.mxu0 0
    %2072 = vmatpush1.bf16.msra.mxu0 0
    %2073 = vmatprep.subr.bf16.mxu0 0
    %2074 = vmatpush1.bf16.msra.mxu0 0
    %2075 = vmatprep.subr.bf16.mxu0 0
    %2076 = vmatpush1.bf16.msra.mxu0 0
    %2077 = vmatprep.subr.bf16.mxu0 0
    %2078 = vmatpush1.bf16.msra.mxu0 0
    %2079 = vmatprep.subr.bf16.mxu0 0
    %2080 = vmatpush1.bf16.msra.mxu0 0
    %2081 = vmatprep.subr.bf16.mxu0 0
    %2082 = vmatpush1.bf16.msra.mxu0 0
    %2083 = vmatprep.subr.bf16.mxu0 0
    %2084 = vmatpush1.bf16.msra.mxu0 0
    %2085 = vmatprep.subr.bf16.mxu0 0
    %2086 = vmatpush1.bf16.msra.mxu0 0
    %2087 = vmatprep.subr.bf16.mxu0 0
    %2088 = vmatpush1.bf16.msra.mxu0 0
    %2089 = vmatprep.subr.bf16.mxu0 0
    %2090 = vmatpush1.bf16.msra.mxu0 0
    %2091 = vmatprep.mubr.bf16.mxu0 0
    %2092 = vmatmul.mubr.bf16.gmra.mrb[0].mxu0 %v2044
    %v2093 = vpop.f32.mrb[0].mxu0
    %v2094 = vadd.f32 %v1955, %v2093
    %v2095 = vpop.f32.mrb[0].mxu0
    %v2096 = vadd.f32 %v1959, %v2095
    %v2097 = vpop.f32.mrb[0].mxu0
    %v2098 = vpop.f32.mrb[0].mxu0
    %2099 = vdwg.mxu0
    %2100 = vmatprep.subr.bf16.mxu0 %v2017
    %2101 = vmatpush1.bf16.msra.mxu0 %v2016
    %2102 = vmatprep.subr.bf16.mxu0 %v2021
    %2103 = vmatpush1.bf16.msra.mxu0 %v2020
    %2104 = vmatprep.subr.bf16.mxu0 %v2025
    %2105 = vmatpush1.bf16.msra.mxu0 %v2024
    %2106 = vmatprep.subr.bf16.mxu0 %v2057
    %2107 = vmatpush1.bf16.msra.mxu0 %v2054
    %2108 = vmatprep.subr.bf16.mxu0 0
    %2109 = vmatpush1.bf16.msra.mxu0 0
    %2110 = vmatprep.subr.bf16.mxu0 0
    %2111 = vmatpush1.bf16.msra.mxu0 0
    %2112 = vmatprep.subr.bf16.mxu0 0
    %2113 = vmatpush1.bf16.msra.mxu0 0
    %2114 = vmatprep.subr.bf16.mxu0 0
    %2115 = vmatpush1.bf16.msra.mxu0 0
    %2116 = vmatprep.subr.bf16.mxu0 0
    %2117 = vmatpush1.bf16.msra.mxu0 0
    %2118 = vmatprep.subr.bf16.mxu0 0
    %2119 = vmatpush1.bf16.msra.mxu0 0
    %2120 = vmatprep.subr.bf16.mxu0 0
    %2121 = vmatpush1.bf16.msra.mxu0 0
    %2122 = vmatprep.subr.bf16.mxu0 0
    %2123 = vmatpush1.bf16.msra.mxu0 0
    %2124 = vmatprep.subr.bf16.mxu0 0
    %2125 = vmatpush1.bf16.msra.mxu0 0
    %2126 = vmatprep.subr.bf16.mxu0 0
    %2127 = vmatpush1.bf16.msra.mxu0 0
    %2128 = vmatprep.subr.bf16.mxu0 0
    %2129 = vmatpush1.bf16.msra.mxu0 0
    %2130 = vmatprep.subr.bf16.mxu0 0
    %2131 = vmatpush1.bf16.msra.mxu0 0
    %2132 = vmatprep.mubr.bf16.mxu0 0
    %2133 = vmatmul.mubr.bf16.gmra.mrb[0].mxu0 %v2044
    %v2134 = vpop.f32.mrb[0].mxu0
    %v2135 = vadd.f32 %v1963, %v2134
    %v2136 = vpop.f32.mrb[0].mxu0
    %v2137 = vadd.f32 %v1967, %v2136
    %v2138 = vpop.f32.mrb[0].mxu0
    %v2139 = vpop.f32.mrb[0].mxu0
    %2140 = vdwg.mxu0
    %v2141 = vmax.f32 %v2094, 0.0
    %v2142 = vmax.f32 %v2096, 0.0
    %v2143 = vmax.f32 %v2135, 0.0
    %v2144 = vmax.f32 %v2137, 0.0
    %v2145 = vpack.c.bf16 %v2141, %v2141
    %v2146 = vpack.c.bf16 %v2142, %v2142
    %v2147 = vpack.c.bf16 %v2143, %v2143
    %v2148 = vpack.c.bf16 %v2144, %v2144
    %v2149 = vld [vmem:[%s8] sm:$0xff]
    %v2150 = vld [vmem:[%s8 + $0x8] sm:$0xff]
    %v2151 = vld [vmem:[%s8 + $0x10] sm:$0xff]
    %v2152 = vld [vmem:[%s8 + $0x18] sm:$0xf]
    %v2153 = vld [vmem:[%s8 + $0x1c] sm:$0xff]
    %v2154 = vld [vmem:[%s8 + $0x24] sm:$0xff]
    %v2155 = vld [vmem:[%s8 + $0x2c] sm:$0xff]
    %v2156 = vld [vmem:[%s8 + $0x34] sm:$0xf]
    %v2157 = vld [vmem:[%s8 + $0x38] sm:$0xff]
    %v2158 = vld [vmem:[%s8 + $0x40] sm:$0xff]
    %v2159 = vld [vmem:[%s8 + $0x48] sm:$0xff]
    %v2160 = vld [vmem:[%s8 + $0x50] sm:$0xf]
    %v2161 = vld [vmem:[%s8 + $0x54] sm:$0xff]
    %v2162 = vld [vmem:[%s8 + $0x5c] sm:$0xff]
    %v2163 = vld [vmem:[%s8 + $0x64] sm:$0xff]
    %v2164 = vld [vmem:[%s8 + $0x6c] sm:$0xf]
    %v2165 = vld [vmem:[%s8 + $0x70] sm:$0xff]
    %v2166 = vld [vmem:[%s8 + $0x78] sm:$0xff]
    %v2167 = vld [vmem:[%s8 + $0x80] sm:$0xff]
    %v2168 = vld [vmem:[%s8 + $0x88] sm:$0xf]
    %v2169 = vld [vmem:[%s8 + $0x8c] sm:$0xff]
    %v2170 = vld [vmem:[%s8 + $0x94] sm:$0xff]
    %v2171 = vld [vmem:[%s8 + $0x9c] sm:$0xff]
    %v2172 = vld [vmem:[%s8 + $0xa4] sm:$0xf]
    %v2173 = vld [vmem:[%s8 + $0xa8] sm:$0xff]
    %v2174 = vld [vmem:[%s8 + $0xb0] sm:$0xff]
    %v2175 = vld [vmem:[%s8 + $0xb8] sm:$0xff]
    %v2176 = vld [vmem:[%s8 + $0xc0] sm:$0xf]
    %v2177 = vld [vmem:[%s8 + $0xc4] sm:$0xff]
    %v2178 = vld [vmem:[%s8 + $0xcc] sm:$0xff]
    %v2179 = vld [vmem:[%s8 + $0xd4] sm:$0xff]
    %v2180 = vld [vmem:[%s8 + $0xdc] sm:$0xf]
    %v2181 = vld [vmem:[%s8 + $0xe0] sm:$0xff]
    %v2182 = vld [vmem:[%s8 + $0xe8] sm:$0xff]
    %v2183 = vld [vmem:[%s8 + $0xf0] sm:$0xff]
    %v2184 = vld [vmem:[%s8 + $0xf8] sm:$0xf]
    %v2185 = vld [vmem:[%s8 + $0xfc] sm:$0xff]
    %v2186 = vld [vmem:[%s8 + $0x104] sm:$0xff]
    %v2187 = vld [vmem:[%s8 + $0x10c] sm:$0xff]
    %v2188 = vld [vmem:[%s8 + $0x114] sm:$0xf]
    %v2189 = vld [vmem:[%s8 + $0x118] sm:$0xff]
    %v2190 = vld [vmem:[%s8 + $0x120] sm:$0xff]
    %v2191 = vld [vmem:[%s8 + $0x128] sm:$0xff]
    %v2192 = vld [vmem:[%s8 + $0x130] sm:$0xf]
    %v2193 = vld [vmem:[%s8 + $0x134] sm:$0xff]
    %v2194 = vld [vmem:[%s8 + $0x13c] sm:$0xff]
    %v2195 = vld [vmem:[%s8 + $0x144] sm:$0xff]
    %v2196 = vld [vmem:[%s8 + $0x14c] sm:$0xf]
    %v2197 = vld [vmem:[%s8 + $0x150] sm:$0xff]
    %v2198 = vld [vmem:[%s8 + $0x158] sm:$0xff]
    %v2199 = vld [vmem:[%s8 + $0x160] sm:$0xff]
    %v2200 = vld [vmem:[%s8 + $0x168] sm:$0xf]
    %v2201 = vld [vmem:[%s8 + $0x16c] sm:$0xff]
    %v2202 = vld [vmem:[%s8 + $0x174] sm:$0xff]
    %v2203 = vld [vmem:[%s8 + $0x17c] sm:$0xff]
    %v2204 = vld [vmem:[%s8 + $0x184] sm:$0xf]
    %v2205 = vld [vmem:[%s8 + $0x188] sm:$0xff]
    %v2206 = vld [vmem:[%s8 + $0x190] sm:$0xff]
    %v2207 = vld [vmem:[%s8 + $0x198] sm:$0xff]
    %v2208 = vld [vmem:[%s8 + $0x1a0] sm:$0xf]
    %v2209 = vld [vmem:[%s8 + $0x1a4] sm:$0xff]
    %v2210 = vld [vmem:[%s8 + $0x1ac] sm:$0xff]
    %v2211 = vld [vmem:[%s8 + $0x1b4] sm:$0xff]
    %v2212 = vld [vmem:[%s8 + $0x1bc] sm:$0xf]
    %v2213 = vld [vmem:[%s8 + $0x1c0] sm:$0xff]
    %v2214 = vld [vmem:[%s8 + $0x1c8] sm:$0xff]
    %v2215 = vld [vmem:[%s8 + $0x1d0] sm:$0xff]
    %v2216 = vld [vmem:[%s8 + $0x1d8] sm:$0xf]
    %v2217 = vld [vmem:[%s8 + $0x1dc] sm:$0xff]
    %v2218 = vld [vmem:[%s8 + $0x1e4] sm:$0xff]
    %v2219 = vld [vmem:[%s8 + $0x1ec] sm:$0xff]
    %v2220 = vld [vmem:[%s8 + $0x1f4] sm:$0xf]
    %v2221 = vld [vmem:[%s8 + $0x1f8] sm:$0xff]
    %v2222 = vld [vmem:[%s8 + $0x200] sm:$0xff]
    %v2223 = vld [vmem:[%s8 + $0x208] sm:$0xff]
    %v2224 = vld [vmem:[%s8 + $0x210] sm:$0xf]
    %v2225 = vld [vmem:[%s8 + $0x214] sm:$0xff]
    %v2226 = vld [vmem:[%s8 + $0x21c] sm:$0xff]
    %v2227 = vld [vmem:[%s8 + $0x224] sm:$0xff]
    %v2228 = vld [vmem:[%s8 + $0x22c] sm:$0xf]
    %v2229 = vld [vmem:[%s8 + $0x230] sm:$0xff]
    %v2230 = vld [vmem:[%s8 + $0x238] sm:$0xff]
    %v2231 = vld [vmem:[%s8 + $0x240] sm:$0xff]
    %v2232 = vld [vmem:[%s8 + $0x248] sm:$0xf]
    %v2233 = vld [vmem:[%s8 + $0x24c] sm:$0xff]
    %v2234 = vld [vmem:[%s8 + $0x254] sm:$0xff]
    %v2235 = vld [vmem:[%s8 + $0x25c] sm:$0xff]
    %v2236 = vld [vmem:[%s8 + $0x264] sm:$0xf]
    %v2237 = vld [vmem:[%s8 + $0x268] sm:$0xff]
    %v2238 = vld [vmem:[%s8 + $0x270] sm:$0xff]
    %v2239 = vld [vmem:[%s8 + $0x278] sm:$0xff]
    %v2240 = vld [vmem:[%s8 + $0x280] sm:$0xf]
    %v2241 = vld [vmem:[%s8 + $0x284] sm:$0xff]
    %v2242 = vld [vmem:[%s8 + $0x28c] sm:$0xff]
    %v2243 = vld [vmem:[%s8 + $0x294] sm:$0xff]
    %v2244 = vld [vmem:[%s8 + $0x29c] sm:$0xf]
    %v2245 = vld [vmem:[%s8 + $0x2a0] sm:$0xff]
    %v2246 = vld [vmem:[%s8 + $0x2a8] sm:$0xff]
    %v2247 = vld [vmem:[%s8 + $0x2b0] sm:$0xff]
    %v2248 = vld [vmem:[%s8 + $0x2b8] sm:$0xf]
    %v2249 = vld [vmem:[%s8 + $0x2bc] sm:$0xff]
    %v2250 = vld [vmem:[%s8 + $0x2c4] sm:$0xff]
    %v2251 = vld [vmem:[%s8 + $0x2cc] sm:$0xff]
    %v2252 = vld [vmem:[%s8 + $0x2d4] sm:$0xf]
    %v2253 = vld [vmem:[%s8 + $0x2d8] sm:$0xff]
    %v2254 = vld [vmem:[%s8 + $0x2e0] sm:$0xff]
    %v2255 = vld [vmem:[%s8 + $0x2e8] sm:$0xff]
    %v2256 = vld [vmem:[%s8 + $0x2f0] sm:$0xf]
    %v2257 = vld [vmem:[%s8 + $0x2f4] sm:$0xff]
    %v2258 = vld [vmem:[%s8 + $0x2fc] sm:$0xff]
    %v2259 = vld [vmem:[%s8 + $0x304] sm:$0xff]
    %v2260 = vld [vmem:[%s8 + $0x30c] sm:$0xf]
    %v2261 = vld [vmem:[%s8 + $0x310] sm:$0xff]
    %v2262 = vld [vmem:[%s8 + $0x318] sm:$0xff]
    %v2263 = vld [vmem:[%s8 + $0x320] sm:$0xff]
    %v2264 = vld [vmem:[%s8 + $0x328] sm:$0xf]
    %v2265 = vld [vmem:[%s8 + $0x32c] sm:$0xff]
    %v2266 = vld [vmem:[%s8 + $0x334] sm:$0xff]
    %v2267 = vld [vmem:[%s8 + $0x33c] sm:$0xff]
    %v2268 = vld [vmem:[%s8 + $0x344] sm:$0xf]
    %v2269 = vld [vmem:[%s8 + $0x348] sm:$0xff]
    %v2270 = vld [vmem:[%s8 + $0x350] sm:$0xff]
    %v2271 = vld [vmem:[%s8 + $0x358] sm:$0xff]
    %v2272 = vld [vmem:[%s8 + $0x360] sm:$0xf]
    %v2273 = vld [vmem:[%s8 + $0x364] sm:$0xff]
    %v2274 = vld [vmem:[%s8 + $0x36c] sm:$0xff]
    %v2275 = vld [vmem:[%s8 + $0x374] sm:$0xff]
    %v2276 = vld [vmem:[%s8 + $0x37c] sm:$0xf]
    %v2277 = vld [vmem:[%s8 + $0x380] sm:$0xff]
    %v2278 = vld [vmem:[%s8 + $0x388] sm:$0xff]
    %v2279 = vld [vmem:[%s8 + $0x390] sm:$0xff]
    %v2280 = vld [vmem:[%s8 + $0x398] sm:$0xf]
    %v2281 = vld [vmem:[%s8 + $0x39c] sm:$0xff]
    %v2282 = vld [vmem:[%s8 + $0x3a4] sm:$0xff]
    %v2283 = vld [vmem:[%s8 + $0x3ac] sm:$0xff]
    %v2284 = vld [vmem:[%s8 + $0x3b4] sm:$0xf]
    %v2285 = vld [vmem:[%s8 + $0x3b8] sm:$0xff]
    %v2286 = vld [vmem:[%s8 + $0x3c0] sm:$0xff]
    %v2287 = vld [vmem:[%s8 + $0x3c8] sm:$0xff]
    %v2288 = vld [vmem:[%s8 + $0x3d0] sm:$0xf]
    %v2289 = vld [vmem:[%s8 + $0x3d4] sm:$0xff]
    %v2290 = vld [vmem:[%s8 + $0x3dc] sm:$0xff]
    %v2291 = vld [vmem:[%s8 + $0x3e4] sm:$0xff]
    %v2292 = vld [vmem:[%s8 + $0x3ec] sm:$0xf]
    %v2293 = vld [vmem:[%s8 + $0x3f0] sm:$0xff]
    %v2294 = vld [vmem:[%s8 + $0x3f8] sm:$0xff]
    %v2295 = vld [vmem:[%s8 + $0x400] sm:$0xff]
    %v2296 = vld [vmem:[%s8 + $0x408] sm:$0xf]
    %v2297 = vld [vmem:[%s8 + $0x40c] sm:$0xff]
    %v2298 = vld [vmem:[%s8 + $0x414] sm:$0xff]
    %v2299 = vld [vmem:[%s8 + $0x41c] sm:$0xff]
    %v2300 = vld [vmem:[%s8 + $0x424] sm:$0xf]
    %v2301 = vld [vmem:[%s8 + $0x428] sm:$0xff]
    %v2302 = vld [vmem:[%s8 + $0x430] sm:$0xff]
    %v2303 = vld [vmem:[%s8 + $0x438] sm:$0xff]
    %v2304 = vld [vmem:[%s8 + $0x440] sm:$0xf]
    %v2305 = vld [vmem:[%s8 + $0x444] sm:$0xff]
    %v2306 = vld [vmem:[%s8 + $0x44c] sm:$0xff]
    %v2307 = vld [vmem:[%s8 + $0x454] sm:$0xff]
    %v2308 = vld [vmem:[%s8 + $0x45c] sm:$0xf]
    %v2309 = vld [vmem:[%s8 + $0x460] sm:$0xff]
    %v2310 = vld [vmem:[%s8 + $0x468] sm:$0xff]
    %v2311 = vld [vmem:[%s8 + $0x470] sm:$0xff]
    %v2312 = vld [vmem:[%s8 + $0x478] sm:$0xf]
    %v2313 = vld [vmem:[%s8 + $0x47c] sm:$0xff]
    %v2314 = vld [vmem:[%s8 + $0x484] sm:$0xff]
    %v2315 = vld [vmem:[%s8 + $0x48c] sm:$0xff]
    %v2316 = vld [vmem:[%s8 + $0x494] sm:$0xf]
    %v2317 = vld [vmem:[%s8 + $0x498] sm:$0xff]
    %v2318 = vld [vmem:[%s8 + $0x4a0] sm:$0xff]
    %v2319 = vld [vmem:[%s8 + $0x4a8] sm:$0xff]
    %v2320 = vld [vmem:[%s8 + $0x4b0] sm:$0xf]
    %v2321 = vld [vmem:[%s8 + $0x4b4] sm:$0xff]
    %v2322 = vld [vmem:[%s8 + $0x4bc] sm:$0xff]
    %v2323 = vld [vmem:[%s8 + $0x4c4] sm:$0xff]
    %v2324 = vld [vmem:[%s8 + $0x4cc] sm:$0xf]
    %v2325 = vld [vmem:[%s8 + $0x4d0] sm:$0xff]
    %v2326 = vld [vmem:[%s8 + $0x4d8] sm:$0xff]
    %v2327 = vld [vmem:[%s8 + $0x4e0] sm:$0xff]
    %v2328 = vld [vmem:[%s8 + $0x4e8] sm:$0xf]
    %v2329 = vld [vmem:[%s8 + $0x4ec] sm:$0xff]
    %v2330 = vld [vmem:[%s8 + $0x4f4] sm:$0xff]
    %v2331 = vld [vmem:[%s8 + $0x4fc] sm:$0xff]
    %v2332 = vld [vmem:[%s8 + $0x504] sm:$0xf]
    %v2333 = vld [vmem:[%s8 + $0x508] sm:$0xff]
    %v2334 = vld [vmem:[%s8 + $0x510] sm:$0xff]
    %v2335 = vld [vmem:[%s8 + $0x518] sm:$0xff]
    %v2336 = vld [vmem:[%s8 + $0x520] sm:$0xf]
    %v2337 = vld [vmem:[%s8 + $0x524] sm:$0xff]
    %v2338 = vld [vmem:[%s8 + $0x52c] sm:$0xff]
    %v2339 = vld [vmem:[%s8 + $0x534] sm:$0xff]
    %v2340 = vld [vmem:[%s8 + $0x53c] sm:$0xf]
    %v2341 = vld [vmem:[%s8 + $0x540] sm:$0xff]
    %v2342 = vld [vmem:[%s8 + $0x548] sm:$0xff]
    %v2343 = vld [vmem:[%s8 + $0x550] sm:$0xff]
    %v2344 = vld [vmem:[%s8 + $0x558] sm:$0xf]
    %v2345 = vld [vmem:[%s8 + $0x55c] sm:$0xff]
    %v2346 = vld [vmem:[%s8 + $0x564] sm:$0xff]
    %v2347 = vld [vmem:[%s8 + $0x56c] sm:$0xff]
    %v2348 = vld [vmem:[%s8 + $0x574] sm:$0xf]
    %v2349 = vld [vmem:[%s8 + $0x578] sm:$0xff]
    %v2350 = vld [vmem:[%s8 + $0x580] sm:$0xff]
    %v2351 = vld [vmem:[%s8 + $0x588] sm:$0xff]
    %v2352 = vld [vmem:[%s8 + $0x590] sm:$0xf]
    %v2353 = vld [vmem:[%s8 + $0x594] sm:$0xff]
    %v2354 = vld [vmem:[%s8 + $0x59c] sm:$0xff]
    %v2355 = vld [vmem:[%s8 + $0x5a4] sm:$0xff]
    %v2356 = vld [vmem:[%s8 + $0x5ac] sm:$0xf]
    %v2357 = vld [vmem:[%s8 + $0x5b0] sm:$0xff]
    %v2358 = vld [vmem:[%s8 + $0x5b8] sm:$0xff]
    %v2359 = vld [vmem:[%s8 + $0x5c0] sm:$0xff]
    %v2360 = vld [vmem:[%s8 + $0x5c8] sm:$0xf]
    %v2361 = vld [vmem:[%s8 + $0x5cc] sm:$0xff]
    %v2362 = vld [vmem:[%s8 + $0x5d4] sm:$0xff]
    %v2363 = vld [vmem:[%s8 + $0x5dc] sm:$0xff]
    %v2364 = vld [vmem:[%s8 + $0x5e4] sm:$0xf]
    %v2365 = vld [vmem:[%s8 + $0x5e8] sm:$0xff]
    %v2366 = vld [vmem:[%s8 + $0x5f0] sm:$0xff]
    %v2367 = vld [vmem:[%s8 + $0x5f8] sm:$0xff]
    %v2368 = vld [vmem:[%s8 + $0x600] sm:$0xf]
    %v2369 = vld [vmem:[%s8 + $0x604] sm:$0xff]
    %v2370 = vld [vmem:[%s8 + $0x60c] sm:$0xff]
    %v2371 = vld [vmem:[%s8 + $0x614] sm:$0xff]
    %v2372 = vld [vmem:[%s8 + $0x61c] sm:$0xf]
    %v2373 = vld [vmem:[%s8 + $0x620] sm:$0xff]
    %v2374 = vld [vmem:[%s8 + $0x628] sm:$0xff]
    %v2375 = vld [vmem:[%s8 + $0x630] sm:$0xff]
    %v2376 = vld [vmem:[%s8 + $0x638] sm:$0xf]
    %v2377 = vld [vmem:[%s8 + $0x63c] sm:$0xff]
    %v2378 = vld [vmem:[%s8 + $0x644] sm:$0xff]
    %v2379 = vld [vmem:[%s8 + $0x64c] sm:$0xff]
    %v2380 = vld [vmem:[%s8 + $0x654] sm:$0xf]
    %v2381 = vld [vmem:[%s8 + $0x658] sm:$0xff]
    %v2382 = vld [vmem:[%s8 + $0x660] sm:$0xff]
    %v2383 = vld [vmem:[%s8 + $0x668] sm:$0xff]
    %v2384 = vld [vmem:[%s8 + $0x670] sm:$0xf]
    %v2385 = vld [vmem:[%s8 + $0x674] sm:$0xff]
    %v2386 = vld [vmem:[%s8 + $0x67c] sm:$0xff]
    %v2387 = vld [vmem:[%s8 + $0x684] sm:$0xff]
    %v2388 = vld [vmem:[%s8 + $0x68c] sm:$0xf]
    %v2389 = vld [vmem:[%s8 + $0x690] sm:$0xff]
    %v2390 = vld [vmem:[%s8 + $0x698] sm:$0xff]
    %v2391 = vld [vmem:[%s8 + $0x6a0] sm:$0xff]
    %v2392 = vld [vmem:[%s8 + $0x6a8] sm:$0xf]
    %v2393 = vld [vmem:[%s8 + $0x6ac] sm:$0xff]
    %v2394 = vld [vmem:[%s8 + $0x6b4] sm:$0xff]
    %v2395 = vld [vmem:[%s8 + $0x6bc] sm:$0xff]
    %v2396 = vld [vmem:[%s8 + $0x6c4] sm:$0xf]
    %v2397 = vld [vmem:[%s8 + $0x6c8] sm:$0xff]
    %v2398 = vld [vmem:[%s8 + $0x6d0] sm:$0xff]
    %v2399 = vld [vmem:[%s8 + $0x6d8] sm:$0xff]
    %v2400 = vld [vmem:[%s8 + $0x6e0] sm:$0xf]
    %v2401 = vld [vmem:[%s8 + $0x6e4] sm:$0xff]
    %v2402 = vld [vmem:[%s8 + $0x6ec] sm:$0xff]
    %v2403 = vld [vmem:[%s8 + $0x6f4] sm:$0xff]
    %v2404 = vld [vmem:[%s8 + $0x6fc] sm:$0xf]
    %v2405 = vld [vmem:[%s9] sm:$0x7f]
    %v2407 = vlaneseq
    %v2408 = vshrl.u32 %v2407, 7
    %v2409 = vsub.s32 0, %v2408
    %v2410 = vrot.slane %v2405, %v2409
    %v2411 = vlaneseq
    %v2412 = vshrl.u32 %v2411, 7
    %v2413 = vsub.s32 1, %v2412
    %v2414 = vrot.slane %v2405, %v2413
    %v2415 = vlaneseq
    %v2416 = vshrl.u32 %v2415, 7
    %v2417 = vsub.s32 2, %v2416
    %v2418 = vrot.slane %v2405, %v2417
    %v2419 = vlaneseq
    %v2420 = vshrl.u32 %v2419, 7
    %v2421 = vsub.s32 3, %v2420
    %v2422 = vrot.slane %v2405, %v2421
    %v2423 = vlaneseq
    %v2424 = vshrl.u32 %v2423, 7
    %v2425 = vsub.s32 4, %v2424
    %v2426 = vrot.slane %v2405, %v2425
    %v2427 = vlaneseq
    %v2428 = vshrl.u32 %v2427, 7
    %v2429 = vsub.s32 5, %v2428
    %v2430 = vrot.slane %v2405, %v2429
    %v2431 = vlaneseq
    %v2432 = vshrl.u32 %v2431, 7
    %v2433 = vsub.s32 6, %v2432
    %v2434 = vrot.slane %v2405, %v2433
    %v2698 = vunpack.c.l.b16 %v2149
    %v2699 = vunpack.c.h.b16 %v2149
    %v2700 = vunpack.c.l.b16 %v2150
    %v2701 = vunpack.c.h.b16 %v2150
    %v2702 = vunpack.c.l.b16 %v2151
    %v2703 = vunpack.c.h.b16 %v2151
    %v2704 = vunpack.c.l.b16 %v2152
    %v2705 = vunpack.c.l.b16 %v2153
    %v2706 = vunpack.c.h.b16 %v2153
    %v2707 = vunpack.c.l.b16 %v2154
    %v2708 = vunpack.c.h.b16 %v2154
    %v2709 = vunpack.c.l.b16 %v2155
    %v2710 = vunpack.c.h.b16 %v2155
    %v2711 = vunpack.c.l.b16 %v2156
    %v2712 = vunpack.c.l.b16 %v2157
    %v2713 = vunpack.c.h.b16 %v2157
    %v2714 = vunpack.c.l.b16 %v2158
    %v2715 = vunpack.c.h.b16 %v2158
    %v2716 = vunpack.c.l.b16 %v2159
    %v2717 = vunpack.c.h.b16 %v2159
    %v2718 = vunpack.c.l.b16 %v2160
    %v2719 = vunpack.c.l.b16 %v2161
    %v2720 = vunpack.c.h.b16 %v2161
    %v2721 = vunpack.c.l.b16 %v2162
    %v2722 = vunpack.c.h.b16 %v2162
    %v2723 = vunpack.c.l.b16 %v2163
    %v2724 = vunpack.c.h.b16 %v2163
    %v2725 = vunpack.c.l.b16 %v2164
    %v2726 = vunpack.c.l.b16 %v2165
    %v2727 = vunpack.c.h.b16 %v2165
    %v2728 = vunpack.c.l.b16 %v2166
    %v2729 = vunpack.c.h.b16 %v2166
    %v2730 = vunpack.c.l.b16 %v2167
    %v2731 = vunpack.c.h.b16 %v2167
    %v2732 = vunpack.c.l.b16 %v2168
    %v2733 = vunpack.c.l.b16 %v2169
    %v2734 = vunpack.c.h.b16 %v2169
    %v2735 = vunpack.c.l.b16 %v2170
    %v2736 = vunpack.c.h.b16 %v2170
    %v2737 = vunpack.c.l.b16 %v2171
    %v2738 = vunpack.c.h.b16 %v2171
    %v2739 = vunpack.c.l.b16 %v2172
    %v2740 = vunpack.c.l.b16 %v2173
    %v2741 = vunpack.c.h.b16 %v2173
    %v2742 = vunpack.c.l.b16 %v2174
    %v2743 = vunpack.c.h.b16 %v2174
    %v2744 = vunpack.c.l.b16 %v2175
    %v2745 = vunpack.c.h.b16 %v2175
    %v2746 = vunpack.c.l.b16 %v2176
    %v2747 = vunpack.c.l.b16 %v2177
    %v2748 = vunpack.c.h.b16 %v2177
    %v2749 = vunpack.c.l.b16 %v2178
    %v2750 = vunpack.c.h.b16 %v2178
    %v2751 = vunpack.c.l.b16 %v2179
    %v2752 = vunpack.c.h.b16 %v2179
    %v2753 = vunpack.c.l.b16 %v2180
    %v2754 = vunpack.c.l.b16 %v2181
    %v2755 = vunpack.c.h.b16 %v2181
    %v2756 = vunpack.c.l.b16 %v2182
    %v2757 = vunpack.c.h.b16 %v2182
    %v2758 = vunpack.c.l.b16 %v2183
    %v2759 = vunpack.c.h.b16 %v2183
    %v2760 = vunpack.c.l.b16 %v2184
    %v2761 = vunpack.c.l.b16 %v2185
    %v2762 = vunpack.c.h.b16 %v2185
    %v2763 = vunpack.c.l.b16 %v2186
    %v2764 = vunpack.c.h.b16 %v2186
    %v2765 = vunpack.c.l.b16 %v2187
    %v2766 = vunpack.c.h.b16 %v2187
    %v2767 = vunpack.c.l.b16 %v2188
    %v2768 = vunpack.c.l.b16 %v2189
    %v2769 = vunpack.c.h.b16 %v2189
    %v2770 = vunpack.c.l.b16 %v2190
    %v2771 = vunpack.c.h.b16 %v2190
    %v2772 = vunpack.c.l.b16 %v2191
    %v2773 = vunpack.c.h.b16 %v2191
    %v2774 = vunpack.c.l.b16 %v2192
    %v2775 = vunpack.c.l.b16 %v2193
    %v2776 = vunpack.c.h.b16 %v2193
    %v2777 = vunpack.c.l.b16 %v2194
    %v2778 = vunpack.c.h.b16 %v2194
    %v2779 = vunpack.c.l.b16 %v2195
    %v2780 = vunpack.c.h.b16 %v2195
    %v2781 = vunpack.c.l.b16 %v2196
    %v2782 = vunpack.c.l.b16 %v2197
    %v2783 = vunpack.c.h.b16 %v2197
    %v2784 = vunpack.c.l.b16 %v2198
    %v2785 = vunpack.c.h.b16 %v2198
    %v2786 = vunpack.c.l.b16 %v2199
    %v2787 = vunpack.c.h.b16 %v2199
    %v2788 = vunpack.c.l.b16 %v2200
    %v2789 = vunpack.c.l.b16 %v2201
    %v2790 = vunpack.c.h.b16 %v2201
    %v2791 = vunpack.c.l.b16 %v2202
    %v2792 = vunpack.c.h.b16 %v2202
    %v2793 = vunpack.c.l.b16 %v2203
    %v2794 = vunpack.c.h.b16 %v2203
    %v2795 = vunpack.c.l.b16 %v2204
    %v2796 = vunpack.c.l.b16 %v2205
    %v2797 = vunpack.c.h.b16 %v2205
    %v2798 = vunpack.c.l.b16 %v2206
    %v2799 = vunpack.c.h.b16 %v2206
    %v2800 = vunpack.c.l.b16 %v2207
    %v2801 = vunpack.c.h.b16 %v2207
    %v2802 = vunpack.c.l.b16 %v2208
    %v2803 = vunpack.c.l.b16 %v2209
    %v2804 = vunpack.c.h.b16 %v2209
    %v2805 = vunpack.c.l.b16 %v2210
    %v2806 = vunpack.c.h.b16 %v2210
    %v2807 = vunpack.c.l.b16 %v2211
    %v2808 = vunpack.c.h.b16 %v2211
    %v2809 = vunpack.c.l.b16 %v2212
    %v2810 = vunpack.c.l.b16 %v2213
    %v2811 = vunpack.c.h.b16 %v2213
    %v2812 = vunpack.c.l.b16 %v2214
    %v2813 = vunpack.c.h.b16 %v2214
    %v2814 = vunpack.c.l.b16 %v2215
    %v2815 = vunpack.c.h.b16 %v2215
    %v2816 = vunpack.c.l.b16 %v2216
    %v2817 = vunpack.c.l.b16 %v2217
    %v2818 = vunpack.c.h.b16 %v2217
    %v2819 = vunpack.c.l.b16 %v2218
    %v2820 = vunpack.c.h.b16 %v2218
    %v2821 = vunpack.c.l.b16 %v2219
    %v2822 = vunpack.c.h.b16 %v2219
    %v2823 = vunpack.c.l.b16 %v2220
    %v2824 = vunpack.c.l.b16 %v2221
    %v2825 = vunpack.c.h.b16 %v2221
    %v2826 = vunpack.c.l.b16 %v2222
    %v2827 = vunpack.c.h.b16 %v2222
    %v2828 = vunpack.c.l.b16 %v2223
    %v2829 = vunpack.c.h.b16 %v2223
    %v2830 = vunpack.c.l.b16 %v2224
    %v2831 = vunpack.c.l.b16 %v2225
    %v2832 = vunpack.c.h.b16 %v2225
    %v2833 = vunpack.c.l.b16 %v2226
    %v2834 = vunpack.c.h.b16 %v2226
    %v2835 = vunpack.c.l.b16 %v2227
    %v2836 = vunpack.c.h.b16 %v2227
    %v2837 = vunpack.c.l.b16 %v2228
    %v2838 = vunpack.c.l.b16 %v2229
    %v2839 = vunpack.c.h.b16 %v2229
    %v2840 = vunpack.c.l.b16 %v2230
    %v2841 = vunpack.c.h.b16 %v2230
    %v2842 = vunpack.c.l.b16 %v2231
    %v2843 = vunpack.c.h.b16 %v2231
    %v2844 = vunpack.c.l.b16 %v2232
    %v2845 = vunpack.c.l.b16 %v2233
    %v2846 = vunpack.c.h.b16 %v2233
    %v2847 = vunpack.c.l.b16 %v2234
    %v2848 = vunpack.c.h.b16 %v2234
    %v2849 = vunpack.c.l.b16 %v2235
    %v2850 = vunpack.c.h.b16 %v2235
    %v2851 = vunpack.c.l.b16 %v2236
    %v2852 = vunpack.c.l.b16 %v2237
    %v2853 = vunpack.c.h.b16 %v2237
    %v2854 = vunpack.c.l.b16 %v2238
    %v2855 = vunpack.c.h.b16 %v2238
    %v2856 = vunpack.c.l.b16 %v2239
    %v2857 = vunpack.c.h.b16 %v2239
    %v2858 = vunpack.c.l.b16 %v2240
    %v2859 = vunpack.c.l.b16 %v2241
    %v2860 = vunpack.c.h.b16 %v2241
    %v2861 = vunpack.c.l.b16 %v2242
    %v2862 = vunpack.c.h.b16 %v2242
    %v2863 = vunpack.c.l.b16 %v2243
    %v2864 = vunpack.c.h.b16 %v2243
    %v2865 = vunpack.c.l.b16 %v2244
    %v2866 = vunpack.c.l.b16 %v2245
    %v2867 = vunpack.c.h.b16 %v2245
    %v2868 = vunpack.c.l.b16 %v2246
    %v2869 = vunpack.c.h.b16 %v2246
    %v2870 = vunpack.c.l.b16 %v2247
    %v2871 = vunpack.c.h.b16 %v2247
    %v2872 = vunpack.c.l.b16 %v2248
    %v2873 = vunpack.c.l.b16 %v2249
    %v2874 = vunpack.c.h.b16 %v2249
    %v2875 = vunpack.c.l.b16 %v2250
    %v2876 = vunpack.c.h.b16 %v2250
    %v2877 = vunpack.c.l.b16 %v2251
    %v2878 = vunpack.c.h.b16 %v2251
    %v2879 = vunpack.c.l.b16 %v2252
    %v2880 = vunpack.c.l.b16 %v2253
    %v2881 = vunpack.c.h.b16 %v2253
    %v2882 = vunpack.c.l.b16 %v2254
    %v2883 = vunpack.c.h.b16 %v2254
    %v2884 = vunpack.c.l.b16 %v2255
    %v2885 = vunpack.c.h.b16 %v2255
    %v2886 = vunpack.c.l.b16 %v2256
    %v2887 = vunpack.c.l.b16 %v2257
    %v2888 = vunpack.c.h.b16 %v2257
    %v2889 = vunpack.c.l.b16 %v2258
    %v2890 = vunpack.c.h.b16 %v2258
    %v2891 = vunpack.c.l.b16 %v2259
    %v2892 = vunpack.c.h.b16 %v2259
    %v2893 = vunpack.c.l.b16 %v2260
    %v2894 = vunpack.c.l.b16 %v2261
    %v2895 = vunpack.c.h.b16 %v2261
    %v2896 = vunpack.c.l.b16 %v2262
    %v2897 = vunpack.c.h.b16 %v2262
    %v2898 = vunpack.c.l.b16 %v2263
    %v2899 = vunpack.c.h.b16 %v2263
    %v2900 = vunpack.c.l.b16 %v2264
    %v2901 = vunpack.c.l.b16 %v2265
    %v2902 = vunpack.c.h.b16 %v2265
    %v2903 = vunpack.c.l.b16 %v2266
    %v2904 = vunpack.c.h.b16 %v2266
    %v2905 = vunpack.c.l.b16 %v2267
    %v2906 = vunpack.c.h.b16 %v2267
    %v2907 = vunpack.c.l.b16 %v2268
    %v2908 = vunpack.c.l.b16 %v2269
    %v2909 = vunpack.c.h.b16 %v2269
    %v2910 = vunpack.c.l.b16 %v2270
    %v2911 = vunpack.c.h.b16 %v2270
    %v2912 = vunpack.c.l.b16 %v2271
    %v2913 = vunpack.c.h.b16 %v2271
    %v2914 = vunpack.c.l.b16 %v2272
    %v2915 = vunpack.c.l.b16 %v2273
    %v2916 = vunpack.c.h.b16 %v2273
    %v2917 = vunpack.c.l.b16 %v2274
    %v2918 = vunpack.c.h.b16 %v2274
    %v2919 = vunpack.c.l.b16 %v2275
    %v2920 = vunpack.c.h.b16 %v2275
    %v2921 = vunpack.c.l.b16 %v2276
    %v2922 = vunpack.c.l.b16 %v2277
    %v2923 = vunpack.c.h.b16 %v2277
    %v2924 = vunpack.c.l.b16 %v2278
    %v2925 = vunpack.c.h.b16 %v2278
    %v2926 = vunpack.c.l.b16 %v2279
    %v2927 = vunpack.c.h.b16 %v2279
    %v2928 = vunpack.c.l.b16 %v2280
    %v2929 = vunpack.c.l.b16 %v2281
    %v2930 = vunpack.c.h.b16 %v2281
    %v2931 = vunpack.c.l.b16 %v2282
    %v2932 = vunpack.c.h.b16 %v2282
    %v2933 = vunpack.c.l.b16 %v2283
    %v2934 = vunpack.c.h.b16 %v2283
    %v2935 = vunpack.c.l.b16 %v2284
    %v2936 = vunpack.c.l.b16 %v2285
    %v2937 = vunpack.c.h.b16 %v2285
    %v2938 = vunpack.c.l.b16 %v2286
    %v2939 = vunpack.c.h.b16 %v2286
    %v2940 = vunpack.c.l.b16 %v2287
    %v2941 = vunpack.c.h.b16 %v2287
    %v2942 = vunpack.c.l.b16 %v2288
    %v2943 = vunpack.c.l.b16 %v2289
    %v2944 = vunpack.c.h.b16 %v2289
    %v2945 = vunpack.c.l.b16 %v2290
    %v2946 = vunpack.c.h.b16 %v2290
    %v2947 = vunpack.c.l.b16 %v2291
    %v2948 = vunpack.c.h.b16 %v2291
    %v2949 = vunpack.c.l.b16 %v2292
    %v2950 = vunpack.c.l.b16 %v2293
    %v2951 = vunpack.c.h.b16 %v2293
    %v2952 = vunpack.c.l.b16 %v2294
    %v2953 = vunpack.c.h.b16 %v2294
    %v2954 = vunpack.c.l.b16 %v2295
    %v2955 = vunpack.c.h.b16 %v2295
    %v2956 = vunpack.c.l.b16 %v2296
    %v2957 = vunpack.c.l.b16 %v2297
    %v2958 = vunpack.c.h.b16 %v2297
    %v2959 = vunpack.c.l.b16 %v2298
    %v2960 = vunpack.c.h.b16 %v2298
    %v2961 = vunpack.c.l.b16 %v2299
    %v2962 = vunpack.c.h.b16 %v2299
    %v2963 = vunpack.c.l.b16 %v2300
    %v2964 = vunpack.c.l.b16 %v2301
    %v2965 = vunpack.c.h.b16 %v2301
    %v2966 = vunpack.c.l.b16 %v2302
    %v2967 = vunpack.c.h.b16 %v2302
    %v2968 = vunpack.c.l.b16 %v2303
    %v2969 = vunpack.c.h.b16 %v2303
    %v2970 = vunpack.c.l.b16 %v2304
    %v2971 = vunpack.c.l.b16 %v2305
    %v2972 = vunpack.c.h.b16 %v2305
    %v2973 = vunpack.c.l.b16 %v2306
    %v2974 = vunpack.c.h.b16 %v2306
    %v2975 = vunpack.c.l.b16 %v2307
    %v2976 = vunpack.c.h.b16 %v2307
    %v2977 = vunpack.c.l.b16 %v2308
    %v2978 = vunpack.c.l.b16 %v2309
    %v2979 = vunpack.c.h.b16 %v2309
    %v2980 = vunpack.c.l.b16 %v2310
    %v2981 = vunpack.c.h.b16 %v2310
    %v2982 = vunpack.c.l.b16 %v2311
    %v2983 = vunpack.c.h.b16 %v2311
    %v2984 = vunpack.c.l.b16 %v2312
    %v2985 = vunpack.c.l.b16 %v2313
    %v2986 = vunpack.c.h.b16 %v2313
    %v2987 = vunpack.c.l.b16 %v2314
    %v2988 = vunpack.c.h.b16 %v2314
    %v2989 = vunpack.c.l.b16 %v2315
    %v2990 = vunpack.c.h.b16 %v2315
    %v2991 = vunpack.c.l.b16 %v2316
    %v2992 = vunpack.c.l.b16 %v2317
    %v2993 = vunpack.c.h.b16 %v2317
    %v2994 = vunpack.c.l.b16 %v2318
    %v2995 = vunpack.c.h.b16 %v2318
    %v2996 = vunpack.c.l.b16 %v2319
    %v2997 = vunpack.c.h.b16 %v2319
    %v2998 = vunpack.c.l.b16 %v2320
    %v2999 = vunpack.c.l.b16 %v2321
    %v3000 = vunpack.c.h.b16 %v2321
    %v3001 = vunpack.c.l.b16 %v2322
    %v3002 = vunpack.c.h.b16 %v2322
    %v3003 = vunpack.c.l.b16 %v2323
    %v3004 = vunpack.c.h.b16 %v2323
    %v3005 = vunpack.c.l.b16 %v2324
    %v3006 = vunpack.c.l.b16 %v2325
    %v3007 = vunpack.c.h.b16 %v2325
    %v3008 = vunpack.c.l.b16 %v2326
    %v3009 = vunpack.c.h.b16 %v2326
    %v3010 = vunpack.c.l.b16 %v2327
    %v3011 = vunpack.c.h.b16 %v2327
    %v3012 = vunpack.c.l.b16 %v2328
    %v3013 = vunpack.c.l.b16 %v2329
    %v3014 = vunpack.c.h.b16 %v2329
    %v3015 = vunpack.c.l.b16 %v2330
    %v3016 = vunpack.c.h.b16 %v2330
    %v3017 = vunpack.c.l.b16 %v2331
    %v3018 = vunpack.c.h.b16 %v2331
    %v3019 = vunpack.c.l.b16 %v2332
    %v3020 = vunpack.c.l.b16 %v2333
    %v3021 = vunpack.c.h.b16 %v2333
    %v3022 = vunpack.c.l.b16 %v2334
    %v3023 = vunpack.c.h.b16 %v2334
    %v3024 = vunpack.c.l.b16 %v2335
    %v3025 = vunpack.c.h.b16 %v2335
    %v3026 = vunpack.c.l.b16 %v2336
    %v3027 = vunpack.c.l.b16 %v2337
    %v3028 = vunpack.c.h.b16 %v2337
    %v3029 = vunpack.c.l.b16 %v2338
    %v3030 = vunpack.c.h.b16 %v2338
    %v3031 = vunpack.c.l.b16 %v2339
    %v3032 = vunpack.c.h.b16 %v2339
    %v3033 = vunpack.c.l.b16 %v2340
    %v3034 = vunpack.c.l.b16 %v2341
    %v3035 = vunpack.c.h.b16 %v2341
    %v3036 = vunpack.c.l.b16 %v2342
    %v3037 = vunpack.c.h.b16 %v2342
    %v3038 = vunpack.c.l.b16 %v2343
    %v3039 = vunpack.c.h.b16 %v2343
    %v3040 = vunpack.c.l.b16 %v2344
    %v3041 = vunpack.c.l.b16 %v2345
    %v3042 = vunpack.c.h.b16 %v2345
    %v3043 = vunpack.c.l.b16 %v2346
    %v3044 = vunpack.c.h.b16 %v2346
    %v3045 = vunpack.c.l.b16 %v2347
    %v3046 = vunpack.c.h.b16 %v2347
    %v3047 = vunpack.c.l.b16 %v2348
    %v3048 = vunpack.c.l.b16 %v2349
    %v3049 = vunpack.c.h.b16 %v2349
    %v3050 = vunpack.c.l.b16 %v2350
    %v3051 = vunpack.c.h.b16 %v2350
    %v3052 = vunpack.c.l.b16 %v2351
    %v3053 = vunpack.c.h.b16 %v2351
    %v3054 = vunpack.c.l.b16 %v2352
    %v3055 = vunpack.c.l.b16 %v2353
    %v3056 = vunpack.c.h.b16 %v2353
    %v3057 = vunpack.c.l.b16 %v2354
    %v3058 = vunpack.c.h.b16 %v2354
    %v3059 = vunpack.c.l.b16 %v2355
    %v3060 = vunpack.c.h.b16 %v2355
    %v3061 = vunpack.c.l.b16 %v2356
    %v3062 = vunpack.c.l.b16 %v2357
    %v3063 = vunpack.c.h.b16 %v2357
    %v3064 = vunpack.c.l.b16 %v2358
    %v3065 = vunpack.c.h.b16 %v2358
    %v3066 = vunpack.c.l.b16 %v2359
    %v3067 = vunpack.c.h.b16 %v2359
    %v3068 = vunpack.c.l.b16 %v2360
    %v3069 = vunpack.c.l.b16 %v2361
    %v3070 = vunpack.c.h.b16 %v2361
    %v3071 = vunpack.c.l.b16 %v2362
    %v3072 = vunpack.c.h.b16 %v2362
    %v3073 = vunpack.c.l.b16 %v2363
    %v3074 = vunpack.c.h.b16 %v2363
    %v3075 = vunpack.c.l.b16 %v2364
    %v3076 = vunpack.c.l.b16 %v2365
    %v3077 = vunpack.c.h.b16 %v2365
    %v3078 = vunpack.c.l.b16 %v2366
    %v3079 = vunpack.c.h.b16 %v2366
    %v3080 = vunpack.c.l.b16 %v2367
    %v3081 = vunpack.c.h.b16 %v2367
    %v3082 = vunpack.c.l.b16 %v2368
    %v3083 = vunpack.c.l.b16 %v2369
    %v3084 = vunpack.c.h.b16 %v2369
    %v3085 = vunpack.c.l.b16 %v2370
    %v3086 = vunpack.c.h.b16 %v2370
    %v3087 = vunpack.c.l.b16 %v2371
    %v3088 = vunpack.c.h.b16 %v2371
    %v3089 = vunpack.c.l.b16 %v2372
    %v3090 = vunpack.c.l.b16 %v2373
    %v3091 = vunpack.c.h.b16 %v2373
    %v3092 = vunpack.c.l.b16 %v2374
    %v3093 = vunpack.c.h.b16 %v2374
    %v3094 = vunpack.c.l.b16 %v2375
    %v3095 = vunpack.c.h.b16 %v2375
    %v3096 = vunpack.c.l.b16 %v2376
    %v3097 = vunpack.c.l.b16 %v2377
    %v3098 = vunpack.c.h.b16 %v2377
    %v3099 = vunpack.c.l.b16 %v2378
    %v3100 = vunpack.c.h.b16 %v2378
    %v3101 = vunpack.c.l.b16 %v2379
    %v3102 = vunpack.c.h.b16 %v2379
    %v3103 = vunpack.c.l.b16 %v2380
    %v3104 = vunpack.c.l.b16 %v2381
    %v3105 = vunpack.c.h.b16 %v2381
    %v3106 = vunpack.c.l.b16 %v2382
    %v3107 = vunpack.c.h.b16 %v2382
    %v3108 = vunpack.c.l.b16 %v2383
    %v3109 = vunpack.c.h.b16 %v2383
    %v3110 = vunpack.c.l.b16 %v2384
    %v3111 = vunpack.c.l.b16 %v2385
    %v3112 = vunpack.c.h.b16 %v2385
    %v3113 = vunpack.c.l.b16 %v2386
    %v3114 = vunpack.c.h.b16 %v2386
    %v3115 = vunpack.c.l.b16 %v2387
    %v3116 = vunpack.c.h.b16 %v2387
    %v3117 = vunpack.c.l.b16 %v2388
    %v3118 = vunpack.c.l.b16 %v2389
    %v3119 = vunpack.c.h.b16 %v2389
    %v3120 = vunpack.c.l.b16 %v2390
    %v3121 = vunpack.c.h.b16 %v2390
    %v3122 = vunpack.c.l.b16 %v2391
    %v3123 = vunpack.c.h.b16 %v2391
    %v3124 = vunpack.c.l.b16 %v2392
    %v3125 = vunpack.c.l.b16 %v2393
    %v3126 = vunpack.c.h.b16 %v2393
    %v3127 = vunpack.c.l.b16 %v2394
    %v3128 = vunpack.c.h.b16 %v2394
    %v3129 = vunpack.c.l.b16 %v2395
    %v3130 = vunpack.c.h.b16 %v2395
    %v3131 = vunpack.c.l.b16 %v2396
    %v3132 = vunpack.c.l.b16 %v2397
    %v3133 = vunpack.c.h.b16 %v2397
    %v3134 = vunpack.c.l.b16 %v2398
    %v3135 = vunpack.c.h.b16 %v2398
    %v3136 = vunpack.c.l.b16 %v2399
    %v3137 = vunpack.c.h.b16 %v2399
    %v3138 = vunpack.c.l.b16 %v2400
    %v3139 = vunpack.c.l.b16 %v2401
    %v3140 = vunpack.c.h.b16 %v2401
    %v3141 = vunpack.c.l.b16 %v2402
    %v3142 = vunpack.c.h.b16 %v2402
    %v3143 = vunpack.c.l.b16 %v2403
    %v3144 = vunpack.c.h.b16 %v2403
    %v3145 = vunpack.c.l.b16 %v2404
    %v3146 = vpack.c.b16 %v2705, %v2698
    %v3147 = vpack.c.b16 %v2706, %v2699
    %v3148 = vpack.c.b16 %v2707, %v2700
    %v3149 = vpack.c.b16 %v2708, %v2701
    %v3150 = vpack.c.b16 %v2709, %v2702
    %v3151 = vpack.c.b16 %v2710, %v2703
    %v3152 = vpack.c.b16 %v2711, %v2704
    %v3153 = vpack.c.b16 %v2719, %v2712
    %v3154 = vpack.c.b16 %v2720, %v2713
    %v3155 = vpack.c.b16 %v2721, %v2714
    %v3156 = vpack.c.b16 %v2722, %v2715
    %v3157 = vpack.c.b16 %v2723, %v2716
    %v3158 = vpack.c.b16 %v2724, %v2717
    %v3159 = vpack.c.b16 %v2725, %v2718
    %v3160 = vpack.c.b16 %v2733, %v2726
    %v3161 = vpack.c.b16 %v2734, %v2727
    %v3162 = vpack.c.b16 %v2735, %v2728
    %v3163 = vpack.c.b16 %v2736, %v2729
    %v3164 = vpack.c.b16 %v2737, %v2730
    %v3165 = vpack.c.b16 %v2738, %v2731
    %v3166 = vpack.c.b16 %v2739, %v2732
    %v3167 = vpack.c.b16 %v2747, %v2740
    %v3168 = vpack.c.b16 %v2748, %v2741
    %v3169 = vpack.c.b16 %v2749, %v2742
    %v3170 = vpack.c.b16 %v2750, %v2743
    %v3171 = vpack.c.b16 %v2751, %v2744
    %v3172 = vpack.c.b16 %v2752, %v2745
    %v3173 = vpack.c.b16 %v2753, %v2746
    %v3174 = vpack.c.b16 %v2761, %v2754
    %v3175 = vpack.c.b16 %v2762, %v2755
    %v3176 = vpack.c.b16 %v2763, %v2756
    %v3177 = vpack.c.b16 %v2764, %v2757
    %v3178 = vpack.c.b16 %v2765, %v2758
    %v3179 = vpack.c.b16 %v2766, %v2759
    %v3180 = vpack.c.b16 %v2767, %v2760
    %v3181 = vpack.c.b16 %v2775, %v2768
    %v3182 = vpack.c.b16 %v2776, %v2769
    %v3183 = vpack.c.b16 %v2777, %v2770
    %v3184 = vpack.c.b16 %v2778, %v2771
    %v3185 = vpack.c.b16 %v2779, %v2772
    %v3186 = vpack.c.b16 %v2780, %v2773
    %v3187 = vpack.c.b16 %v2781, %v2774
    %v3188 = vpack.c.b16 %v2789, %v2782
    %v3189 = vpack.c.b16 %v2790, %v2783
    %v3190 = vpack.c.b16 %v2791, %v2784
    %v3191 = vpack.c.b16 %v2792, %v2785
    %v3192 = vpack.c.b16 %v2793, %v2786
    %v3193 = vpack.c.b16 %v2794, %v2787
    %v3194 = vpack.c.b16 %v2795, %v2788
    %v3195 = vpack.c.b16 %v2803, %v2796
    %v3196 = vpack.c.b16 %v2804, %v2797
    %v3197 = vpack.c.b16 %v2805, %v2798
    %v3198 = vpack.c.b16 %v2806, %v2799
    %v3199 = vpack.c.b16 %v2807, %v2800
    %v3200 = vpack.c.b16 %v2808, %v2801
    %v3201 = vpack.c.b16 %v2809, %v2802
    %v3202 = vpack.c.b16 %v2817, %v2810
    %v3203 = vpack.c.b16 %v2818, %v2811
    %v3204 = vpack.c.b16 %v2819, %v2812
    %v3205 = vpack.c.b16 %v2820, %v2813
    %v3206 = vpack.c.b16 %v2821, %v2814
    %v3207 = vpack.c.b16 %v2822, %v2815
    %v3208 = vpack.c.b16 %v2823, %v2816
    %v3209 = vpack.c.b16 %v2831, %v2824
    %v3210 = vpack.c.b16 %v2832, %v2825
    %v3211 = vpack.c.b16 %v2833, %v2826
    %v3212 = vpack.c.b16 %v2834, %v2827
    %v3213 = vpack.c.b16 %v2835, %v2828
    %v3214 = vpack.c.b16 %v2836, %v2829
    %v3215 = vpack.c.b16 %v2837, %v2830
    %v3216 = vpack.c.b16 %v2845, %v2838
    %v3217 = vpack.c.b16 %v2846, %v2839
    %v3218 = vpack.c.b16 %v2847, %v2840
    %v3219 = vpack.c.b16 %v2848, %v2841
    %v3220 = vpack.c.b16 %v2849, %v2842
    %v3221 = vpack.c.b16 %v2850, %v2843
    %v3222 = vpack.c.b16 %v2851, %v2844
    %v3223 = vpack.c.b16 %v2859, %v2852
    %v3224 = vpack.c.b16 %v2860, %v2853
    %v3225 = vpack.c.b16 %v2861, %v2854
    %v3226 = vpack.c.b16 %v2862, %v2855
    %v3227 = vpack.c.b16 %v2863, %v2856
    %v3228 = vpack.c.b16 %v2864, %v2857
    %v3229 = vpack.c.b16 %v2865, %v2858
    %v3230 = vpack.c.b16 %v2873, %v2866
    %v3231 = vpack.c.b16 %v2874, %v2867
    %v3232 = vpack.c.b16 %v2875, %v2868
    %v3233 = vpack.c.b16 %v2876, %v2869
    %v3234 = vpack.c.b16 %v2877, %v2870
    %v3235 = vpack.c.b16 %v2878, %v2871
    %v3236 = vpack.c.b16 %v2879, %v2872
    %v3237 = vpack.c.b16 %v2887, %v2880
    %v3238 = vpack.c.b16 %v2888, %v2881
    %v3239 = vpack.c.b16 %v2889, %v2882
    %v3240 = vpack.c.b16 %v2890, %v2883
    %v3241 = vpack.c.b16 %v2891, %v2884
    %v3242 = vpack.c.b16 %v2892, %v2885
    %v3243 = vpack.c.b16 %v2893, %v2886
    %v3244 = vpack.c.b16 %v2901, %v2894
    %v3245 = vpack.c.b16 %v2902, %v2895
    %v3246 = vpack.c.b16 %v2903, %v2896
    %v3247 = vpack.c.b16 %v2904, %v2897
    %v3248 = vpack.c.b16 %v2905, %v2898
    %v3249 = vpack.c.b16 %v2906, %v2899
    %v3250 = vpack.c.b16 %v2907, %v2900
    %v3251 = vpack.c.b16 %v2915, %v2908
    %v3252 = vpack.c.b16 %v2916, %v2909
    %v3253 = vpack.c.b16 %v2917, %v2910
    %v3254 = vpack.c.b16 %v2918, %v2911
    %v3255 = vpack.c.b16 %v2919, %v2912
    %v3256 = vpack.c.b16 %v2920, %v2913
    %v3257 = vpack.c.b16 %v2921, %v2914
    %v3258 = vpack.c.b16 %v2929, %v2922
    %v3259 = vpack.c.b16 %v2930, %v2923
    %v3260 = vpack.c.b16 %v2931, %v2924
    %v3261 = vpack.c.b16 %v2932, %v2925
    %v3262 = vpack.c.b16 %v2933, %v2926
    %v3263 = vpack.c.b16 %v2934, %v2927
    %v3264 = vpack.c.b16 %v2935, %v2928
    %v3265 = vpack.c.b16 %v2943, %v2936
    %v3266 = vpack.c.b16 %v2944, %v2937
    %v3267 = vpack.c.b16 %v2945, %v2938
    %v3268 = vpack.c.b16 %v2946, %v2939
    %v3269 = vpack.c.b16 %v2947, %v2940
    %v3270 = vpack.c.b16 %v2948, %v2941
    %v3271 = vpack.c.b16 %v2949, %v2942
    %v3272 = vpack.c.b16 %v2957, %v2950
    %v3273 = vpack.c.b16 %v2958, %v2951
    %v3274 = vpack.c.b16 %v2959, %v2952
    %v3275 = vpack.c.b16 %v2960, %v2953
    %v3276 = vpack.c.b16 %v2961, %v2954
    %v3277 = vpack.c.b16 %v2962, %v2955
    %v3278 = vpack.c.b16 %v2963, %v2956
    %v3279 = vpack.c.b16 %v2971, %v2964
    %v3280 = vpack.c.b16 %v2972, %v2965
    %v3281 = vpack.c.b16 %v2973, %v2966
    %v3282 = vpack.c.b16 %v2974, %v2967
    %v3283 = vpack.c.b16 %v2975, %v2968
    %v3284 = vpack.c.b16 %v2976, %v2969
    %v3285 = vpack.c.b16 %v2977, %v2970
    %v3286 = vpack.c.b16 %v2985, %v2978
    %v3287 = vpack.c.b16 %v2986, %v2979
    %v3288 = vpack.c.b16 %v2987, %v2980
    %v3289 = vpack.c.b16 %v2988, %v2981
    %v3290 = vpack.c.b16 %v2989, %v2982
    %v3291 = vpack.c.b16 %v2990, %v2983
    %v3292 = vpack.c.b16 %v2991, %v2984
    %v3293 = vpack.c.b16 %v2999, %v2992
    %v3294 = vpack.c.b16 %v3000, %v2993
    %v3295 = vpack.c.b16 %v3001, %v2994
    %v3296 = vpack.c.b16 %v3002, %v2995
    %v3297 = vpack.c.b16 %v3003, %v2996
    %v3298 = vpack.c.b16 %v3004, %v2997
    %v3299 = vpack.c.b16 %v3005, %v2998
    %v3300 = vpack.c.b16 %v3013, %v3006
    %v3301 = vpack.c.b16 %v3014, %v3007
    %v3302 = vpack.c.b16 %v3015, %v3008
    %v3303 = vpack.c.b16 %v3016, %v3009
    %v3304 = vpack.c.b16 %v3017, %v3010
    %v3305 = vpack.c.b16 %v3018, %v3011
    %v3306 = vpack.c.b16 %v3019, %v3012
    %v3307 = vpack.c.b16 %v3027, %v3020
    %v3308 = vpack.c.b16 %v3028, %v3021
    %v3309 = vpack.c.b16 %v3029, %v3022
    %v3310 = vpack.c.b16 %v3030, %v3023
    %v3311 = vpack.c.b16 %v3031, %v3024
    %v3312 = vpack.c.b16 %v3032, %v3025
    %v3313 = vpack.c.b16 %v3033, %v3026
    %v3314 = vpack.c.b16 %v3041, %v3034
    %v3315 = vpack.c.b16 %v3042, %v3035
    %v3316 = vpack.c.b16 %v3043, %v3036
    %v3317 = vpack.c.b16 %v3044, %v3037
    %v3318 = vpack.c.b16 %v3045, %v3038
    %v3319 = vpack.c.b16 %v3046, %v3039
    %v3320 = vpack.c.b16 %v3047, %v3040
    %v3321 = vpack.c.b16 %v3055, %v3048
    %v3322 = vpack.c.b16 %v3056, %v3049
    %v3323 = vpack.c.b16 %v3057, %v3050
    %v3324 = vpack.c.b16 %v3058, %v3051
    %v3325 = vpack.c.b16 %v3059, %v3052
    %v3326 = vpack.c.b16 %v3060, %v3053
    %v3327 = vpack.c.b16 %v3061, %v3054
    %v3328 = vpack.c.b16 %v3069, %v3062
    %v3329 = vpack.c.b16 %v3070, %v3063
    %v3330 = vpack.c.b16 %v3071, %v3064
    %v3331 = vpack.c.b16 %v3072, %v3065
    %v3332 = vpack.c.b16 %v3073, %v3066
    %v3333 = vpack.c.b16 %v3074, %v3067
    %v3334 = vpack.c.b16 %v3075, %v3068
    %v3335 = vpack.c.b16 %v3083, %v3076
    %v3336 = vpack.c.b16 %v3084, %v3077
    %v3337 = vpack.c.b16 %v3085, %v3078
    %v3338 = vpack.c.b16 %v3086, %v3079
    %v3339 = vpack.c.b16 %v3087, %v3080
    %v3340 = vpack.c.b16 %v3088, %v3081
    %v3341 = vpack.c.b16 %v3089, %v3082
    %v3342 = vpack.c.b16 %v3097, %v3090
    %v3343 = vpack.c.b16 %v3098, %v3091
    %v3344 = vpack.c.b16 %v3099, %v3092
    %v3345 = vpack.c.b16 %v3100, %v3093
    %v3346 = vpack.c.b16 %v3101, %v3094
    %v3347 = vpack.c.b16 %v3102, %v3095
    %v3348 = vpack.c.b16 %v3103, %v3096
    %v3349 = vpack.c.b16 %v3111, %v3104
    %v3350 = vpack.c.b16 %v3112, %v3105
    %v3351 = vpack.c.b16 %v3113, %v3106
    %v3352 = vpack.c.b16 %v3114, %v3107
    %v3353 = vpack.c.b16 %v3115, %v3108
    %v3354 = vpack.c.b16 %v3116, %v3109
    %v3355 = vpack.c.b16 %v3117, %v3110
    %v3356 = vpack.c.b16 %v3125, %v3118
    %v3357 = vpack.c.b16 %v3126, %v3119
    %v3358 = vpack.c.b16 %v3127, %v3120
    %v3359 = vpack.c.b16 %v3128, %v3121
    %v3360 = vpack.c.b16 %v3129, %v3122
    %v3361 = vpack.c.b16 %v3130, %v3123
    %v3362 = vpack.c.b16 %v3131, %v3124
    %v3363 = vpack.c.b16 %v3139, %v3132
    %v3364 = vpack.c.b16 %v3140, %v3133
    %v3365 = vpack.c.b16 %v3141, %v3134
    %v3366 = vpack.c.b16 %v3142, %v3135
    %v3367 = vpack.c.b16 %v3143, %v3136
    %v3368 = vpack.c.b16 %v3144, %v3137
    %v3369 = vpack.c.b16 %v3145, %v3138
    %3594 = vmatprep.subr.bf16.mxu0 %v3147
    %3595 = vmatpush1.bf16.msra.mxu0 %v3146
    %3596 = vmatprep.subr.bf16.mxu0 %v3154
    %3597 = vmatpush1.bf16.msra.mxu0 %v3153
    %3598 = vmatprep.subr.bf16.mxu0 %v3161
    %3599 = vmatpush1.bf16.msra.mxu0 %v3160
    %3600 = vmatprep.subr.bf16.mxu0 %v3168
    %3601 = vmatpush1.bf16.msra.mxu0 %v3167
    %3602 = vmatprep.subr.bf16.mxu0 %v3175
    %3603 = vmatpush1.bf16.msra.mxu0 %v3174
    %3604 = vmatprep.subr.bf16.mxu0 %v3182
    %3605 = vmatpush1.bf16.msra.mxu0 %v3181
    %3606 = vmatprep.subr.bf16.mxu0 %v3189
    %3607 = vmatpush1.bf16.msra.mxu0 %v3188
    %3608 = vmatprep.subr.bf16.mxu0 %v3196
    %3609 = vmatpush1.bf16.msra.mxu0 %v3195
    %3610 = vmatprep.subr.bf16.mxu0 %v3203
    %3611 = vmatpush1.bf16.msra.mxu0 %v3202
    %3612 = vmatprep.subr.bf16.mxu0 %v3210
    %3613 = vmatpush1.bf16.msra.mxu0 %v3209
    %3614 = vmatprep.subr.bf16.mxu0 %v3217
    %3615 = vmatpush1.bf16.msra.mxu0 %v3216
    %3616 = vmatprep.subr.bf16.mxu0 %v3224
    %3617 = vmatpush1.bf16.msra.mxu0 %v3223
    %3618 = vmatprep.subr.bf16.mxu0 %v3231
    %3619 = vmatpush1.bf16.msra.mxu0 %v3230
    %3620 = vmatprep.subr.bf16.mxu0 %v3238
    %3621 = vmatpush1.bf16.msra.mxu0 %v3237
    %3622 = vmatprep.subr.bf16.mxu0 %v3245
    %3623 = vmatpush1.bf16.msra.mxu0 %v3244
    %3624 = vmatprep.subr.bf16.mxu0 %v3252
    %3625 = vmatpush1.bf16.msra.mxu0 %v3251
    %3626 = vmatprep.mubr.bf16.mxu0 %v2146
    %3627 = vmatmul.mubr.bf16.gmra.mrb[0].mxu0 %v2145
    %v3628 = vpop.f32.mrb[0].mxu0
    %v3629 = vadd.f32 %v2410, %v3628
    %v3630 = vpop.f32.mrb[0].mxu0
    %v3631 = vadd.f32 %v2414, %v3630
    %v3632 = vpop.f32.mrb[0].mxu0
    %v3633 = vpop.f32.mrb[0].mxu0
    %3634 = vdwg.mxu0
    %3635 = vmatprep.subr.bf16.mxu0 %v3259
    %3636 = vmatpush1.bf16.msra.mxu0 %v3258
    %3637 = vmatprep.subr.bf16.mxu0 %v3266
    %3638 = vmatpush1.bf16.msra.mxu0 %v3265
    %3639 = vmatprep.subr.bf16.mxu0 %v3273
    %3640 = vmatpush1.bf16.msra.mxu0 %v3272
    %3641 = vmatprep.subr.bf16.mxu0 %v3280
    %3642 = vmatpush1.bf16.msra.mxu0 %v3279
    %3643 = vmatprep.subr.bf16.mxu0 %v3287
    %3644 = vmatpush1.bf16.msra.mxu0 %v3286
    %3645 = vmatprep.subr.bf16.mxu0 %v3294
    %3646 = vmatpush1.bf16.msra.mxu0 %v3293
    %3647 = vmatprep.subr.bf16.mxu0 %v3301
    %3648 = vmatpush1.bf16.msra.mxu0 %v3300
    %3649 = vmatprep.subr.bf16.mxu0 %v3308
    %3650 = vmatpush1.bf16.msra.mxu0 %v3307
    %3651 = vmatprep.subr.bf16.mxu0 %v3315
    %3652 = vmatpush1.bf16.msra.mxu0 %v3314
    %3653 = vmatprep.subr.bf16.mxu0 %v3322
    %3654 = vmatpush1.bf16.msra.mxu0 %v3321
    %3655 = vmatprep.subr.bf16.mxu0 %v3329
    %3656 = vmatpush1.bf16.msra.mxu0 %v3328
    %3657 = vmatprep.subr.bf16.mxu0 %v3336
    %3658 = vmatpush1.bf16.msra.mxu0 %v3335
    %3659 = vmatprep.subr.bf16.mxu0 %v3343
    %3660 = vmatpush1.bf16.msra.mxu0 %v3342
    %3661 = vmatprep.subr.bf16.mxu0 %v3350
    %3662 = vmatpush1.bf16.msra.mxu0 %v3349
    %3663 = vmatprep.subr.bf16.mxu0 %v3357
    %3664 = vmatpush1.bf16.msra.mxu0 %v3356
    %3665 = vmatprep.subr.bf16.mxu0 %v3364
    %3666 = vmatpush1.bf16.msra.mxu0 %v3363
    %3667 = vmatprep.mubr.bf16.mxu0 %v2148
    %3668 = vmatmul.mubr.bf16.gmra.mrb[0].mxu0 %v2147
    %v3669 = vpop.f32.mrb[0].mxu0
    %v3670 = vadd.f32 %v3629, %v3669
    %v3671 = vpop.f32.mrb[0].mxu0
    %v3672 = vadd.f32 %v3631, %v3671
    %v3673 = vpop.f32.mrb[0].mxu0
    %v3674 = vpop.f32.mrb[0].mxu0
    %3675 = vdwg.mxu0
    %3676 = vmatprep.subr.bf16.mxu0 %v3149
    %3677 = vmatpush1.bf16.msra.mxu0 %v3148
    %3678 = vmatprep.subr.bf16.mxu0 %v3156
    %3679 = vmatpush1.bf16.msra.mxu0 %v3155
    %3680 = vmatprep.subr.bf16.mxu0 %v3163
    %3681 = vmatpush1.bf16.msra.mxu0 %v3162
    %3682 = vmatprep.subr.bf16.mxu0 %v3170
    %3683 = vmatpush1.bf16.msra.mxu0 %v3169
    %3684 = vmatprep.subr.bf16.mxu0 %v3177
    %3685 = vmatpush1.bf16.msra.mxu0 %v3176
    %3686 = vmatprep.subr.bf16.mxu0 %v3184
    %3687 = vmatpush1.bf16.msra.mxu0 %v3183
    %3688 = vmatprep.subr.bf16.mxu0 %v3191
    %3689 = vmatpush1.bf16.msra.mxu0 %v3190
    %3690 = vmatprep.subr.bf16.mxu0 %v3198
    %3691 = vmatpush1.bf16.msra.mxu0 %v3197
    %3692 = vmatprep.subr.bf16.mxu0 %v3205
    %3693 = vmatpush1.bf16.msra.mxu0 %v3204
    %3694 = vmatprep.subr.bf16.mxu0 %v3212
    %3695 = vmatpush1.bf16.msra.mxu0 %v3211
    %3696 = vmatprep.subr.bf16.mxu0 %v3219
    %3697 = vmatpush1.bf16.msra.mxu0 %v3218
    %3698 = vmatprep.subr.bf16.mxu0 %v3226
    %3699 = vmatpush1.bf16.msra.mxu0 %v3225
    %3700 = vmatprep.subr.bf16.mxu0 %v3233
    %3701 = vmatpush1.bf16.msra.mxu0 %v3232
    %3702 = vmatprep.subr.bf16.mxu0 %v3240
    %3703 = vmatpush1.bf16.msra.mxu0 %v3239
    %3704 = vmatprep.subr.bf16.mxu0 %v3247
    %3705 = vmatpush1.bf16.msra.mxu0 %v3246
    %3706 = vmatprep.subr.bf16.mxu0 %v3254
    %3707 = vmatpush1.bf16.msra.mxu0 %v3253
    %3708 = vmatprep.mubr.bf16.mxu0 %v2146
    %3709 = vmatmul.mubr.bf16.gmra.mrb[0].mxu0 %v2145
    %v3710 = vpop.f32.mrb[0].mxu0
    %v3711 = vadd.f32 %v2418, %v3710
    %v3712 = vpop.f32.mrb[0].mxu0
    %v3713 = vadd.f32 %v2422, %v3712
    %v3714 = vpop.f32.mrb[0].mxu0
    %v3715 = vpop.f32.mrb[0].mxu0
    %3716 = vdwg.mxu0
    %3717 = vmatprep.subr.bf16.mxu0 %v3261
    %3718 = vmatpush1.bf16.msra.mxu0 %v3260
    %3719 = vmatprep.subr.bf16.mxu0 %v3268
    %3720 = vmatpush1.bf16.msra.mxu0 %v3267
    %3721 = vmatprep.subr.bf16.mxu0 %v3275
    %3722 = vmatpush1.bf16.msra.mxu0 %v3274
    %3723 = vmatprep.subr.bf16.mxu0 %v3282
    %3724 = vmatpush1.bf16.msra.mxu0 %v3281
    %3725 = vmatprep.subr.bf16.mxu0 %v3289
    %3726 = vmatpush1.bf16.msra.mxu0 %v3288
    %3727 = vmatprep.subr.bf16.mxu0 %v3296
    %3728 = vmatpush1.bf16.msra.mxu0 %v3295
    %3729 = vmatprep.subr.bf16.mxu0 %v3303
    %3730 = vmatpush1.bf16.msra.mxu0 %v3302
    %3731 = vmatprep.subr.bf16.mxu0 %v3310
    %3732 = vmatpush1.bf16.msra.mxu0 %v3309
    %3733 = vmatprep.subr.bf16.mxu0 %v3317
    %3734 = vmatpush1.bf16.msra.mxu0 %v3316
    %3735 = vmatprep.subr.bf16.mxu0 %v3324
    %3736 = vmatpush1.bf16.msra.mxu0 %v3323
    %3737 = vmatprep.subr.bf16.mxu0 %v3331
    %3738 = vmatpush1.bf16.msra.mxu0 %v3330
    %3739 = vmatprep.subr.bf16.mxu0 %v3338
    %3740 = vmatpush1.bf16.msra.mxu0 %v3337
    %3741 = vmatprep.subr.bf16.mxu0 %v3345
    %3742 = vmatpush1.bf16.msra.mxu0 %v3344
    %3743 = vmatprep.subr.bf16.mxu0 %v3352
    %3744 = vmatpush1.bf16.msra.mxu0 %v3351
    %3745 = vmatprep.subr.bf16.mxu0 %v3359
    %3746 = vmatpush1.bf16.msra.mxu0 %v3358
    %3747 = vmatprep.subr.bf16.mxu0 %v3366
    %3748 = vmatpush1.bf16.msra.mxu0 %v3365
    %3749 = vmatprep.mubr.bf16.mxu0 %v2148
    %3750 = vmatmul.mubr.bf16.gmra.mrb[0].mxu0 %v2147
    %v3751 = vpop.f32.mrb[0].mxu0
    %v3752 = vadd.f32 %v3711, %v3751
    %v3753 = vpop.f32.mrb[0].mxu0
    %v3754 = vadd.f32 %v3713, %v3753
    %v3755 = vpop.f32.mrb[0].mxu0
    %v3756 = vpop.f32.mrb[0].mxu0
    %3757 = vdwg.mxu0
    %3758 = vmatprep.subr.bf16.mxu0 %v3151
    %3759 = vmatpush1.bf16.msra.mxu0 %v3150
    %3760 = vmatprep.subr.bf16.mxu0 %v3158
    %3761 = vmatpush1.bf16.msra.mxu0 %v3157
    %3762 = vmatprep.subr.bf16.mxu0 %v3165
    %3763 = vmatpush1.bf16.msra.mxu0 %v3164
    %3764 = vmatprep.subr.bf16.mxu0 %v3172
    %3765 = vmatpush1.bf16.msra.mxu0 %v3171
    %3766 = vmatprep.subr.bf16.mxu0 %v3179
    %3767 = vmatpush1.bf16.msra.mxu0 %v3178
    %3768 = vmatprep.subr.bf16.mxu0 %v3186
    %3769 = vmatpush1.bf16.msra.mxu0 %v3185
    %3770 = vmatprep.subr.bf16.mxu0 %v3193
    %3771 = vmatpush1.bf16.msra.mxu0 %v3192
    %3772 = vmatprep.subr.bf16.mxu0 %v3200
    %3773 = vmatpush1.bf16.msra.mxu0 %v3199
    %3774 = vmatprep.subr.bf16.mxu0 %v3207
    %3775 = vmatpush1.bf16.msra.mxu0 %v3206
    %3776 = vmatprep.subr.bf16.mxu0 %v3214
    %3777 = vmatpush1.bf16.msra.mxu0 %v3213
    %3778 = vmatprep.subr.bf16.mxu0 %v3221
    %3779 = vmatpush1.bf16.msra.mxu0 %v3220
    %3780 = vmatprep.subr.bf16.mxu0 %v3228
    %3781 = vmatpush1.bf16.msra.mxu0 %v3227
    %3782 = vmatprep.subr.bf16.mxu0 %v3235
    %3783 = vmatpush1.bf16.msra.mxu0 %v3234
    %3784 = vmatprep.subr.bf16.mxu0 %v3242
    %3785 = vmatpush1.bf16.msra.mxu0 %v3241
    %3786 = vmatprep.subr.bf16.mxu0 %v3249
    %3787 = vmatpush1.bf16.msra.mxu0 %v3248
    %3788 = vmatprep.subr.bf16.mxu0 %v3256
    %3789 = vmatpush1.bf16.msra.mxu0 %v3255
    %3790 = vmatprep.mubr.bf16.mxu0 %v2146
    %3791 = vmatmul.mubr.bf16.gmra.mrb[0].mxu0 %v2145
    %v3792 = vpop.f32.mrb[0].mxu0
    %v3793 = vadd.f32 %v2426, %v3792
    %v3794 = vpop.f32.mrb[0].mxu0
    %v3795 = vadd.f32 %v2430, %v3794
    %v3796 = vpop.f32.mrb[0].mxu0
    %v3797 = vpop.f32.mrb[0].mxu0
    %3798 = vdwg.mxu0
    %3799 = vmatprep.subr.bf16.mxu0 %v3263
    %3800 = vmatpush1.bf16.msra.mxu0 %v3262
    %3801 = vmatprep.subr.bf16.mxu0 %v3270
    %3802 = vmatpush1.bf16.msra.mxu0 %v3269
    %3803 = vmatprep.subr.bf16.mxu0 %v3277
    %3804 = vmatpush1.bf16.msra.mxu0 %v3276
    %3805 = vmatprep.subr.bf16.mxu0 %v3284
    %3806 = vmatpush1.bf16.msra.mxu0 %v3283
    %3807 = vmatprep.subr.bf16.mxu0 %v3291
    %3808 = vmatpush1.bf16.msra.mxu0 %v3290
    %3809 = vmatprep.subr.bf16.mxu0 %v3298
    %3810 = vmatpush1.bf16.msra.mxu0 %v3297
    %3811 = vmatprep.subr.bf16.mxu0 %v3305
    %3812 = vmatpush1.bf16.msra.mxu0 %v3304
    %3813 = vmatprep.subr.bf16.mxu0 %v3312
    %3814 = vmatpush1.bf16.msra.mxu0 %v3311
    %3815 = vmatprep.subr.bf16.mxu0 %v3319
    %3816 = vmatpush1.bf16.msra.mxu0 %v3318
    %3817 = vmatprep.subr.bf16.mxu0 %v3326
    %3818 = vmatpush1.bf16.msra.mxu0 %v3325
    %3819 = vmatprep.subr.bf16.mxu0 %v3333
    %3820 = vmatpush1.bf16.msra.mxu0 %v3332
    %3821 = vmatprep.subr.bf16.mxu0 %v3340
    %3822 = vmatpush1.bf16.msra.mxu0 %v3339
    %3823 = vmatprep.subr.bf16.mxu0 %v3347
    %3824 = vmatpush1.bf16.msra.mxu0 %v3346
    %3825 = vmatprep.subr.bf16.mxu0 %v3354
    %3826 = vmatpush1.bf16.msra.mxu0 %v3353
    %3827 = vmatprep.subr.bf16.mxu0 %v3361
    %3828 = vmatpush1.bf16.msra.mxu0 %v3360
    %3829 = vmatprep.subr.bf16.mxu0 %v3368
    %3830 = vmatpush1.bf16.msra.mxu0 %v3367
    %3831 = vmatprep.mubr.bf16.mxu0 %v2148
    %3832 = vmatmul.mubr.bf16.gmra.mrb[0].mxu0 %v2147
    %v3833 = vpop.f32.mrb[0].mxu0
    %v3834 = vadd.f32 %v3793, %v3833
    %v3835 = vpop.f32.mrb[0].mxu0
    %v3836 = vadd.f32 %v3795, %v3835
    %v3837 = vpop.f32.mrb[0].mxu0
    %v3838 = vpop.f32.mrb[0].mxu0
    %3839 = vdwg.mxu0
    %3840 = vmatprep.subr.bf16.mxu0 0
    %3841 = vmatpush1.bf16.msra.mxu0 %v3152
    %3842 = vmatprep.subr.bf16.mxu0 0
    %3843 = vmatpush1.bf16.msra.mxu0 %v3159
    %3844 = vmatprep.subr.bf16.mxu0 0
    %3845 = vmatpush1.bf16.msra.mxu0 %v3166
    %3846 = vmatprep.subr.bf16.mxu0 0
    %3847 = vmatpush1.bf16.msra.mxu0 %v3173
    %3848 = vmatprep.subr.bf16.mxu0 0
    %3849 = vmatpush1.bf16.msra.mxu0 %v3180
    %3850 = vmatprep.subr.bf16.mxu0 0
    %3851 = vmatpush1.bf16.msra.mxu0 %v3187
    %3852 = vmatprep.subr.bf16.mxu0 0
    %3853 = vmatpush1.bf16.msra.mxu0 %v3194
    %3854 = vmatprep.subr.bf16.mxu0 0
    %3855 = vmatpush1.bf16.msra.mxu0 %v3201
    %3856 = vmatprep.subr.bf16.mxu0 0
    %3857 = vmatpush1.bf16.msra.mxu0 %v3208
    %3858 = vmatprep.subr.bf16.mxu0 0
    %3859 = vmatpush1.bf16.msra.mxu0 %v3215
    %3860 = vmatprep.subr.bf16.mxu0 0
    %3861 = vmatpush1.bf16.msra.mxu0 %v3222
    %3862 = vmatprep.subr.bf16.mxu0 0
    %3863 = vmatpush1.bf16.msra.mxu0 %v3229
    %3864 = vmatprep.subr.bf16.mxu0 0
    %3865 = vmatpush1.bf16.msra.mxu0 %v3236
    %3866 = vmatprep.subr.bf16.mxu0 0
    %3867 = vmatpush1.bf16.msra.mxu0 %v3243
    %3868 = vmatprep.subr.bf16.mxu0 0
    %3869 = vmatpush1.bf16.msra.mxu0 %v3250
    %3870 = vmatprep.subr.bf16.mxu0 0
    %3871 = vmatpush1.bf16.msra.mxu0 %v3257
    %3872 = vmatprep.mubr.bf16.mxu0 %v2146
    %3873 = vmatmul.mubr.bf16.gmra.mrb[0].mxu0 %v2145
    %v3874 = vpop.f32.mrb[0].mxu0
    %v3875 = vadd.f32 %v2434, %v3874
    %v3876 = vpop.f32.mrb[0].mxu0
    %v3877 = vpop.f32.mrb[0].mxu0
    %v3878 = vpop.f32.mrb[0].mxu0
    %3879 = vdwg.mxu0
    %3880 = vmatprep.subr.bf16.mxu0 0
    %3881 = vmatpush1.bf16.msra.mxu0 %v3264
    %3882 = vmatprep.subr.bf16.mxu0 0
    %3883 = vmatpush1.bf16.msra.mxu0 %v3271
    %3884 = vmatprep.subr.bf16.mxu0 0
    %3885 = vmatpush1.bf16.msra.mxu0 %v3278
    %3886 = vmatprep.subr.bf16.mxu0 0
    %3887 = vmatpush1.bf16.msra.mxu0 %v3285
    %3888 = vmatprep.subr.bf16.mxu0 0
    %3889 = vmatpush1.bf16.msra.mxu0 %v3292
    %3890 = vmatprep.subr.bf16.mxu0 0
    %3891 = vmatpush1.bf16.msra.mxu0 %v3299
    %3892 = vmatprep.subr.bf16.mxu0 0
    %3893 = vmatpush1.bf16.msra.mxu0 %v3306
    %3894 = vmatprep.subr.bf16.mxu0 0
    %3895 = vmatpush1.bf16.msra.mxu0 %v3313
    %3896 = vmatprep.subr.bf16.mxu0 0
    %3897 = vmatpush1.bf16.msra.mxu0 %v3320
    %3898 = vmatprep.subr.bf16.mxu0 0
    %3899 = vmatpush1.bf16.msra.mxu0 %v3327
    %3900 = vmatprep.subr.bf16.mxu0 0
    %3901 = vmatpush1.bf16.msra.mxu0 %v3334
    %3902 = vmatprep.subr.bf16.mxu0 0
    %3903 = vmatpush1.bf16.msra.mxu0 %v3341
    %3904 = vmatprep.subr.bf16.mxu0 0
    %3905 = vmatpush1.bf16.msra.mxu0 %v3348
    %3906 = vmatprep.subr.bf16.mxu0 0
    %3907 = vmatpush1.bf16.msra.mxu0 %v3355
    %3908 = vmatprep.subr.bf16.mxu0 0
    %3909 = vmatpush1.bf16.msra.mxu0 %v3362
    %3910 = vmatprep.subr.bf16.mxu0 0
    %3911 = vmatpush1.bf16.msra.mxu0 %v3369
    %3912 = vmatprep.mubr.bf16.mxu0 %v2148
    %3913 = vmatmul.mubr.bf16.gmra.mrb[0].mxu0 %v2147
    %v3914 = vpop.f32.mrb[0].mxu0
    %v3915 = vadd.f32 %v3875, %v3914
    %v3916 = vpop.f32.mrb[0].mxu0
    %v3917 = vpop.f32.mrb[0].mxu0
    %v3918 = vpop.f32.mrb[0].mxu0
    %3919 = vdwg.mxu0
    %v3920 = vxor.u32 %v3670, 2147483648
    %v3921 = vxor.u32 %v3672, 2147483648
    %v3922 = vxor.u32 %v3752, 2147483648
    %v3923 = vxor.u32 %v3754, 2147483648
    %v3924 = vxor.u32 %v3834, 2147483648
    %v3925 = vxor.u32 %v3836, 2147483648
    %v3926 = vxor.u32 %v3915, 2147483648
    %v3927 = vmul.f32 %v3920, 1.442695
    %v3928 = vpow.pop %v3927
    %v3929 = vmul.f32 %v3921, 1.442695
    %v3930 = vpow.pop %v3929
    %v3931 = vmul.f32 %v3922, 1.442695
    %v3932 = vpow.pop %v3931
    %v3933 = vmul.f32 %v3923, 1.442695
    %v3934 = vpow.pop %v3933
    %v3935 = vmul.f32 %v3924, 1.442695
    %v3936 = vpow.pop %v3935
    %v3937 = vmul.f32 %v3925, 1.442695
    %v3938 = vpow.pop %v3937
    %v3939 = vmul.f32 %v3926, 1.442695
    %v3940 = vpow.pop %v3939
    %v3941 = vadd.f32 %v3928, 1.0
    %v3942 = vadd.f32 %v3930, 1.0
    %v3943 = vadd.f32 %v3932, 1.0
    %v3944 = vadd.f32 %v3934, 1.0
    %v3945 = vadd.f32 %v3936, 1.0
    %v3946 = vadd.f32 %v3938, 1.0
    %v3947 = vadd.f32 %v3940, 1.0
    %v3948 = vrcp.pop %v3941
    %v3949 = vmul.f32 1.0, %v3948
    %v3950 = vrcp.pop %v3942
    %v3951 = vmul.f32 1.0, %v3950
    %v3952 = vrcp.pop %v3943
    %v3953 = vmul.f32 1.0, %v3952
    %v3954 = vrcp.pop %v3944
    %v3955 = vmul.f32 1.0, %v3954
    %v3956 = vrcp.pop %v3945
    %v3957 = vmul.f32 1.0, %v3956
    %v3958 = vrcp.pop %v3946
    %v3959 = vmul.f32 1.0, %v3958
    %v3960 = vrcp.pop %v3947
    %v3961 = vmul.f32 1.0, %v3960
    %3962 = vst [vmem:[#allocation2] sm:$0xff] %v3949
    %3963 = vst [vmem:[#allocation2 + $0x8] sm:$0xff] %v3951
    %3964 = vst [vmem:[#allocation2 + $0x10] sm:$0xff] %v3953
    %3965 = vst [vmem:[#allocation2 + $0x18] sm:$0xff] %v3955
    %3966 = vst [vmem:[#allocation2 + $0x20] sm:$0xff] %v3957
    %3967 = vst [vmem:[#allocation2 + $0x28] sm:$0xff] %v3959
    %3968 = vst.msk [vmem:[#allocation2 + $0x30] sm:$0xff] %vm1249, %v3961
    // Predicated region
    $region42: #{tpu_custom_call.1} parent=1 // pred_check
      _
    $region43: #{tpu_custom_call.1} parent=1 // pred_check_branch
      %3970 = sbr.rel (0) target = $region45
    $region44: #{tpu_custom_call.1} parent=1 // pred_region
      %s3972 = ssub.s32 896, 896
      %3973 = vsyncadd [#allocation3], %s3972
      %s3975 = sshll.u32 [#allocation2], 4
      %s3976 = int_to_ptr.vmem [resolvable:$true] %s3975
      %3978 = dma.vmem_to_hbm [thread:$0]  %s3976, 896, %s10, [#allocation3]
    $region45: #{tpu_custom_call.1} parent=1 // pred_fallthru
      _
    // Predicated region
    $region46: #{tpu_custom_call.1} parent=1 // pred_check
      _
    $region47: #{tpu_custom_call.1} parent=1 // pred_check_branch
      %3980 = sbr.rel (0) target = $region49
    $region48: #{tpu_custom_call.1} parent=1 // pred_region
      %3981 = dma.done [#allocation3], 896
    $region49: #{tpu_custom_call.1} parent=1 // pred_fallthru
      _
    %3982 = vsyncpa [#allocation3], 1

</llo_original>
